<compile_context>
chip_gen: v7x
topology: tpu7x:2x2x1
jax: 0.10.0
libtpu: 0.0.40
codegen_flags: <defaults>
</compile_context>

<pallas_src>
import jax
import jax.numpy as jnp
from jax.experimental import pallas as pl
from jax.experimental.pallas import tpu as pltpu

# ----------------------------------------------------------------------------
# Small ViT configuration (vit_base_patch16_224 family, scaled down).
# ----------------------------------------------------------------------------
IMG = 32
PATCH = 16
IN_CHANS = 3
EMBED_DIM = 64
DEPTH = 2
NUM_HEADS = 4
MLP_RATIO = 4
NUM_CLASSES = 1
HEAD_DIM = EMBED_DIM // NUM_HEADS
HIDDEN = EMBED_DIM * MLP_RATIO
NUM_PATCHES = (IMG // PATCH) * (IMG // PATCH)
SEQ = NUM_PATCHES + 1          # +1 cls token
PATCH_DIM = IN_CHANS * PATCH * PATCH
LN_EPS = 1e-6                  # timm ViT block / final norm eps
HEAD_LN_EPS = 1e-5             # nn.LayerNorm default in the custom head

# MXU operands in bf16 (f32 accumulation). Set to jnp.float32 to disable.
MXU_DTYPE = jnp.bfloat16


def _layernorm(x, g, b, eps):
    """Row-wise LayerNorm over the last axis (f32 statistics)."""
    mean = jnp.mean(x, axis=-1, keepdims=True)
    var = jnp.mean(jnp.square(x - mean), axis=-1, keepdims=True)
    return (x - mean) * jax.lax.rsqrt(var + eps) * g + b


# ----------------------------------------------------------------------------
# Fully fused forward kernel: one grid step == one chunk of batch elements,
# all tokens of the chunk flattened to (chunk*SEQ, D).
# ----------------------------------------------------------------------------
def _vit_forward_kernel(
    patches_ref,                                   # (1, M, PATCH_DIM) bf16 (cls rows are zeros)
    embed_add_ref,                                 # (M, D) f32: cls/pos/conv-bias fold
    batch_mask_ref,                                # (M, M) f32: block-diagonal 0 / -1e30
    head_mask_ref,                                 # (H, 1, D) f32: per-head lane selector
    patch_w_ref,                                   # (PATCH_DIM, D) bf16
    ln1_g_ref, ln1_b_ref,                          # stacked block params (lead dim DEPTH)
    q_w_ref, k_w_ref, v_w_ref, q_b_ref, k_b_ref, v_b_ref,
    proj_w_ref, proj_b_ref,
    ln2_g_ref, ln2_b_ref,
    fc1_w_ref, fc1_b_ref, fc2_w_ref, fc2_b_ref,
    norm_g_ref, norm_b_ref,                        # final backbone norm
    hln_g_ref, hln_b_ref, head_w_ref, head_b_ref,  # custom head (LN + Linear)
    out_ref,                                       # (1, M, NUM_CLASSES)
):
    scale = float(HEAD_DIM) ** -0.5
    inv_sqrt2 = 0.7071067811865476

    # ---- patch embed; cls token, conv bias and pos-embed folded into embed_add ----
    h = jnp.dot(patches_ref[0], patch_w_ref[...],
                preferred_element_type=jnp.float32) + embed_add_ref[...]   # (M, D) f32
    batch_mask = batch_mask_ref[...]

    # ---- transformer blocks (statically unrolled, weights indexed by block) ----
    for d in range(DEPTH):
        # --- attention ---
        y = _layernorm(h, ln1_g_ref[d], ln1_b_ref[d], LN_EPS)
        yb = y.astype(MXU_DTYPE)
        q = (jnp.dot(yb, q_w_ref[d], preferred_element_type=jnp.float32)
             + q_b_ref[d]) * scale
        k = jnp.dot(yb, k_w_ref[d], preferred_element_type=jnp.float32) + k_b_ref[d]
        v = jnp.dot(yb, v_w_ref[d], preferred_element_type=jnp.float32) + v_b_ref[d]
        qb = q.astype(MXU_DTYPE)
        vb = v.astype(MXU_DTYPE)

        attn = None
        for hh in range(NUM_HEADS):                # head split/merge stays in vregs
            hm = head_mask_ref[hh]                 # (1, D): 1.0 on this head's lanes
            kb = (k * hm).astype(MXU_DTYPE)        # zero other heads' lanes -> exact per-head scores
            s = jnp.einsum("qd,kd->qk", qb, kb,
                           preferred_element_type=jnp.float32) + batch_mask
            mx = jnp.max(s, axis=-1, keepdims=True)
            p = jnp.exp(s - mx)
            p = p * pl.reciprocal(jnp.sum(p, axis=-1, keepdims=True), approx=True)
            o = jnp.dot(p.astype(MXU_DTYPE), vb, preferred_element_type=jnp.float32)
            o = o * hm                             # keep this head's output lanes
            attn = o if attn is None else attn + o # masked accumulate == head concat

        a = jnp.dot(attn.astype(MXU_DTYPE), proj_w_ref[d],
                    preferred_element_type=jnp.float32) + proj_b_ref[d]
        h = h + a                                  # fused residual add

        # --- MLP ---
        y = _layernorm(h, ln2_g_ref[d], ln2_b_ref[d], LN_EPS)
        z = jnp.dot(y.astype(MXU_DTYPE), fc1_w_ref[d],
                    preferred_element_type=jnp.float32) + fc1_b_ref[d]
        z = 0.5 * z * (1.0 + jax.lax.erf(z * inv_sqrt2))          # exact (erf) GELU
        z = jnp.dot(z.astype(MXU_DTYPE), fc2_w_ref[d],
                    preferred_element_type=jnp.float32) + fc2_b_ref[d]
        h = h + z                                  # fused residual add

    # ---- final norm + head (row-wise; wrapper picks each image's cls row) ----
    h = _layernorm(h, norm_g_ref[...], norm_b_ref[...], LN_EPS)
    # head: Dropout (identity in eval) -> LayerNorm -> Linear(D, 1)
    zc = _layernorm(h, hln_g_ref[...], hln_b_ref[...], HEAD_LN_EPS)
    # Linear(D, 1) as VPU multiply + lane reduction (no 64x1 MXU matmul).
    # TODO(synk): NUM_CLASSES > 1 would switch this back to an MXU matmul.
    logits = jnp.sum(zc * head_w_ref[...], axis=-1, keepdims=True) + head_b_ref[...]
    out_ref[0] = logits.astype(out_ref.dtype)


# ----------------------------------------------------------------------------
# Deterministic parameter initialization (synthetic, not a checkpoint load).
# Matmul weights are stored pre-cast to MXU_DTYPE (bf16) in HBM; LN params,
# biases and the 1-wide head weight stay f32.  Per-block params are stacked
# along a leading DEPTH axis so the fused kernel indexes them statically.
# ----------------------------------------------------------------------------
def init_params(key):
    k_iter = iter(jax.random.split(key, 64))

    def nrm(shape, dtype=jnp.float32, std=0.02):
        return (std * jax.random.normal(next(k_iter), shape)).astype(dtype)

    f32 = jnp.float32
    w = MXU_DTYPE
    return {
        # Conv2d(IN_CHANS, EMBED_DIM, k=PATCH, s=PATCH) folded into a matmul.
        "patch_w": nrm((PATCH_DIM, EMBED_DIM), w),
        "patch_b": nrm((1, EMBED_DIM)),
        "cls_token": nrm((1, EMBED_DIM)),
        "pos_embed": nrm((SEQ, EMBED_DIM)),
        "ln1_g": jnp.ones((DEPTH, 1, EMBED_DIM), f32),
        "ln1_b": jnp.zeros((DEPTH, 1, EMBED_DIM), f32),
        # PyTorch's fused qkv Linear split into per-projection (D, D) matrices.
        "q_w": nrm((DEPTH, EMBED_DIM, EMBED_DIM), w),
        "k_w": nrm((DEPTH, EMBED_DIM, EMBED_DIM), w),
        "v_w": nrm((DEPTH, EMBED_DIM, EMBED_DIM), w),
        "q_b": jnp.zeros((DEPTH, 1, EMBED_DIM), f32),
        "k_b": jnp.zeros((DEPTH, 1, EMBED_DIM), f32),
        "v_b": jnp.zeros((DEPTH, 1, EMBED_DIM), f32),
        "proj_w": nrm((DEPTH, EMBED_DIM, EMBED_DIM), w),
        "proj_b": jnp.zeros((DEPTH, 1, EMBED_DIM), f32),
        "ln2_g": jnp.ones((DEPTH, 1, EMBED_DIM), f32),
        "ln2_b": jnp.zeros((DEPTH, 1, EMBED_DIM), f32),
        "fc1_w": nrm((DEPTH, EMBED_DIM, HIDDEN), w),
        "fc1_b": jnp.zeros((DEPTH, 1, HIDDEN), f32),
        "fc2_w": nrm((DEPTH, HIDDEN, EMBED_DIM), w),
        "fc2_b": jnp.zeros((DEPTH, 1, EMBED_DIM), f32),
        "norm_g": jnp.ones((1, EMBED_DIM), f32),
        "norm_b": jnp.zeros((1, EMBED_DIM), f32),
        # custom head: Dropout -> LayerNorm -> Linear(D, NUM_CLASSES)
        "head_ln_g": jnp.ones((1, EMBED_DIM), f32),
        "head_ln_b": jnp.zeros((1, EMBED_DIM), f32),
        "head_w": nrm((NUM_CLASSES, EMBED_DIM)),       # (out, in) like nn.Linear; f32 (VPU path)
        "head_b": jnp.zeros((1, NUM_CLASSES), f32),
    }


def _rep_spec(shape):
    """Whole-array block, replicated (not re-fetched) across the chunk grid axis."""
    nd = len(shape)
    return pl.BlockSpec(shape, lambda c, _n=nd: (0,) * _n)


_PARAM_ORDER = (
    "patch_w",
    "ln1_g", "ln1_b", "q_w", "k_w", "v_w", "q_b", "k_b", "v_b",
    "proj_w", "proj_b", "ln2_g", "ln2_b", "fc1_w", "fc1_b", "fc2_w", "fc2_b",
    "norm_g", "norm_b", "head_ln_g", "head_ln_b", "head_w", "head_b",
)


# ----------------------------------------------------------------------------
# Forward pass (inference / eval mode: all Dropout layers are identity)
# ----------------------------------------------------------------------------
@jax.jit
def vit_classifier_forward(params, x):
    # x: (B, C, H, W)  -- NCHW, as in PyTorch
    B, C, H, W = x.shape
    gh, gw = H // PATCH, W // PATCH
    n_patch = gh * gw

    # 2-way grid keeps both v7x TensorCores busy; each step takes B//G images.
    G = 2 if (B % 2 == 0 and B >= 2) else 1
    BC = B // G
    M = BC * SEQ

    # TODO(synk): patch extraction (Conv2d k=s=PATCH im2col) stays in XLA glue;
    # it has no clean lane layout inside the kernel and touches the image once.
    patches = (
        x.reshape(B, C, gh, PATCH, gw, PATCH)
        .transpose(0, 2, 4, 1, 3, 5)                 # (B, gh, gw, C, ph, pw)
        .reshape(B, n_patch, PATCH_DIM)
    )
    # Prepend one zero "cls placeholder" row per image so each chunk is one
    # flat (M, PATCH_DIM) matmul operand; pre-cast to the MXU dtype.
    patches = jnp.concatenate(
        [jnp.zeros((B, 1, PATCH_DIM), patches.dtype), patches], axis=1)
    patches = patches.reshape(G, M, PATCH_DIM).astype(MXU_DTYPE)

    # cls token + conv bias + positional embedding folded into one additive
    # term (cls rows: cls + pos[0]; patch rows: patch_b + pos[i]), tiled to
    # the chunk's flat token layout.
    embed_add = jnp.concatenate(
        [params["cls_token"] + params["pos_embed"][0:1],
         params["patch_b"] + params["pos_embed"][1:]], axis=0)      # (SEQ, D)
    embed_add = jnp.tile(embed_add, (BC, 1)).astype(jnp.float32)    # (M, D)

    # Block-diagonal additive mask: flat (M, M) attention never mixes images.
    row_img = jnp.arange(M, dtype=jnp.int32) // SEQ
    batch_mask = jnp.where(row_img[:, None] == row_img[None, :],
                           0.0, -1e30).astype(jnp.float32)          # (M, M)

    # Per-head lane selectors (replace sub-128-lane activation slices).
    lane = jnp.arange(EMBED_DIM, dtype=jnp.int32)
    head_mask = (lane[None, :] // HEAD_DIM ==
                 jnp.arange(NUM_HEADS, dtype=jnp.int32)[:, None]
                 ).astype(jnp.float32).reshape(NUM_HEADS, 1, EMBED_DIM)

    args = (patches, embed_add, batch_mask, head_mask) + tuple(
        params[name] for name in _PARAM_ORDER)

    in_specs = [pl.BlockSpec((1, M, PATCH_DIM), lambda c: (c, 0, 0)),
                _rep_spec(embed_add.shape),
                _rep_spec(batch_mask.shape),
                _rep_spec(head_mask.shape)]
    in_specs += [_rep_spec(params[name].shape) for name in _PARAM_ORDER]

    out = pl.pallas_call(
        _vit_forward_kernel,
        out_shape=jax.ShapeDtypeStruct((G, M, NUM_CLASSES), jnp.float32),
        grid=(G,),
        in_specs=in_specs,
        out_specs=pl.BlockSpec((1, M, NUM_CLASSES), lambda c: (c, 0, 0)),
        compiler_params=pltpu.CompilerParams(
            dimension_semantics=("parallel",),       # chunk axis across TCs (v7x)
        ),
    )(*args)

    # Kernel emits per-token logits; pick each image's cls token ('token' pool).
    return out.reshape(B, SEQ, NUM_CLASSES)[:, 0, :]


if __name__ == "__main__":
    key = jax.random.PRNGKey(0)
    k_param, k_x = jax.random.split(key)
    params = init_params(k_param)
    x = jax.random.normal(k_x, (8, IN_CHANS, IMG, IMG), dtype=jnp.float32)  # NCHW

    out = jax.block_until_ready(vit_classifier_forward(params, x))
    assert out.shape == (8, NUM_CLASSES)
    assert bool(jnp.all(jnp.isfinite(out)))
    print("KERNEL_OK")
</pallas_src>

<mosaic_0001>
module attributes {stable_mosaic.version = 11 : i64} {
  func.func @_vit_forward_kernel(%arg0: i32, %arg1: memref<1x20x768xbf16, #tpu.memory_space<vmem>>, %arg2: memref<20x64xf32, #tpu.memory_space<vmem>>, %arg3: memref<20x20xf32, #tpu.memory_space<vmem>>, %arg4: memref<4x1x64xf32, #tpu.memory_space<vmem>>, %arg5: memref<768x64xbf16, #tpu.memory_space<vmem>>, %arg6: memref<2x1x64xf32, #tpu.memory_space<vmem>>, %arg7: memref<2x1x64xf32, #tpu.memory_space<vmem>>, %arg8: memref<2x64x64xbf16, #tpu.memory_space<vmem>>, %arg9: memref<2x64x64xbf16, #tpu.memory_space<vmem>>, %arg10: memref<2x64x64xbf16, #tpu.memory_space<vmem>>, %arg11: memref<2x1x64xf32, #tpu.memory_space<vmem>>, %arg12: memref<2x1x64xf32, #tpu.memory_space<vmem>>, %arg13: memref<2x1x64xf32, #tpu.memory_space<vmem>>, %arg14: memref<2x64x64xbf16, #tpu.memory_space<vmem>>, %arg15: memref<2x1x64xf32, #tpu.memory_space<vmem>>, %arg16: memref<2x1x64xf32, #tpu.memory_space<vmem>>, %arg17: memref<2x1x64xf32, #tpu.memory_space<vmem>>, %arg18: memref<2x64x256xbf16, #tpu.memory_space<vmem>>, %arg19: memref<2x1x256xf32, #tpu.memory_space<vmem>>, %arg20: memref<2x256x64xbf16, #tpu.memory_space<vmem>>, %arg21: memref<2x1x64xf32, #tpu.memory_space<vmem>>, %arg22: memref<1x64xf32, #tpu.memory_space<vmem>>, %arg23: memref<1x64xf32, #tpu.memory_space<vmem>>, %arg24: memref<1x64xf32, #tpu.memory_space<vmem>>, %arg25: memref<1x64xf32, #tpu.memory_space<vmem>>, %arg26: memref<1x64xf32, #tpu.memory_space<vmem>>, %arg27: memref<1x1xf32, #tpu.memory_space<vmem>>, %arg28: memref<1x20x1xf32, #tpu.memory_space<vmem>>) attributes {dimension_semantics = [#tpu.dimension_semantics<parallel>], iteration_bounds = array<i64: 2>, scalar_prefetch = 0 : i64, scratch_operands = 0 : i64, tpu.core_type = #tpu.core_type<tc>, window_params = [{transform_indices = @transform_0, window_bounds = array<i64: 1, 20, 768>}, {pipeline_mode = #tpu.pipeline_mode<synchronous>, transform_indices = @transform_1, window_bounds = array<i64: 20, 64>}, {pipeline_mode = #tpu.pipeline_mode<synchronous>, transform_indices = @transform_2, window_bounds = array<i64: 20, 20>}, {pipeline_mode = #tpu.pipeline_mode<synchronous>, transform_indices = @transform_3, window_bounds = array<i64: 4, 1, 64>}, {pipeline_mode = #tpu.pipeline_mode<synchronous>, transform_indices = @transform_4, window_bounds = array<i64: 768, 64>}, {pipeline_mode = #tpu.pipeline_mode<synchronous>, transform_indices = @transform_5, window_bounds = array<i64: 2, 1, 64>}, {pipeline_mode = #tpu.pipeline_mode<synchronous>, transform_indices = @transform_6, window_bounds = array<i64: 2, 1, 64>}, {pipeline_mode = #tpu.pipeline_mode<synchronous>, transform_indices = @transform_7, window_bounds = array<i64: 2, 64, 64>}, {pipeline_mode = #tpu.pipeline_mode<synchronous>, transform_indices = @transform_8, window_bounds = array<i64: 2, 64, 64>}, {pipeline_mode = #tpu.pipeline_mode<synchronous>, transform_indices = @transform_9, window_bounds = array<i64: 2, 64, 64>}, {pipeline_mode = #tpu.pipeline_mode<synchronous>, transform_indices = @transform_10, window_bounds = array<i64: 2, 1, 64>}, {pipeline_mode = #tpu.pipeline_mode<synchronous>, transform_indices = @transform_11, window_bounds = array<i64: 2, 1, 64>}, {pipeline_mode = #tpu.pipeline_mode<synchronous>, transform_indices = @transform_12, window_bounds = array<i64: 2, 1, 64>}, {pipeline_mode = #tpu.pipeline_mode<synchronous>, transform_indices = @transform_13, window_bounds = array<i64: 2, 64, 64>}, {pipeline_mode = #tpu.pipeline_mode<synchronous>, transform_indices = @transform_14, window_bounds = array<i64: 2, 1, 64>}, {pipeline_mode = #tpu.pipeline_mode<synchronous>, transform_indices = @transform_15, window_bounds = array<i64: 2, 1, 64>}, {pipeline_mode = #tpu.pipeline_mode<synchronous>, transform_indices = @transform_16, window_bounds = array<i64: 2, 1, 64>}, {pipeline_mode = #tpu.pipeline_mode<synchronous>, transform_indices = @transform_17, window_bounds = array<i64: 2, 64, 256>}, {pipeline_mode = #tpu.pipeline_mode<synchronous>, transform_indices = @transform_18, window_bounds = array<i64: 2, 1, 256>}, {pipeline_mode = #tpu.pipeline_mode<synchronous>, transform_indices = @transform_19, window_bounds = array<i64: 2, 256, 64>}, {pipeline_mode = #tpu.pipeline_mode<synchronous>, transform_indices = @transform_20, window_bounds = array<i64: 2, 1, 64>}, {pipeline_mode = #tpu.pipeline_mode<synchronous>, transform_indices = @transform_21, window_bounds = array<i64: 1, 64>}, {pipeline_mode = #tpu.pipeline_mode<synchronous>, transform_indices = @transform_22, window_bounds = array<i64: 1, 64>}, {pipeline_mode = #tpu.pipeline_mode<synchronous>, transform_indices = @transform_23, window_bounds = array<i64: 1, 64>}, {pipeline_mode = #tpu.pipeline_mode<synchronous>, transform_indices = @transform_24, window_bounds = array<i64: 1, 64>}, {pipeline_mode = #tpu.pipeline_mode<synchronous>, transform_indices = @transform_25, window_bounds = array<i64: 1, 64>}, {pipeline_mode = #tpu.pipeline_mode<synchronous>, transform_indices = @transform_26, window_bounds = array<i64: 1, 1>}, {transform_indices = @transform_27, window_bounds = array<i64: 1, 20, 1>}]} {
    %c0 = arith.constant 0 : index
    %c0_0 = arith.constant 0 : index
    %c0_1 = arith.constant 0 : index
    %0 = vector.load %arg1[%c0, %c0_0, %c0_1] : memref<1x20x768xbf16, #tpu.memory_space<vmem>>, vector<1x20x768xbf16>
    %1 = vector.shape_cast %0 : vector<1x20x768xbf16> to vector<20x768xbf16>
    %c0_2 = arith.constant 0 : index
    %c0_3 = arith.constant 0 : index
    %2 = vector.load %arg5[%c0_2, %c0_3] : memref<768x64xbf16, #tpu.memory_space<vmem>>, vector<768x64xbf16>
    %cst = arith.constant dense<0.000000e+00> : vector<20x64xf32>
    %3 = tpu.matmul %1, %2, %cst {dimension_numbers = #tpu.dot_dimension_numbers<[1], [0], [0], [1], [0, 0, 1, 1], [], []>} : vector<20x768xbf16>, vector<768x64xbf16>, vector<20x64xf32> -> vector<20x64xf32>
    %c0_4 = arith.constant 0 : index
    %c0_5 = arith.constant 0 : index
    %4 = vector.load %arg2[%c0_4, %c0_5] : memref<20x64xf32, #tpu.memory_space<vmem>>, vector<20x64xf32>
    %5 = arith.addf %3, %4 : vector<20x64xf32>
    %c0_6 = arith.constant 0 : index
    %c0_7 = arith.constant 0 : index
    %6 = vector.load %arg3[%c0_6, %c0_7] : memref<20x20xf32, #tpu.memory_space<vmem>>, vector<20x20xf32>
    %c0_8 = arith.constant 0 : index
    %c0_9 = arith.constant 0 : index
    %c0_10 = arith.constant 0 : index
    %7 = vector.load %arg6[%c0_8, %c0_9, %c0_10] : memref<2x1x64xf32, #tpu.memory_space<vmem>>, vector<1x1x64xf32>
    %8 = vector.shape_cast %7 : vector<1x1x64xf32> to vector<1x64xf32>
    %c0_11 = arith.constant 0 : index
    %c0_12 = arith.constant 0 : index
    %c0_13 = arith.constant 0 : index
    %9 = vector.load %arg7[%c0_11, %c0_12, %c0_13] : memref<2x1x64xf32, #tpu.memory_space<vmem>>, vector<1x1x64xf32>
    %10 = vector.shape_cast %9 : vector<1x1x64xf32> to vector<1x64xf32>
    %cst_14 = arith.constant dense<0.000000e+00> : vector<20xf32>
    %11 = vector.multi_reduction <add>, %5, %cst_14 [1] : vector<20x64xf32> to vector<20xf32>
    %12 = vector.shape_cast %11 : vector<20xf32> to vector<20x1xf32>
    %cst_15 = arith.constant 6.400000e+01 : f32
    %13 = vector.broadcast %cst_15 : f32 to vector<20x1xf32>
    %14 = arith.divf %12, %13 : vector<20x1xf32>
    %15 = vector.broadcast %14 : vector<20x1xf32> to vector<20x64xf32>
    %16 = arith.subf %5, %15 : vector<20x64xf32>
    %17 = arith.mulf %16, %16 : vector<20x64xf32>
    %cst_16 = arith.constant dense<0.000000e+00> : vector<20xf32>
    %18 = vector.multi_reduction <add>, %17, %cst_16 [1] : vector<20x64xf32> to vector<20xf32>
    %19 = vector.shape_cast %18 : vector<20xf32> to vector<20x1xf32>
    %cst_17 = arith.constant 6.400000e+01 : f32
    %20 = vector.broadcast %cst_17 : f32 to vector<20x1xf32>
    %21 = arith.divf %19, %20 : vector<20x1xf32>
    %22 = vector.broadcast %14 : vector<20x1xf32> to vector<20x64xf32>
    %23 = arith.subf %5, %22 : vector<20x64xf32>
    %cst_18 = arith.constant 9.99999997E-7 : f32
    %24 = vector.broadcast %cst_18 : f32 to vector<20x1xf32>
    %25 = arith.addf %21, %24 : vector<20x1xf32>
    %26 = math.rsqrt %25 : vector<20x1xf32>
    %27 = vector.broadcast %26 : vector<20x1xf32> to vector<20x64xf32>
    %28 = arith.mulf %23, %27 : vector<20x64xf32>
    %29 = vector.broadcast %8 : vector<1x64xf32> to vector<20x64xf32>
    %30 = arith.mulf %28, %29 : vector<20x64xf32>
    %31 = vector.broadcast %10 : vector<1x64xf32> to vector<20x64xf32>
    %32 = arith.addf %30, %31 : vector<20x64xf32>
    %33 = arith.truncf %32 : vector<20x64xf32> to vector<20x64xbf16>
    %c0_19 = arith.constant 0 : index
    %c0_20 = arith.constant 0 : index
    %c0_21 = arith.constant 0 : index
    %34 = vector.load %arg8[%c0_19, %c0_20, %c0_21] : memref<2x64x64xbf16, #tpu.memory_space<vmem>>, vector<1x64x64xbf16>
    %35 = vector.shape_cast %34 : vector<1x64x64xbf16> to vector<64x64xbf16>
    %cst_22 = arith.constant dense<0.000000e+00> : vector<20x64xf32>
    %36 = tpu.matmul %33, %35, %cst_22 {dimension_numbers = #tpu.dot_dimension_numbers<[1], [0], [0], [1], [0, 0, 1, 1], [], []>} : vector<20x64xbf16>, vector<64x64xbf16>, vector<20x64xf32> -> vector<20x64xf32>
    %c0_23 = arith.constant 0 : index
    %c0_24 = arith.constant 0 : index
    %c0_25 = arith.constant 0 : index
    %37 = vector.load %arg11[%c0_23, %c0_24, %c0_25] : memref<2x1x64xf32, #tpu.memory_space<vmem>>, vector<1x1x64xf32>
    %38 = vector.shape_cast %37 : vector<1x1x64xf32> to vector<1x64xf32>
    %39 = vector.broadcast %38 : vector<1x64xf32> to vector<20x64xf32>
    %40 = arith.addf %36, %39 : vector<20x64xf32>
    %cst_26 = arith.constant 2.500000e-01 : f32
    %41 = vector.broadcast %cst_26 : f32 to vector<20x64xf32>
    %42 = arith.mulf %40, %41 : vector<20x64xf32>
    %c0_27 = arith.constant 0 : index
    %c0_28 = arith.constant 0 : index
    %c0_29 = arith.constant 0 : index
    %43 = vector.load %arg9[%c0_27, %c0_28, %c0_29] : memref<2x64x64xbf16, #tpu.memory_space<vmem>>, vector<1x64x64xbf16>
    %44 = vector.shape_cast %43 : vector<1x64x64xbf16> to vector<64x64xbf16>
    %cst_30 = arith.constant dense<0.000000e+00> : vector<20x64xf32>
    %45 = tpu.matmul %33, %44, %cst_30 {dimension_numbers = #tpu.dot_dimension_numbers<[1], [0], [0], [1], [0, 0, 1, 1], [], []>} : vector<20x64xbf16>, vector<64x64xbf16>, vector<20x64xf32> -> vector<20x64xf32>
    %c0_31 = arith.constant 0 : index
    %c0_32 = arith.constant 0 : index
    %c0_33 = arith.constant 0 : index
    %46 = vector.load %arg12[%c0_31, %c0_32, %c0_33] : memref<2x1x64xf32, #tpu.memory_space<vmem>>, vector<1x1x64xf32>
    %47 = vector.shape_cast %46 : vector<1x1x64xf32> to vector<1x64xf32>
    %48 = vector.broadcast %47 : vector<1x64xf32> to vector<20x64xf32>
    %49 = arith.addf %45, %48 : vector<20x64xf32>
    %c0_34 = arith.constant 0 : index
    %c0_35 = arith.constant 0 : index
    %c0_36 = arith.constant 0 : index
    %50 = vector.load %arg10[%c0_34, %c0_35, %c0_36] : memref<2x64x64xbf16, #tpu.memory_space<vmem>>, vector<1x64x64xbf16>
    %51 = vector.shape_cast %50 : vector<1x64x64xbf16> to vector<64x64xbf16>
    %cst_37 = arith.constant dense<0.000000e+00> : vector<20x64xf32>
    %52 = tpu.matmul %33, %51, %cst_37 {dimension_numbers = #tpu.dot_dimension_numbers<[1], [0], [0], [1], [0, 0, 1, 1], [], []>} : vector<20x64xbf16>, vector<64x64xbf16>, vector<20x64xf32> -> vector<20x64xf32>
    %c0_38 = arith.constant 0 : index
    %c0_39 = arith.constant 0 : index
    %c0_40 = arith.constant 0 : index
    %53 = vector.load %arg13[%c0_38, %c0_39, %c0_40] : memref<2x1x64xf32, #tpu.memory_space<vmem>>, vector<1x1x64xf32>
    %54 = vector.shape_cast %53 : vector<1x1x64xf32> to vector<1x64xf32>
    %55 = vector.broadcast %54 : vector<1x64xf32> to vector<20x64xf32>
    %56 = arith.addf %52, %55 : vector<20x64xf32>
    %57 = arith.truncf %42 : vector<20x64xf32> to vector<20x64xbf16>
    %58 = arith.truncf %56 : vector<20x64xf32> to vector<20x64xbf16>
    %c0_41 = arith.constant 0 : index
    %c0_42 = arith.constant 0 : index
    %c0_43 = arith.constant 0 : index
    %59 = vector.load %arg4[%c0_41, %c0_42, %c0_43] : memref<4x1x64xf32, #tpu.memory_space<vmem>>, vector<1x1x64xf32>
    %60 = vector.shape_cast %59 : vector<1x1x64xf32> to vector<1x64xf32>
    %61 = vector.broadcast %60 : vector<1x64xf32> to vector<20x64xf32>
    %62 = arith.mulf %49, %61 : vector<20x64xf32>
    %63 = arith.truncf %62 : vector<20x64xf32> to vector<20x64xbf16>
    "tpu.trace_start"() <{level = 10 : i32, message = "qd,kd->qk"}> : () -> ()
    %cst_44 = arith.constant dense<0.000000e+00> : vector<20x20xf32>
    %64 = tpu.matmul %57, %63, %cst_44 {dimension_numbers = #tpu.dot_dimension_numbers<[1], [1], [0], [0], [0, 0, 1, 0], [], []>} : vector<20x64xbf16>, vector<20x64xbf16>, vector<20x20xf32> -> vector<20x20xf32>
    "tpu.trace_stop"() : () -> ()
    %65 = arith.addf %64, %6 : vector<20x20xf32>
    %cst_45 = arith.constant dense<0xFF800000> : vector<20xf32>
    %66 = vector.multi_reduction <maximumf>, %65, %cst_45 [1] : vector<20x20xf32> to vector<20xf32>
    %67 = vector.shape_cast %66 : vector<20xf32> to vector<20x1xf32>
    %68 = vector.broadcast %67 : vector<20x1xf32> to vector<20x20xf32>
    %69 = arith.subf %65, %68 : vector<20x20xf32>
    %70 = math.exp %69 : vector<20x20xf32>
    %cst_46 = arith.constant dense<0.000000e+00> : vector<20xf32>
    %71 = vector.multi_reduction <add>, %70, %cst_46 [1] : vector<20x20xf32> to vector<20xf32>
    %72 = vector.shape_cast %71 : vector<20xf32> to vector<20x1xf32>
    %73 = tpu.reciprocal %72 {approx = true} : vector<20x1xf32> -> vector<20x1xf32>
    %74 = vector.broadcast %73 : vector<20x1xf32> to vector<20x20xf32>
    %75 = arith.mulf %70, %74 : vector<20x20xf32>
    %76 = arith.truncf %75 : vector<20x20xf32> to vector<20x20xbf16>
    %cst_47 = arith.constant dense<0.000000e+00> : vector<20x64xf32>
    %77 = tpu.matmul %76, %58, %cst_47 {dimension_numbers = #tpu.dot_dimension_numbers<[1], [0], [0], [1], [0, 0, 1, 1], [], []>} : vector<20x20xbf16>, vector<20x64xbf16>, vector<20x64xf32> -> vector<20x64xf32>
    %78 = vector.broadcast %60 : vector<1x64xf32> to vector<20x64xf32>
    %79 = arith.mulf %77, %78 : vector<20x64xf32>
    %c1 = arith.constant 1 : index
    %c0_48 = arith.constant 0 : index
    %c0_49 = arith.constant 0 : index
    %80 = vector.load %arg4[%c1, %c0_48, %c0_49] : memref<4x1x64xf32, #tpu.memory_space<vmem>>, vector<1x1x64xf32>
    %81 = vector.shape_cast %80 : vector<1x1x64xf32> to vector<1x64xf32>
    %82 = vector.broadcast %81 : vector<1x64xf32> to vector<20x64xf32>
    %83 = arith.mulf %49, %82 : vector<20x64xf32>
    %84 = arith.truncf %83 : vector<20x64xf32> to vector<20x64xbf16>
    "tpu.trace_start"() <{level = 10 : i32, message = "qd,kd->qk"}> : () -> ()
    %cst_50 = arith.constant dense<0.000000e+00> : vector<20x20xf32>
    %85 = tpu.matmul %57, %84, %cst_50 {dimension_numbers = #tpu.dot_dimension_numbers<[1], [1], [0], [0], [0, 0, 1, 0], [], []>} : vector<20x64xbf16>, vector<20x64xbf16>, vector<20x20xf32> -> vector<20x20xf32>
    "tpu.trace_stop"() : () -> ()
    %86 = arith.addf %85, %6 : vector<20x20xf32>
    %cst_51 = arith.constant dense<0xFF800000> : vector<20xf32>
    %87 = vector.multi_reduction <maximumf>, %86, %cst_51 [1] : vector<20x20xf32> to vector<20xf32>
    %88 = vector.shape_cast %87 : vector<20xf32> to vector<20x1xf32>
    %89 = vector.broadcast %88 : vector<20x1xf32> to vector<20x20xf32>
    %90 = arith.subf %86, %89 : vector<20x20xf32>
    %91 = math.exp %90 : vector<20x20xf32>
    %cst_52 = arith.constant dense<0.000000e+00> : vector<20xf32>
    %92 = vector.multi_reduction <add>, %91, %cst_52 [1] : vector<20x20xf32> to vector<20xf32>
    %93 = vector.shape_cast %92 : vector<20xf32> to vector<20x1xf32>
    %94 = tpu.reciprocal %93 {approx = true} : vector<20x1xf32> -> vector<20x1xf32>
    %95 = vector.broadcast %94 : vector<20x1xf32> to vector<20x20xf32>
    %96 = arith.mulf %91, %95 : vector<20x20xf32>
    %97 = arith.truncf %96 : vector<20x20xf32> to vector<20x20xbf16>
    %cst_53 = arith.constant dense<0.000000e+00> : vector<20x64xf32>
    %98 = tpu.matmul %97, %58, %cst_53 {dimension_numbers = #tpu.dot_dimension_numbers<[1], [0], [0], [1], [0, 0, 1, 1], [], []>} : vector<20x20xbf16>, vector<20x64xbf16>, vector<20x64xf32> -> vector<20x64xf32>
    %99 = vector.broadcast %81 : vector<1x64xf32> to vector<20x64xf32>
    %100 = arith.mulf %98, %99 : vector<20x64xf32>
    %101 = arith.addf %79, %100 : vector<20x64xf32>
    %c2 = arith.constant 2 : index
    %c0_54 = arith.constant 0 : index
    %c0_55 = arith.constant 0 : index
    %102 = vector.load %arg4[%c2, %c0_54, %c0_55] : memref<4x1x64xf32, #tpu.memory_space<vmem>>, vector<1x1x64xf32>
    %103 = vector.shape_cast %102 : vector<1x1x64xf32> to vector<1x64xf32>
    %104 = vector.broadcast %103 : vector<1x64xf32> to vector<20x64xf32>
    %105 = arith.mulf %49, %104 : vector<20x64xf32>
    %106 = arith.truncf %105 : vector<20x64xf32> to vector<20x64xbf16>
    "tpu.trace_start"() <{level = 10 : i32, message = "qd,kd->qk"}> : () -> ()
    %cst_56 = arith.constant dense<0.000000e+00> : vector<20x20xf32>
    %107 = tpu.matmul %57, %106, %cst_56 {dimension_numbers = #tpu.dot_dimension_numbers<[1], [1], [0], [0], [0, 0, 1, 0], [], []>} : vector<20x64xbf16>, vector<20x64xbf16>, vector<20x20xf32> -> vector<20x20xf32>
    "tpu.trace_stop"() : () -> ()
    %108 = arith.addf %107, %6 : vector<20x20xf32>
    %cst_57 = arith.constant dense<0xFF800000> : vector<20xf32>
    %109 = vector.multi_reduction <maximumf>, %108, %cst_57 [1] : vector<20x20xf32> to vector<20xf32>
    %110 = vector.shape_cast %109 : vector<20xf32> to vector<20x1xf32>
    %111 = vector.broadcast %110 : vector<20x1xf32> to vector<20x20xf32>
    %112 = arith.subf %108, %111 : vector<20x20xf32>
    %113 = math.exp %112 : vector<20x20xf32>
    %cst_58 = arith.constant dense<0.000000e+00> : vector<20xf32>
    %114 = vector.multi_reduction <add>, %113, %cst_58 [1] : vector<20x20xf32> to vector<20xf32>
    %115 = vector.shape_cast %114 : vector<20xf32> to vector<20x1xf32>
    %116 = tpu.reciprocal %115 {approx = true} : vector<20x1xf32> -> vector<20x1xf32>
    %117 = vector.broadcast %116 : vector<20x1xf32> to vector<20x20xf32>
    %118 = arith.mulf %113, %117 : vector<20x20xf32>
    %119 = arith.truncf %118 : vector<20x20xf32> to vector<20x20xbf16>
    %cst_59 = arith.constant dense<0.000000e+00> : vector<20x64xf32>
    %120 = tpu.matmul %119, %58, %cst_59 {dimension_numbers = #tpu.dot_dimension_numbers<[1], [0], [0], [1], [0, 0, 1, 1], [], []>} : vector<20x20xbf16>, vector<20x64xbf16>, vector<20x64xf32> -> vector<20x64xf32>
    %121 = vector.broadcast %103 : vector<1x64xf32> to vector<20x64xf32>
    %122 = arith.mulf %120, %121 : vector<20x64xf32>
    %123 = arith.addf %101, %122 : vector<20x64xf32>
    %c3 = arith.constant 3 : index
    %c0_60 = arith.constant 0 : index
    %c0_61 = arith.constant 0 : index
    %124 = vector.load %arg4[%c3, %c0_60, %c0_61] : memref<4x1x64xf32, #tpu.memory_space<vmem>>, vector<1x1x64xf32>
    %125 = vector.shape_cast %124 : vector<1x1x64xf32> to vector<1x64xf32>
    %126 = vector.broadcast %125 : vector<1x64xf32> to vector<20x64xf32>
    %127 = arith.mulf %49, %126 : vector<20x64xf32>
    %128 = arith.truncf %127 : vector<20x64xf32> to vector<20x64xbf16>
    "tpu.trace_start"() <{level = 10 : i32, message = "qd,kd->qk"}> : () -> ()
    %cst_62 = arith.constant dense<0.000000e+00> : vector<20x20xf32>
    %129 = tpu.matmul %57, %128, %cst_62 {dimension_numbers = #tpu.dot_dimension_numbers<[1], [1], [0], [0], [0, 0, 1, 0], [], []>} : vector<20x64xbf16>, vector<20x64xbf16>, vector<20x20xf32> -> vector<20x20xf32>
    "tpu.trace_stop"() : () -> ()
    %130 = arith.addf %129, %6 : vector<20x20xf32>
    %cst_63 = arith.constant dense<0xFF800000> : vector<20xf32>
    %131 = vector.multi_reduction <maximumf>, %130, %cst_63 [1] : vector<20x20xf32> to vector<20xf32>
    %132 = vector.shape_cast %131 : vector<20xf32> to vector<20x1xf32>
    %133 = vector.broadcast %132 : vector<20x1xf32> to vector<20x20xf32>
    %134 = arith.subf %130, %133 : vector<20x20xf32>
    %135 = math.exp %134 : vector<20x20xf32>
    %cst_64 = arith.constant dense<0.000000e+00> : vector<20xf32>
    %136 = vector.multi_reduction <add>, %135, %cst_64 [1] : vector<20x20xf32> to vector<20xf32>
    %137 = vector.shape_cast %136 : vector<20xf32> to vector<20x1xf32>
    %138 = tpu.reciprocal %137 {approx = true} : vector<20x1xf32> -> vector<20x1xf32>
    %139 = vector.broadcast %138 : vector<20x1xf32> to vector<20x20xf32>
    %140 = arith.mulf %135, %139 : vector<20x20xf32>
    %141 = arith.truncf %140 : vector<20x20xf32> to vector<20x20xbf16>
    %cst_65 = arith.constant dense<0.000000e+00> : vector<20x64xf32>
    %142 = tpu.matmul %141, %58, %cst_65 {dimension_numbers = #tpu.dot_dimension_numbers<[1], [0], [0], [1], [0, 0, 1, 1], [], []>} : vector<20x20xbf16>, vector<20x64xbf16>, vector<20x64xf32> -> vector<20x64xf32>
    %143 = vector.broadcast %125 : vector<1x64xf32> to vector<20x64xf32>
    %144 = arith.mulf %142, %143 : vector<20x64xf32>
    %145 = arith.addf %123, %144 : vector<20x64xf32>
    %146 = arith.truncf %145 : vector<20x64xf32> to vector<20x64xbf16>
    %c0_66 = arith.constant 0 : index
    %c0_67 = arith.constant 0 : index
    %c0_68 = arith.constant 0 : index
    %147 = vector.load %arg14[%c0_66, %c0_67, %c0_68] : memref<2x64x64xbf16, #tpu.memory_space<vmem>>, vector<1x64x64xbf16>
    %148 = vector.shape_cast %147 : vector<1x64x64xbf16> to vector<64x64xbf16>
    %cst_69 = arith.constant dense<0.000000e+00> : vector<20x64xf32>
    %149 = tpu.matmul %146, %148, %cst_69 {dimension_numbers = #tpu.dot_dimension_numbers<[1], [0], [0], [1], [0, 0, 1, 1], [], []>} : vector<20x64xbf16>, vector<64x64xbf16>, vector<20x64xf32> -> vector<20x64xf32>
    %c0_70 = arith.constant 0 : index
    %c0_71 = arith.constant 0 : index
    %c0_72 = arith.constant 0 : index
    %150 = vector.load %arg15[%c0_70, %c0_71, %c0_72] : memref<2x1x64xf32, #tpu.memory_space<vmem>>, vector<1x1x64xf32>
    %151 = vector.shape_cast %150 : vector<1x1x64xf32> to vector<1x64xf32>
    %152 = vector.broadcast %151 : vector<1x64xf32> to vector<20x64xf32>
    %153 = arith.addf %149, %152 : vector<20x64xf32>
    %154 = arith.addf %5, %153 : vector<20x64xf32>
    %c0_73 = arith.constant 0 : index
    %c0_74 = arith.constant 0 : index
    %c0_75 = arith.constant 0 : index
    %155 = vector.load %arg16[%c0_73, %c0_74, %c0_75] : memref<2x1x64xf32, #tpu.memory_space<vmem>>, vector<1x1x64xf32>
    %156 = vector.shape_cast %155 : vector<1x1x64xf32> to vector<1x64xf32>
    %c0_76 = arith.constant 0 : index
    %c0_77 = arith.constant 0 : index
    %c0_78 = arith.constant 0 : index
    %157 = vector.load %arg17[%c0_76, %c0_77, %c0_78] : memref<2x1x64xf32, #tpu.memory_space<vmem>>, vector<1x1x64xf32>
    %158 = vector.shape_cast %157 : vector<1x1x64xf32> to vector<1x64xf32>
    %cst_79 = arith.constant dense<0.000000e+00> : vector<20xf32>
    %159 = vector.multi_reduction <add>, %154, %cst_79 [1] : vector<20x64xf32> to vector<20xf32>
    %160 = vector.shape_cast %159 : vector<20xf32> to vector<20x1xf32>
    %cst_80 = arith.constant 6.400000e+01 : f32
    %161 = vector.broadcast %cst_80 : f32 to vector<20x1xf32>
    %162 = arith.divf %160, %161 : vector<20x1xf32>
    %163 = vector.broadcast %162 : vector<20x1xf32> to vector<20x64xf32>
    %164 = arith.subf %154, %163 : vector<20x64xf32>
    %165 = arith.mulf %164, %164 : vector<20x64xf32>
    %cst_81 = arith.constant dense<0.000000e+00> : vector<20xf32>
    %166 = vector.multi_reduction <add>, %165, %cst_81 [1] : vector<20x64xf32> to vector<20xf32>
    %167 = vector.shape_cast %166 : vector<20xf32> to vector<20x1xf32>
    %cst_82 = arith.constant 6.400000e+01 : f32
    %168 = vector.broadcast %cst_82 : f32 to vector<20x1xf32>
    %169 = arith.divf %167, %168 : vector<20x1xf32>
    %170 = vector.broadcast %162 : vector<20x1xf32> to vector<20x64xf32>
    %171 = arith.subf %154, %170 : vector<20x64xf32>
    %cst_83 = arith.constant 9.99999997E-7 : f32
    %172 = vector.broadcast %cst_83 : f32 to vector<20x1xf32>
    %173 = arith.addf %169, %172 : vector<20x1xf32>
    %174 = math.rsqrt %173 : vector<20x1xf32>
    %175 = vector.broadcast %174 : vector<20x1xf32> to vector<20x64xf32>
    %176 = arith.mulf %171, %175 : vector<20x64xf32>
    %177 = vector.broadcast %156 : vector<1x64xf32> to vector<20x64xf32>
    %178 = arith.mulf %176, %177 : vector<20x64xf32>
    %179 = vector.broadcast %158 : vector<1x64xf32> to vector<20x64xf32>
    %180 = arith.addf %178, %179 : vector<20x64xf32>
    %181 = arith.truncf %180 : vector<20x64xf32> to vector<20x64xbf16>
    %c0_84 = arith.constant 0 : index
    %c0_85 = arith.constant 0 : index
    %c0_86 = arith.constant 0 : index
    %182 = vector.load %arg18[%c0_84, %c0_85, %c0_86] : memref<2x64x256xbf16, #tpu.memory_space<vmem>>, vector<1x64x256xbf16>
    %183 = vector.shape_cast %182 : vector<1x64x256xbf16> to vector<64x256xbf16>
    %cst_87 = arith.constant dense<0.000000e+00> : vector<20x256xf32>
    %184 = tpu.matmul %181, %183, %cst_87 {dimension_numbers = #tpu.dot_dimension_numbers<[1], [0], [0], [1], [0, 0, 1, 1], [], []>} : vector<20x64xbf16>, vector<64x256xbf16>, vector<20x256xf32> -> vector<20x256xf32>
    %c0_88 = arith.constant 0 : index
    %c0_89 = arith.constant 0 : index
    %c0_90 = arith.constant 0 : index
    %185 = vector.load %arg19[%c0_88, %c0_89, %c0_90] : memref<2x1x256xf32, #tpu.memory_space<vmem>>, vector<1x1x256xf32>
    %186 = vector.shape_cast %185 : vector<1x1x256xf32> to vector<1x256xf32>
    %187 = vector.broadcast %186 : vector<1x256xf32> to vector<20x256xf32>
    %188 = arith.addf %184, %187 : vector<20x256xf32>
    %cst_91 = arith.constant 5.000000e-01 : f32
    %189 = vector.broadcast %cst_91 : f32 to vector<20x256xf32>
    %190 = arith.mulf %189, %188 : vector<20x256xf32>
    %cst_92 = arith.constant 0.707106769 : f32
    %191 = vector.broadcast %cst_92 : f32 to vector<20x256xf32>
    %192 = arith.mulf %188, %191 : vector<20x256xf32>
    %193 = math.erf %192 : vector<20x256xf32>
    %cst_93 = arith.constant 1.000000e+00 : f32
    %194 = vector.broadcast %cst_93 : f32 to vector<20x256xf32>
    %195 = arith.addf %194, %193 : vector<20x256xf32>
    %196 = arith.mulf %190, %195 : vector<20x256xf32>
    %197 = arith.truncf %196 : vector<20x256xf32> to vector<20x256xbf16>
    %c0_94 = arith.constant 0 : index
    %c0_95 = arith.constant 0 : index
    %c0_96 = arith.constant 0 : index
    %198 = vector.load %arg20[%c0_94, %c0_95, %c0_96] : memref<2x256x64xbf16, #tpu.memory_space<vmem>>, vector<1x256x64xbf16>
    %199 = vector.shape_cast %198 : vector<1x256x64xbf16> to vector<256x64xbf16>
    %cst_97 = arith.constant dense<0.000000e+00> : vector<20x64xf32>
    %200 = tpu.matmul %197, %199, %cst_97 {dimension_numbers = #tpu.dot_dimension_numbers<[1], [0], [0], [1], [0, 0, 1, 1], [], []>} : vector<20x256xbf16>, vector<256x64xbf16>, vector<20x64xf32> -> vector<20x64xf32>
    %c0_98 = arith.constant 0 : index
    %c0_99 = arith.constant 0 : index
    %c0_100 = arith.constant 0 : index
    %201 = vector.load %arg21[%c0_98, %c0_99, %c0_100] : memref<2x1x64xf32, #tpu.memory_space<vmem>>, vector<1x1x64xf32>
    %202 = vector.shape_cast %201 : vector<1x1x64xf32> to vector<1x64xf32>
    %203 = vector.broadcast %202 : vector<1x64xf32> to vector<20x64xf32>
    %204 = arith.addf %200, %203 : vector<20x64xf32>
    %205 = arith.addf %154, %204 : vector<20x64xf32>
    %c1_101 = arith.constant 1 : index
    %c0_102 = arith.constant 0 : index
    %c0_103 = arith.constant 0 : index
    %206 = vector.load %arg6[%c1_101, %c0_102, %c0_103] : memref<2x1x64xf32, #tpu.memory_space<vmem>>, vector<1x1x64xf32>
    %207 = vector.shape_cast %206 : vector<1x1x64xf32> to vector<1x64xf32>
    %c1_104 = arith.constant 1 : index
    %c0_105 = arith.constant 0 : index
    %c0_106 = arith.constant 0 : index
    %208 = vector.load %arg7[%c1_104, %c0_105, %c0_106] : memref<2x1x64xf32, #tpu.memory_space<vmem>>, vector<1x1x64xf32>
    %209 = vector.shape_cast %208 : vector<1x1x64xf32> to vector<1x64xf32>
    %cst_107 = arith.constant dense<0.000000e+00> : vector<20xf32>
    %210 = vector.multi_reduction <add>, %205, %cst_107 [1] : vector<20x64xf32> to vector<20xf32>
    %211 = vector.shape_cast %210 : vector<20xf32> to vector<20x1xf32>
    %cst_108 = arith.constant 6.400000e+01 : f32
    %212 = vector.broadcast %cst_108 : f32 to vector<20x1xf32>
    %213 = arith.divf %211, %212 : vector<20x1xf32>
    %214 = vector.broadcast %213 : vector<20x1xf32> to vector<20x64xf32>
    %215 = arith.subf %205, %214 : vector<20x64xf32>
    %216 = arith.mulf %215, %215 : vector<20x64xf32>
    %cst_109 = arith.constant dense<0.000000e+00> : vector<20xf32>
    %217 = vector.multi_reduction <add>, %216, %cst_109 [1] : vector<20x64xf32> to vector<20xf32>
    %218 = vector.shape_cast %217 : vector<20xf32> to vector<20x1xf32>
    %cst_110 = arith.constant 6.400000e+01 : f32
    %219 = vector.broadcast %cst_110 : f32 to vector<20x1xf32>
    %220 = arith.divf %218, %219 : vector<20x1xf32>
    %221 = vector.broadcast %213 : vector<20x1xf32> to vector<20x64xf32>
    %222 = arith.subf %205, %221 : vector<20x64xf32>
    %cst_111 = arith.constant 9.99999997E-7 : f32
    %223 = vector.broadcast %cst_111 : f32 to vector<20x1xf32>
    %224 = arith.addf %220, %223 : vector<20x1xf32>
    %225 = math.rsqrt %224 : vector<20x1xf32>
    %226 = vector.broadcast %225 : vector<20x1xf32> to vector<20x64xf32>
    %227 = arith.mulf %222, %226 : vector<20x64xf32>
    %228 = vector.broadcast %207 : vector<1x64xf32> to vector<20x64xf32>
    %229 = arith.mulf %227, %228 : vector<20x64xf32>
    %230 = vector.broadcast %209 : vector<1x64xf32> to vector<20x64xf32>
    %231 = arith.addf %229, %230 : vector<20x64xf32>
    %232 = arith.truncf %231 : vector<20x64xf32> to vector<20x64xbf16>
    %c1_112 = arith.constant 1 : index
    %c0_113 = arith.constant 0 : index
    %c0_114 = arith.constant 0 : index
    %233 = vector.load %arg8[%c1_112, %c0_113, %c0_114] : memref<2x64x64xbf16, #tpu.memory_space<vmem>>, vector<1x64x64xbf16>
    %234 = vector.shape_cast %233 : vector<1x64x64xbf16> to vector<64x64xbf16>
    %cst_115 = arith.constant dense<0.000000e+00> : vector<20x64xf32>
    %235 = tpu.matmul %232, %234, %cst_115 {dimension_numbers = #tpu.dot_dimension_numbers<[1], [0], [0], [1], [0, 0, 1, 1], [], []>} : vector<20x64xbf16>, vector<64x64xbf16>, vector<20x64xf32> -> vector<20x64xf32>
    %c1_116 = arith.constant 1 : index
    %c0_117 = arith.constant 0 : index
    %c0_118 = arith.constant 0 : index
    %236 = vector.load %arg11[%c1_116, %c0_117, %c0_118] : memref<2x1x64xf32, #tpu.memory_space<vmem>>, vector<1x1x64xf32>
    %237 = vector.shape_cast %236 : vector<1x1x64xf32> to vector<1x64xf32>
    %238 = vector.broadcast %237 : vector<1x64xf32> to vector<20x64xf32>
    %239 = arith.addf %235, %238 : vector<20x64xf32>
    %cst_119 = arith.constant 2.500000e-01 : f32
    %240 = vector.broadcast %cst_119 : f32 to vector<20x64xf32>
    %241 = arith.mulf %239, %240 : vector<20x64xf32>
    %c1_120 = arith.constant 1 : index
    %c0_121 = arith.constant 0 : index
    %c0_122 = arith.constant 0 : index
    %242 = vector.load %arg9[%c1_120, %c0_121, %c0_122] : memref<2x64x64xbf16, #tpu.memory_space<vmem>>, vector<1x64x64xbf16>
    %243 = vector.shape_cast %242 : vector<1x64x64xbf16> to vector<64x64xbf16>
    %cst_123 = arith.constant dense<0.000000e+00> : vector<20x64xf32>
    %244 = tpu.matmul %232, %243, %cst_123 {dimension_numbers = #tpu.dot_dimension_numbers<[1], [0], [0], [1], [0, 0, 1, 1], [], []>} : vector<20x64xbf16>, vector<64x64xbf16>, vector<20x64xf32> -> vector<20x64xf32>
    %c1_124 = arith.constant 1 : index
    %c0_125 = arith.constant 0 : index
    %c0_126 = arith.constant 0 : index
    %245 = vector.load %arg12[%c1_124, %c0_125, %c0_126] : memref<2x1x64xf32, #tpu.memory_space<vmem>>, vector<1x1x64xf32>
    %246 = vector.shape_cast %245 : vector<1x1x64xf32> to vector<1x64xf32>
    %247 = vector.broadcast %246 : vector<1x64xf32> to vector<20x64xf32>
    %248 = arith.addf %244, %247 : vector<20x64xf32>
    %c1_127 = arith.constant 1 : index
    %c0_128 = arith.constant 0 : index
    %c0_129 = arith.constant 0 : index
    %249 = vector.load %arg10[%c1_127, %c0_128, %c0_129] : memref<2x64x64xbf16, #tpu.memory_space<vmem>>, vector<1x64x64xbf16>
    %250 = vector.shape_cast %249 : vector<1x64x64xbf16> to vector<64x64xbf16>
    %cst_130 = arith.constant dense<0.000000e+00> : vector<20x64xf32>
    %251 = tpu.matmul %232, %250, %cst_130 {dimension_numbers = #tpu.dot_dimension_numbers<[1], [0], [0], [1], [0, 0, 1, 1], [], []>} : vector<20x64xbf16>, vector<64x64xbf16>, vector<20x64xf32> -> vector<20x64xf32>
    %c1_131 = arith.constant 1 : index
    %c0_132 = arith.constant 0 : index
    %c0_133 = arith.constant 0 : index
    %252 = vector.load %arg13[%c1_131, %c0_132, %c0_133] : memref<2x1x64xf32, #tpu.memory_space<vmem>>, vector<1x1x64xf32>
    %253 = vector.shape_cast %252 : vector<1x1x64xf32> to vector<1x64xf32>
    %254 = vector.broadcast %253 : vector<1x64xf32> to vector<20x64xf32>
    %255 = arith.addf %251, %254 : vector<20x64xf32>
    %256 = arith.truncf %241 : vector<20x64xf32> to vector<20x64xbf16>
    %257 = arith.truncf %255 : vector<20x64xf32> to vector<20x64xbf16>
    %c0_134 = arith.constant 0 : index
    %c0_135 = arith.constant 0 : index
    %c0_136 = arith.constant 0 : index
    %258 = vector.load %arg4[%c0_134, %c0_135, %c0_136] : memref<4x1x64xf32, #tpu.memory_space<vmem>>, vector<1x1x64xf32>
    %259 = vector.shape_cast %258 : vector<1x1x64xf32> to vector<1x64xf32>
    %260 = vector.broadcast %259 : vector<1x64xf32> to vector<20x64xf32>
    %261 = arith.mulf %248, %260 : vector<20x64xf32>
    %262 = arith.truncf %261 : vector<20x64xf32> to vector<20x64xbf16>
    "tpu.trace_start"() <{level = 10 : i32, message = "qd,kd->qk"}> : () -> ()
    %cst_137 = arith.constant dense<0.000000e+00> : vector<20x20xf32>
    %263 = tpu.matmul %256, %262, %cst_137 {dimension_numbers = #tpu.dot_dimension_numbers<[1], [1], [0], [0], [0, 0, 1, 0], [], []>} : vector<20x64xbf16>, vector<20x64xbf16>, vector<20x20xf32> -> vector<20x20xf32>
    "tpu.trace_stop"() : () -> ()
    %264 = arith.addf %263, %6 : vector<20x20xf32>
    %cst_138 = arith.constant dense<0xFF800000> : vector<20xf32>
    %265 = vector.multi_reduction <maximumf>, %264, %cst_138 [1] : vector<20x20xf32> to vector<20xf32>
    %266 = vector.shape_cast %265 : vector<20xf32> to vector<20x1xf32>
    %267 = vector.broadcast %266 : vector<20x1xf32> to vector<20x20xf32>
    %268 = arith.subf %264, %267 : vector<20x20xf32>
    %269 = math.exp %268 : vector<20x20xf32>
    %cst_139 = arith.constant dense<0.000000e+00> : vector<20xf32>
    %270 = vector.multi_reduction <add>, %269, %cst_139 [1] : vector<20x20xf32> to vector<20xf32>
    %271 = vector.shape_cast %270 : vector<20xf32> to vector<20x1xf32>
    %272 = tpu.reciprocal %271 {approx = true} : vector<20x1xf32> -> vector<20x1xf32>
    %273 = vector.broadcast %272 : vector<20x1xf32> to vector<20x20xf32>
    %274 = arith.mulf %269, %273 : vector<20x20xf32>
    %275 = arith.truncf %274 : vector<20x20xf32> to vector<20x20xbf16>
    %cst_140 = arith.constant dense<0.000000e+00> : vector<20x64xf32>
    %276 = tpu.matmul %275, %257, %cst_140 {dimension_numbers = #tpu.dot_dimension_numbers<[1], [0], [0], [1], [0, 0, 1, 1], [], []>} : vector<20x20xbf16>, vector<20x64xbf16>, vector<20x64xf32> -> vector<20x64xf32>
    %277 = vector.broadcast %259 : vector<1x64xf32> to vector<20x64xf32>
    %278 = arith.mulf %276, %277 : vector<20x64xf32>
    %c1_141 = arith.constant 1 : index
    %c0_142 = arith.constant 0 : index
    %c0_143 = arith.constant 0 : index
    %279 = vector.load %arg4[%c1_141, %c0_142, %c0_143] : memref<4x1x64xf32, #tpu.memory_space<vmem>>, vector<1x1x64xf32>
    %280 = vector.shape_cast %279 : vector<1x1x64xf32> to vector<1x64xf32>
    %281 = vector.broadcast %280 : vector<1x64xf32> to vector<20x64xf32>
    %282 = arith.mulf %248, %281 : vector<20x64xf32>
    %283 = arith.truncf %282 : vector<20x64xf32> to vector<20x64xbf16>
    "tpu.trace_start"() <{level = 10 : i32, message = "qd,kd->qk"}> : () -> ()
    %cst_144 = arith.constant dense<0.000000e+00> : vector<20x20xf32>
    %284 = tpu.matmul %256, %283, %cst_144 {dimension_numbers = #tpu.dot_dimension_numbers<[1], [1], [0], [0], [0, 0, 1, 0], [], []>} : vector<20x64xbf16>, vector<20x64xbf16>, vector<20x20xf32> -> vector<20x20xf32>
    "tpu.trace_stop"() : () -> ()
    %285 = arith.addf %284, %6 : vector<20x20xf32>
    %cst_145 = arith.constant dense<0xFF800000> : vector<20xf32>
    %286 = vector.multi_reduction <maximumf>, %285, %cst_145 [1] : vector<20x20xf32> to vector<20xf32>
    %287 = vector.shape_cast %286 : vector<20xf32> to vector<20x1xf32>
    %288 = vector.broadcast %287 : vector<20x1xf32> to vector<20x20xf32>
    %289 = arith.subf %285, %288 : vector<20x20xf32>
    %290 = math.exp %289 : vector<20x20xf32>
    %cst_146 = arith.constant dense<0.000000e+00> : vector<20xf32>
    %291 = vector.multi_reduction <add>, %290, %cst_146 [1] : vector<20x20xf32> to vector<20xf32>
    %292 = vector.shape_cast %291 : vector<20xf32> to vector<20x1xf32>
    %293 = tpu.reciprocal %292 {approx = true} : vector<20x1xf32> -> vector<20x1xf32>
    %294 = vector.broadcast %293 : vector<20x1xf32> to vector<20x20xf32>
    %295 = arith.mulf %290, %294 : vector<20x20xf32>
    %296 = arith.truncf %295 : vector<20x20xf32> to vector<20x20xbf16>
    %cst_147 = arith.constant dense<0.000000e+00> : vector<20x64xf32>
    %297 = tpu.matmul %296, %257, %cst_147 {dimension_numbers = #tpu.dot_dimension_numbers<[1], [0], [0], [1], [0, 0, 1, 1], [], []>} : vector<20x20xbf16>, vector<20x64xbf16>, vector<20x64xf32> -> vector<20x64xf32>
    %298 = vector.broadcast %280 : vector<1x64xf32> to vector<20x64xf32>
    %299 = arith.mulf %297, %298 : vector<20x64xf32>
    %300 = arith.addf %278, %299 : vector<20x64xf32>
    %c2_148 = arith.constant 2 : index
    %c0_149 = arith.constant 0 : index
    %c0_150 = arith.constant 0 : index
    %301 = vector.load %arg4[%c2_148, %c0_149, %c0_150] : memref<4x1x64xf32, #tpu.memory_space<vmem>>, vector<1x1x64xf32>
    %302 = vector.shape_cast %301 : vector<1x1x64xf32> to vector<1x64xf32>
    %303 = vector.broadcast %302 : vector<1x64xf32> to vector<20x64xf32>
    %304 = arith.mulf %248, %303 : vector<20x64xf32>
    %305 = arith.truncf %304 : vector<20x64xf32> to vector<20x64xbf16>
    "tpu.trace_start"() <{level = 10 : i32, message = "qd,kd->qk"}> : () -> ()
    %cst_151 = arith.constant dense<0.000000e+00> : vector<20x20xf32>
    %306 = tpu.matmul %256, %305, %cst_151 {dimension_numbers = #tpu.dot_dimension_numbers<[1], [1], [0], [0], [0, 0, 1, 0], [], []>} : vector<20x64xbf16>, vector<20x64xbf16>, vector<20x20xf32> -> vector<20x20xf32>
    "tpu.trace_stop"() : () -> ()
    %307 = arith.addf %306, %6 : vector<20x20xf32>
    %cst_152 = arith.constant dense<0xFF800000> : vector<20xf32>
    %308 = vector.multi_reduction <maximumf>, %307, %cst_152 [1] : vector<20x20xf32> to vector<20xf32>
    %309 = vector.shape_cast %308 : vector<20xf32> to vector<20x1xf32>
    %310 = vector.broadcast %309 : vector<20x1xf32> to vector<20x20xf32>
    %311 = arith.subf %307, %310 : vector<20x20xf32>
    %312 = math.exp %311 : vector<20x20xf32>
    %cst_153 = arith.constant dense<0.000000e+00> : vector<20xf32>
    %313 = vector.multi_reduction <add>, %312, %cst_153 [1] : vector<20x20xf32> to vector<20xf32>
    %314 = vector.shape_cast %313 : vector<20xf32> to vector<20x1xf32>
    %315 = tpu.reciprocal %314 {approx = true} : vector<20x1xf32> -> vector<20x1xf32>
    %316 = vector.broadcast %315 : vector<20x1xf32> to vector<20x20xf32>
    %317 = arith.mulf %312, %316 : vector<20x20xf32>
    %318 = arith.truncf %317 : vector<20x20xf32> to vector<20x20xbf16>
    %cst_154 = arith.constant dense<0.000000e+00> : vector<20x64xf32>
    %319 = tpu.matmul %318, %257, %cst_154 {dimension_numbers = #tpu.dot_dimension_numbers<[1], [0], [0], [1], [0, 0, 1, 1], [], []>} : vector<20x20xbf16>, vector<20x64xbf16>, vector<20x64xf32> -> vector<20x64xf32>
    %320 = vector.broadcast %302 : vector<1x64xf32> to vector<20x64xf32>
    %321 = arith.mulf %319, %320 : vector<20x64xf32>
    %322 = arith.addf %300, %321 : vector<20x64xf32>
    %c3_155 = arith.constant 3 : index
    %c0_156 = arith.constant 0 : index
    %c0_157 = arith.constant 0 : index
    %323 = vector.load %arg4[%c3_155, %c0_156, %c0_157] : memref<4x1x64xf32, #tpu.memory_space<vmem>>, vector<1x1x64xf32>
    %324 = vector.shape_cast %323 : vector<1x1x64xf32> to vector<1x64xf32>
    %325 = vector.broadcast %324 : vector<1x64xf32> to vector<20x64xf32>
    %326 = arith.mulf %248, %325 : vector<20x64xf32>
    %327 = arith.truncf %326 : vector<20x64xf32> to vector<20x64xbf16>
    "tpu.trace_start"() <{level = 10 : i32, message = "qd,kd->qk"}> : () -> ()
    %cst_158 = arith.constant dense<0.000000e+00> : vector<20x20xf32>
    %328 = tpu.matmul %256, %327, %cst_158 {dimension_numbers = #tpu.dot_dimension_numbers<[1], [1], [0], [0], [0, 0, 1, 0], [], []>} : vector<20x64xbf16>, vector<20x64xbf16>, vector<20x20xf32> -> vector<20x20xf32>
    "tpu.trace_stop"() : () -> ()
    %329 = arith.addf %328, %6 : vector<20x20xf32>
    %cst_159 = arith.constant dense<0xFF800000> : vector<20xf32>
    %330 = vector.multi_reduction <maximumf>, %329, %cst_159 [1] : vector<20x20xf32> to vector<20xf32>
    %331 = vector.shape_cast %330 : vector<20xf32> to vector<20x1xf32>
    %332 = vector.broadcast %331 : vector<20x1xf32> to vector<20x20xf32>
    %333 = arith.subf %329, %332 : vector<20x20xf32>
    %334 = math.exp %333 : vector<20x20xf32>
    %cst_160 = arith.constant dense<0.000000e+00> : vector<20xf32>
    %335 = vector.multi_reduction <add>, %334, %cst_160 [1] : vector<20x20xf32> to vector<20xf32>
    %336 = vector.shape_cast %335 : vector<20xf32> to vector<20x1xf32>
    %337 = tpu.reciprocal %336 {approx = true} : vector<20x1xf32> -> vector<20x1xf32>
    %338 = vector.broadcast %337 : vector<20x1xf32> to vector<20x20xf32>
    %339 = arith.mulf %334, %338 : vector<20x20xf32>
    %340 = arith.truncf %339 : vector<20x20xf32> to vector<20x20xbf16>
    %cst_161 = arith.constant dense<0.000000e+00> : vector<20x64xf32>
    %341 = tpu.matmul %340, %257, %cst_161 {dimension_numbers = #tpu.dot_dimension_numbers<[1], [0], [0], [1], [0, 0, 1, 1], [], []>} : vector<20x20xbf16>, vector<20x64xbf16>, vector<20x64xf32> -> vector<20x64xf32>
    %342 = vector.broadcast %324 : vector<1x64xf32> to vector<20x64xf32>
    %343 = arith.mulf %341, %342 : vector<20x64xf32>
    %344 = arith.addf %322, %343 : vector<20x64xf32>
    %345 = arith.truncf %344 : vector<20x64xf32> to vector<20x64xbf16>
    %c1_162 = arith.constant 1 : index
    %c0_163 = arith.constant 0 : index
    %c0_164 = arith.constant 0 : index
    %346 = vector.load %arg14[%c1_162, %c0_163, %c0_164] : memref<2x64x64xbf16, #tpu.memory_space<vmem>>, vector<1x64x64xbf16>
    %347 = vector.shape_cast %346 : vector<1x64x64xbf16> to vector<64x64xbf16>
    %cst_165 = arith.constant dense<0.000000e+00> : vector<20x64xf32>
    %348 = tpu.matmul %345, %347, %cst_165 {dimension_numbers = #tpu.dot_dimension_numbers<[1], [0], [0], [1], [0, 0, 1, 1], [], []>} : vector<20x64xbf16>, vector<64x64xbf16>, vector<20x64xf32> -> vector<20x64xf32>
    %c1_166 = arith.constant 1 : index
    %c0_167 = arith.constant 0 : index
    %c0_168 = arith.constant 0 : index
    %349 = vector.load %arg15[%c1_166, %c0_167, %c0_168] : memref<2x1x64xf32, #tpu.memory_space<vmem>>, vector<1x1x64xf32>
    %350 = vector.shape_cast %349 : vector<1x1x64xf32> to vector<1x64xf32>
    %351 = vector.broadcast %350 : vector<1x64xf32> to vector<20x64xf32>
    %352 = arith.addf %348, %351 : vector<20x64xf32>
    %353 = arith.addf %205, %352 : vector<20x64xf32>
    %c1_169 = arith.constant 1 : index
    %c0_170 = arith.constant 0 : index
    %c0_171 = arith.constant 0 : index
    %354 = vector.load %arg16[%c1_169, %c0_170, %c0_171] : memref<2x1x64xf32, #tpu.memory_space<vmem>>, vector<1x1x64xf32>
    %355 = vector.shape_cast %354 : vector<1x1x64xf32> to vector<1x64xf32>
    %c1_172 = arith.constant 1 : index
    %c0_173 = arith.constant 0 : index
    %c0_174 = arith.constant 0 : index
    %356 = vector.load %arg17[%c1_172, %c0_173, %c0_174] : memref<2x1x64xf32, #tpu.memory_space<vmem>>, vector<1x1x64xf32>
    %357 = vector.shape_cast %356 : vector<1x1x64xf32> to vector<1x64xf32>
    %cst_175 = arith.constant dense<0.000000e+00> : vector<20xf32>
    %358 = vector.multi_reduction <add>, %353, %cst_175 [1] : vector<20x64xf32> to vector<20xf32>
    %359 = vector.shape_cast %358 : vector<20xf32> to vector<20x1xf32>
    %cst_176 = arith.constant 6.400000e+01 : f32
    %360 = vector.broadcast %cst_176 : f32 to vector<20x1xf32>
    %361 = arith.divf %359, %360 : vector<20x1xf32>
    %362 = vector.broadcast %361 : vector<20x1xf32> to vector<20x64xf32>
    %363 = arith.subf %353, %362 : vector<20x64xf32>
    %364 = arith.mulf %363, %363 : vector<20x64xf32>
    %cst_177 = arith.constant dense<0.000000e+00> : vector<20xf32>
    %365 = vector.multi_reduction <add>, %364, %cst_177 [1] : vector<20x64xf32> to vector<20xf32>
    %366 = vector.shape_cast %365 : vector<20xf32> to vector<20x1xf32>
    %cst_178 = arith.constant 6.400000e+01 : f32
    %367 = vector.broadcast %cst_178 : f32 to vector<20x1xf32>
    %368 = arith.divf %366, %367 : vector<20x1xf32>
    %369 = vector.broadcast %361 : vector<20x1xf32> to vector<20x64xf32>
    %370 = arith.subf %353, %369 : vector<20x64xf32>
    %cst_179 = arith.constant 9.99999997E-7 : f32
    %371 = vector.broadcast %cst_179 : f32 to vector<20x1xf32>
    %372 = arith.addf %368, %371 : vector<20x1xf32>
    %373 = math.rsqrt %372 : vector<20x1xf32>
    %374 = vector.broadcast %373 : vector<20x1xf32> to vector<20x64xf32>
    %375 = arith.mulf %370, %374 : vector<20x64xf32>
    %376 = vector.broadcast %355 : vector<1x64xf32> to vector<20x64xf32>
    %377 = arith.mulf %375, %376 : vector<20x64xf32>
    %378 = vector.broadcast %357 : vector<1x64xf32> to vector<20x64xf32>
    %379 = arith.addf %377, %378 : vector<20x64xf32>
    %380 = arith.truncf %379 : vector<20x64xf32> to vector<20x64xbf16>
    %c1_180 = arith.constant 1 : index
    %c0_181 = arith.constant 0 : index
    %c0_182 = arith.constant 0 : index
    %381 = vector.load %arg18[%c1_180, %c0_181, %c0_182] : memref<2x64x256xbf16, #tpu.memory_space<vmem>>, vector<1x64x256xbf16>
    %382 = vector.shape_cast %381 : vector<1x64x256xbf16> to vector<64x256xbf16>
    %cst_183 = arith.constant dense<0.000000e+00> : vector<20x256xf32>
    %383 = tpu.matmul %380, %382, %cst_183 {dimension_numbers = #tpu.dot_dimension_numbers<[1], [0], [0], [1], [0, 0, 1, 1], [], []>} : vector<20x64xbf16>, vector<64x256xbf16>, vector<20x256xf32> -> vector<20x256xf32>
    %c1_184 = arith.constant 1 : index
    %c0_185 = arith.constant 0 : index
    %c0_186 = arith.constant 0 : index
    %384 = vector.load %arg19[%c1_184, %c0_185, %c0_186] : memref<2x1x256xf32, #tpu.memory_space<vmem>>, vector<1x1x256xf32>
    %385 = vector.shape_cast %384 : vector<1x1x256xf32> to vector<1x256xf32>
    %386 = vector.broadcast %385 : vector<1x256xf32> to vector<20x256xf32>
    %387 = arith.addf %383, %386 : vector<20x256xf32>
    %cst_187 = arith.constant 5.000000e-01 : f32
    %388 = vector.broadcast %cst_187 : f32 to vector<20x256xf32>
    %389 = arith.mulf %388, %387 : vector<20x256xf32>
    %cst_188 = arith.constant 0.707106769 : f32
    %390 = vector.broadcast %cst_188 : f32 to vector<20x256xf32>
    %391 = arith.mulf %387, %390 : vector<20x256xf32>
    %392 = math.erf %391 : vector<20x256xf32>
    %cst_189 = arith.constant 1.000000e+00 : f32
    %393 = vector.broadcast %cst_189 : f32 to vector<20x256xf32>
    %394 = arith.addf %393, %392 : vector<20x256xf32>
    %395 = arith.mulf %389, %394 : vector<20x256xf32>
    %396 = arith.truncf %395 : vector<20x256xf32> to vector<20x256xbf16>
    %c1_190 = arith.constant 1 : index
    %c0_191 = arith.constant 0 : index
    %c0_192 = arith.constant 0 : index
    %397 = vector.load %arg20[%c1_190, %c0_191, %c0_192] : memref<2x256x64xbf16, #tpu.memory_space<vmem>>, vector<1x256x64xbf16>
    %398 = vector.shape_cast %397 : vector<1x256x64xbf16> to vector<256x64xbf16>
    %cst_193 = arith.constant dense<0.000000e+00> : vector<20x64xf32>
    %399 = tpu.matmul %396, %398, %cst_193 {dimension_numbers = #tpu.dot_dimension_numbers<[1], [0], [0], [1], [0, 0, 1, 1], [], []>} : vector<20x256xbf16>, vector<256x64xbf16>, vector<20x64xf32> -> vector<20x64xf32>
    %c1_194 = arith.constant 1 : index
    %c0_195 = arith.constant 0 : index
    %c0_196 = arith.constant 0 : index
    %400 = vector.load %arg21[%c1_194, %c0_195, %c0_196] : memref<2x1x64xf32, #tpu.memory_space<vmem>>, vector<1x1x64xf32>
    %401 = vector.shape_cast %400 : vector<1x1x64xf32> to vector<1x64xf32>
    %402 = vector.broadcast %401 : vector<1x64xf32> to vector<20x64xf32>
    %403 = arith.addf %399, %402 : vector<20x64xf32>
    %404 = arith.addf %353, %403 : vector<20x64xf32>
    %c0_197 = arith.constant 0 : index
    %c0_198 = arith.constant 0 : index
    %405 = vector.load %arg22[%c0_197, %c0_198] : memref<1x64xf32, #tpu.memory_space<vmem>>, vector<1x64xf32>
    %c0_199 = arith.constant 0 : index
    %c0_200 = arith.constant 0 : index
    %406 = vector.load %arg23[%c0_199, %c0_200] : memref<1x64xf32, #tpu.memory_space<vmem>>, vector<1x64xf32>
    %cst_201 = arith.constant dense<0.000000e+00> : vector<20xf32>
    %407 = vector.multi_reduction <add>, %404, %cst_201 [1] : vector<20x64xf32> to vector<20xf32>
    %408 = vector.shape_cast %407 : vector<20xf32> to vector<20x1xf32>
    %cst_202 = arith.constant 6.400000e+01 : f32
    %409 = vector.broadcast %cst_202 : f32 to vector<20x1xf32>
    %410 = arith.divf %408, %409 : vector<20x1xf32>
    %411 = vector.broadcast %410 : vector<20x1xf32> to vector<20x64xf32>
    %412 = arith.subf %404, %411 : vector<20x64xf32>
    %413 = arith.mulf %412, %412 : vector<20x64xf32>
    %cst_203 = arith.constant dense<0.000000e+00> : vector<20xf32>
    %414 = vector.multi_reduction <add>, %413, %cst_203 [1] : vector<20x64xf32> to vector<20xf32>
    %415 = vector.shape_cast %414 : vector<20xf32> to vector<20x1xf32>
    %cst_204 = arith.constant 6.400000e+01 : f32
    %416 = vector.broadcast %cst_204 : f32 to vector<20x1xf32>
    %417 = arith.divf %415, %416 : vector<20x1xf32>
    %418 = vector.broadcast %410 : vector<20x1xf32> to vector<20x64xf32>
    %419 = arith.subf %404, %418 : vector<20x64xf32>
    %cst_205 = arith.constant 9.99999997E-7 : f32
    %420 = vector.broadcast %cst_205 : f32 to vector<20x1xf32>
    %421 = arith.addf %417, %420 : vector<20x1xf32>
    %422 = math.rsqrt %421 : vector<20x1xf32>
    %423 = vector.broadcast %422 : vector<20x1xf32> to vector<20x64xf32>
    %424 = arith.mulf %419, %423 : vector<20x64xf32>
    %425 = vector.broadcast %405 : vector<1x64xf32> to vector<20x64xf32>
    %426 = arith.mulf %424, %425 : vector<20x64xf32>
    %427 = vector.broadcast %406 : vector<1x64xf32> to vector<20x64xf32>
    %428 = arith.addf %426, %427 : vector<20x64xf32>
    %c0_206 = arith.constant 0 : index
    %c0_207 = arith.constant 0 : index
    %429 = vector.load %arg24[%c0_206, %c0_207] : memref<1x64xf32, #tpu.memory_space<vmem>>, vector<1x64xf32>
    %c0_208 = arith.constant 0 : index
    %c0_209 = arith.constant 0 : index
    %430 = vector.load %arg25[%c0_208, %c0_209] : memref<1x64xf32, #tpu.memory_space<vmem>>, vector<1x64xf32>
    %cst_210 = arith.constant dense<0.000000e+00> : vector<20xf32>
    %431 = vector.multi_reduction <add>, %428, %cst_210 [1] : vector<20x64xf32> to vector<20xf32>
    %432 = vector.shape_cast %431 : vector<20xf32> to vector<20x1xf32>
    %cst_211 = arith.constant 6.400000e+01 : f32
    %433 = vector.broadcast %cst_211 : f32 to vector<20x1xf32>
    %434 = arith.divf %432, %433 : vector<20x1xf32>
    %435 = vector.broadcast %434 : vector<20x1xf32> to vector<20x64xf32>
    %436 = arith.subf %428, %435 : vector<20x64xf32>
    %437 = arith.mulf %436, %436 : vector<20x64xf32>
    %cst_212 = arith.constant dense<0.000000e+00> : vector<20xf32>
    %438 = vector.multi_reduction <add>, %437, %cst_212 [1] : vector<20x64xf32> to vector<20xf32>
    %439 = vector.shape_cast %438 : vector<20xf32> to vector<20x1xf32>
    %cst_213 = arith.constant 6.400000e+01 : f32
    %440 = vector.broadcast %cst_213 : f32 to vector<20x1xf32>
    %441 = arith.divf %439, %440 : vector<20x1xf32>
    %442 = vector.broadcast %434 : vector<20x1xf32> to vector<20x64xf32>
    %443 = arith.subf %428, %442 : vector<20x64xf32>
    %cst_214 = arith.constant 9.99999974E-6 : f32
    %444 = vector.broadcast %cst_214 : f32 to vector<20x1xf32>
    %445 = arith.addf %441, %444 : vector<20x1xf32>
    %446 = math.rsqrt %445 : vector<20x1xf32>
    %447 = vector.broadcast %446 : vector<20x1xf32> to vector<20x64xf32>
    %448 = arith.mulf %443, %447 : vector<20x64xf32>
    %449 = vector.broadcast %429 : vector<1x64xf32> to vector<20x64xf32>
    %450 = arith.mulf %448, %449 : vector<20x64xf32>
    %451 = vector.broadcast %430 : vector<1x64xf32> to vector<20x64xf32>
    %452 = arith.addf %450, %451 : vector<20x64xf32>
    %c0_215 = arith.constant 0 : index
    %c0_216 = arith.constant 0 : index
    %453 = vector.load %arg26[%c0_215, %c0_216] : memref<1x64xf32, #tpu.memory_space<vmem>>, vector<1x64xf32>
    %454 = vector.broadcast %453 : vector<1x64xf32> to vector<20x64xf32>
    %455 = arith.mulf %452, %454 : vector<20x64xf32>
    %cst_217 = arith.constant dense<0.000000e+00> : vector<20xf32>
    %456 = vector.multi_reduction <add>, %455, %cst_217 [1] : vector<20x64xf32> to vector<20xf32>
    %457 = vector.shape_cast %456 : vector<20xf32> to vector<20x1xf32>
    %c0_218 = arith.constant 0 : index
    %c0_219 = arith.constant 0 : index
    %458 = vector.load %arg27[%c0_218, %c0_219] : memref<1x1xf32, #tpu.memory_space<vmem>>, vector<1x1xf32>
    %459 = vector.broadcast %458 : vector<1x1xf32> to vector<20x1xf32>
    %460 = arith.addf %457, %459 : vector<20x1xf32>
    %c0_220 = arith.constant 0 : index
    %c0_221 = arith.constant 0 : index
    %c0_222 = arith.constant 0 : index
    %461 = vector.load %arg28[%c0_220, %c0_221, %c0_222] : memref<1x20x1xf32, #tpu.memory_space<vmem>>, vector<1x20x1xf32>
    %462 = vector.shape_cast %461 : vector<1x20x1xf32> to vector<20x1xf32>
    %463 = vector.shape_cast %460 : vector<20x1xf32> to vector<1x20x1xf32>
    tpu.vector_store %arg28[%c0_220, %c0_221, %c0_222], %463 {strides = array<i32>} : memref<1x20x1xf32, #tpu.memory_space<vmem>>, vector<1x20x1xf32>,
    return
  }
  func.func @transform_0(%arg0: i32) -> (i32, i32, i32) {
    %c0_i32 = arith.constant 0 : i32
    %c0_i32_0 = arith.constant 0 : i32
    %c0_i32_1 = arith.constant 0 : i32
    return %arg0, %c0_i32, %c0_i32_0 : i32, i32, i32
  }
  func.func @transform_1(%arg0: i32) -> (i32, i32) {
    %c0_i32 = arith.constant 0 : i32
    %c0_i32_0 = arith.constant 0 : i32
    %c0_i32_1 = arith.constant 0 : i32
    return %c0_i32, %c0_i32_0 : i32, i32
  }
  func.func @transform_2(%arg0: i32) -> (i32, i32) {
    %c0_i32 = arith.constant 0 : i32
    %c0_i32_0 = arith.constant 0 : i32
    %c0_i32_1 = arith.constant 0 : i32
    return %c0_i32, %c0_i32_0 : i32, i32
  }
  func.func @transform_3(%arg0: i32) -> (i32, i32, i32) {
    %c0_i32 = arith.constant 0 : i32
    %c0_i32_0 = arith.constant 0 : i32
    %c0_i32_1 = arith.constant 0 : i32
    %c0_i32_2 = arith.constant 0 : i32
    return %c0_i32, %c0_i32_0, %c0_i32_1 : i32, i32, i32
  }
  func.func @transform_4(%arg0: i32) -> (i32, i32) {
    %c0_i32 = arith.constant 0 : i32
    %c0_i32_0 = arith.constant 0 : i32
    %c0_i32_1 = arith.constant 0 : i32
    return %c0_i32, %c0_i32_0 : i32, i32
  }
  func.func @transform_5(%arg0: i32) -> (i32, i32, i32) {
    %c0_i32 = arith.constant 0 : i32
    %c0_i32_0 = arith.constant 0 : i32
    %c0_i32_1 = arith.constant 0 : i32
    %c0_i32_2 = arith.constant 0 : i32
    return %c0_i32, %c0_i32_0, %c0_i32_1 : i32, i32, i32
  }
  func.func @transform_6(%arg0: i32) -> (i32, i32, i32) {
    %c0_i32 = arith.constant 0 : i32
    %c0_i32_0 = arith.constant 0 : i32
    %c0_i32_1 = arith.constant 0 : i32
    %c0_i32_2 = arith.constant 0 : i32
    return %c0_i32, %c0_i32_0, %c0_i32_1 : i32, i32, i32
  }
  func.func @transform_7(%arg0: i32) -> (i32, i32, i32) {
    %c0_i32 = arith.constant 0 : i32
    %c0_i32_0 = arith.constant 0 : i32
    %c0_i32_1 = arith.constant 0 : i32
    %c0_i32_2 = arith.constant 0 : i32
    return %c0_i32, %c0_i32_0, %c0_i32_1 : i32, i32, i32
  }
  func.func @transform_8(%arg0: i32) -> (i32, i32, i32) {
    %c0_i32 = arith.constant 0 : i32
    %c0_i32_0 = arith.constant 0 : i32
    %c0_i32_1 = arith.constant 0 : i32
    %c0_i32_2 = arith.constant 0 : i32
    return %c0_i32, %c0_i32_0, %c0_i32_1 : i32, i32, i32
  }
  func.func @transform_9(%arg0: i32) -> (i32, i32, i32) {
    %c0_i32 = arith.constant 0 : i32
    %c0_i32_0 = arith.constant 0 : i32
    %c0_i32_1 = arith.constant 0 : i32
    %c0_i32_2 = arith.constant 0 : i32
    return %c0_i32, %c0_i32_0, %c0_i32_1 : i32, i32, i32
  }
  func.func @transform_10(%arg0: i32) -> (i32, i32, i32) {
    %c0_i32 = arith.constant 0 : i32
    %c0_i32_0 = arith.constant 0 : i32
    %c0_i32_1 = arith.constant 0 : i32
    %c0_i32_2 = arith.constant 0 : i32
    return %c0_i32, %c0_i32_0, %c0_i32_1 : i32, i32, i32
  }
  func.func @transform_11(%arg0: i32) -> (i32, i32, i32) {
    %c0_i32 = arith.constant 0 : i32
    %c0_i32_0 = arith.constant 0 : i32
    %c0_i32_1 = arith.constant 0 : i32
    %c0_i32_2 = arith.constant 0 : i32
    return %c0_i32, %c0_i32_0, %c0_i32_1 : i32, i32, i32
  }
  func.func @transform_12(%arg0: i32) -> (i32, i32, i32) {
    %c0_i32 = arith.constant 0 : i32
    %c0_i32_0 = arith.constant 0 : i32
    %c0_i32_1 = arith.constant 0 : i32
    %c0_i32_2 = arith.constant 0 : i32
    return %c0_i32, %c0_i32_0, %c0_i32_1 : i32, i32, i32
  }
  func.func @transform_13(%arg0: i32) -> (i32, i32, i32) {
    %c0_i32 = arith.constant 0 : i32
    %c0_i32_0 = arith.constant 0 : i32
    %c0_i32_1 = arith.constant 0 : i32
    %c0_i32_2 = arith.constant 0 : i32
    return %c0_i32, %c0_i32_0, %c0_i32_1 : i32, i32, i32
  }
  func.func @transform_14(%arg0: i32) -> (i32, i32, i32) {
    %c0_i32 = arith.constant 0 : i32
    %c0_i32_0 = arith.constant 0 : i32
    %c0_i32_1 = arith.constant 0 : i32
    %c0_i32_2 = arith.constant 0 : i32
    return %c0_i32, %c0_i32_0, %c0_i32_1 : i32, i32, i32
  }
  func.func @transform_15(%arg0: i32) -> (i32, i32, i32) {
    %c0_i32 = arith.constant 0 : i32
    %c0_i32_0 = arith.constant 0 : i32
    %c0_i32_1 = arith.constant 0 : i32
    %c0_i32_2 = arith.constant 0 : i32
    return %c0_i32, %c0_i32_0, %c0_i32_1 : i32, i32, i32
  }
  func.func @transform_16(%arg0: i32) -> (i32, i32, i32) {
    %c0_i32 = arith.constant 0 : i32
    %c0_i32_0 = arith.constant 0 : i32
    %c0_i32_1 = arith.constant 0 : i32
    %c0_i32_2 = arith.constant 0 : i32
    return %c0_i32, %c0_i32_0, %c0_i32_1 : i32, i32, i32
  }
  func.func @transform_17(%arg0: i32) -> (i32, i32, i32) {
    %c0_i32 = arith.constant 0 : i32
    %c0_i32_0 = arith.constant 0 : i32
    %c0_i32_1 = arith.constant 0 : i32
    %c0_i32_2 = arith.constant 0 : i32
    return %c0_i32, %c0_i32_0, %c0_i32_1 : i32, i32, i32
  }
  func.func @transform_18(%arg0: i32) -> (i32, i32, i32) {
    %c0_i32 = arith.constant 0 : i32
    %c0_i32_0 = arith.constant 0 : i32
    %c0_i32_1 = arith.constant 0 : i32
    %c0_i32_2 = arith.constant 0 : i32
    return %c0_i32, %c0_i32_0, %c0_i32_1 : i32, i32, i32
  }
  func.func @transform_19(%arg0: i32) -> (i32, i32, i32) {
    %c0_i32 = arith.constant 0 : i32
    %c0_i32_0 = arith.constant 0 : i32
    %c0_i32_1 = arith.constant 0 : i32
    %c0_i32_2 = arith.constant 0 : i32
    return %c0_i32, %c0_i32_0, %c0_i32_1 : i32, i32, i32
  }
  func.func @transform_20(%arg0: i32) -> (i32, i32, i32) {
    %c0_i32 = arith.constant 0 : i32
    %c0_i32_0 = arith.constant 0 : i32
    %c0_i32_1 = arith.constant 0 : i32
    %c0_i32_2 = arith.constant 0 : i32
    return %c0_i32, %c0_i32_0, %c0_i32_1 : i32, i32, i32
  }
  func.func @transform_21(%arg0: i32) -> (i32, i32) {
    %c0_i32 = arith.constant 0 : i32
    %c0_i32_0 = arith.constant 0 : i32
    %c0_i32_1 = arith.constant 0 : i32
    return %c0_i32, %c0_i32_0 : i32, i32
  }
  func.func @transform_22(%arg0: i32) -> (i32, i32) {
    %c0_i32 = arith.constant 0 : i32
    %c0_i32_0 = arith.constant 0 : i32
    %c0_i32_1 = arith.constant 0 : i32
    return %c0_i32, %c0_i32_0 : i32, i32
  }
  func.func @transform_23(%arg0: i32) -> (i32, i32) {
    %c0_i32 = arith.constant 0 : i32
    %c0_i32_0 = arith.constant 0 : i32
    %c0_i32_1 = arith.constant 0 : i32
    return %c0_i32, %c0_i32_0 : i32, i32
  }
  func.func @transform_24(%arg0: i32) -> (i32, i32) {
    %c0_i32 = arith.constant 0 : i32
    %c0_i32_0 = arith.constant 0 : i32
    %c0_i32_1 = arith.constant 0 : i32
    return %c0_i32, %c0_i32_0 : i32, i32
  }
  func.func @transform_25(%arg0: i32) -> (i32, i32) {
    %c0_i32 = arith.constant 0 : i32
    %c0_i32_0 = arith.constant 0 : i32
    %c0_i32_1 = arith.constant 0 : i32
    return %c0_i32, %c0_i32_0 : i32, i32
  }
  func.func @transform_26(%arg0: i32) -> (i32, i32) {
    %c0_i32 = arith.constant 0 : i32
    %c0_i32_0 = arith.constant 0 : i32
    %c0_i32_1 = arith.constant 0 : i32
    return %c0_i32, %c0_i32_0 : i32, i32
  }
  func.func @transform_27(%arg0: i32) -> (i32, i32, i32) {
    %c0_i32 = arith.constant 0 : i32
    %c0_i32_0 = arith.constant 0 : i32
    %c0_i32_1 = arith.constant 0 : i32
    return %arg0, %c0_i32, %c0_i32_0 : i32, i32, i32
  }
}

</mosaic_0001>

<llo_original>
// kernel: tile.9
$region0: #{tile.9}
  %s0 = inlined_call_operand.vmem [shape: f32[4,5,64], index: 0, kind: input, shape index: {}]
  %s1 = inlined_call_operand.vmem [shape: f32[20,64], index: 1, kind: output, shape index: {}]
  %v2 = vld [vmem:[%s0] sm:$0x1f]
  %vm3 = vcmask 523264
  %4 = vst.msk [vmem:[%s1] sm:$0x1f] %vm3, %v2
  %s5 = scalar_lea.vmem %s0, 8
  %v6 = vld [vmem:[%s5] sm:$0x1f]
  %vm7 = vcmask 523264
  %s8 = scalar_lea.vmem %s1, 5
  %9 = vst.msk [vmem:[%s8] sm:$0x1f] %vm7, %v6
  %s10 = scalar_lea.vmem %s0, 16
  %v11 = vld [vmem:[%s10] sm:$0x1f]
  %vm12 = vcmask 523264
  %s13 = scalar_lea.vmem %s1, 10
  %14 = vst.msk [vmem:[%s13] sm:$0x1f] %vm12, %v11
  %s15 = scalar_lea.vmem %s0, 24
  %v16 = vld [vmem:[%s15] sm:$0x1f]
  %vm17 = vcmask 523264
  %s18 = scalar_lea.vmem %s1, 15
  %19 = vst.msk [vmem:[%s18] sm:$0x1f] %vm17, %v16

// kernel: vit_classifier_forward.1
$region0: #{vit_classifier_forward.1}
  #allocation0 [shape = 'u32[]', space=smem, size = 0x4, offset = 0x4, fixed_abs, tag = 'smem constant byte address 0x4 - core index']
  #allocation1 [shape = 'u32[144,128]{1,0:T(1,128)}', space=vmem, size = 0x12000, scoped, tag = 'internal scratch']
  #allocation2 [shape = 'f32[1,1]{1,0:T(1,128)S(1)}', space=vmem, size = 0x200, scoped, tag = 'scoped memory for vit_classifier_forward.1']
  %s0 = inlined_call_operand.vmem [shape: bf16[2,20,768], index: 0, kind: input, shape index: {}]
  %s1 = inlined_call_operand.vmem [shape: f32[20,64], index: 1, kind: input, shape index: {}]
  %s2 = inlined_call_operand.vmem [shape: f32[20,20], index: 2, kind: input, shape index: {}]
  %s3 = inlined_call_operand.vmem [shape: f32[4,1,64], index: 3, kind: input, shape index: {}]
  %s4 = inlined_call_operand.vmem [shape: bf16[768,64], index: 4, kind: input, shape index: {}]
  %s5 = inlined_call_operand.vmem [shape: f32[2,1,64], index: 5, kind: input, shape index: {}]
  %s6 = inlined_call_operand.vmem [shape: f32[2,1,64], index: 6, kind: input, shape index: {}]
  %s7 = inlined_call_operand.vmem [shape: bf16[2,64,64], index: 7, kind: input, shape index: {}]
  %s8 = inlined_call_operand.vmem [shape: bf16[2,64,64], index: 8, kind: input, shape index: {}]
  %s9 = inlined_call_operand.vmem [shape: bf16[2,64,64], index: 9, kind: input, shape index: {}]
  %s10 = inlined_call_operand.vmem [shape: f32[2,1,64], index: 10, kind: input, shape index: {}]
  %s11 = inlined_call_operand.vmem [shape: f32[2,1,64], index: 11, kind: input, shape index: {}]
  %s12 = inlined_call_operand.vmem [shape: f32[2,1,64], index: 12, kind: input, shape index: {}]
  %s13 = inlined_call_operand.vmem [shape: bf16[2,64,64], index: 13, kind: input, shape index: {}]
  %s14 = inlined_call_operand.vmem [shape: f32[2,1,64], index: 14, kind: input, shape index: {}]
  %s15 = inlined_call_operand.vmem [shape: f32[2,1,64], index: 15, kind: input, shape index: {}]
  %s16 = inlined_call_operand.vmem [shape: f32[2,1,64], index: 16, kind: input, shape index: {}]
  %s17 = inlined_call_operand.vmem [shape: bf16[2,64,256], index: 17, kind: input, shape index: {}]
  %s18 = inlined_call_operand.vmem [shape: f32[2,1,256], index: 18, kind: input, shape index: {}]
  %s19 = inlined_call_operand.vmem [shape: bf16[2,256,64], index: 19, kind: input, shape index: {}]
  %s20 = inlined_call_operand.vmem [shape: f32[2,1,64], index: 20, kind: input, shape index: {}]
  %s21 = inlined_call_operand.vmem [shape: f32[1,64], index: 21, kind: input, shape index: {}]
  %s22 = inlined_call_operand.vmem [shape: f32[1,64], index: 22, kind: input, shape index: {}]
  %s23 = inlined_call_operand.vmem [shape: f32[1,64], index: 23, kind: input, shape index: {}]
  %s24 = inlined_call_operand.vmem [shape: f32[1,64], index: 24, kind: input, shape index: {}]
  %s25 = inlined_call_operand.vmem [shape: f32[1,64], index: 25, kind: input, shape index: {}]
  %s26 = inlined_call_operand.<no memory space> [shape: f32[1,1], index: 26, kind: input, shape index: {}]
  %s27 = inlined_call_operand.vmem [shape: f32[2,20,1], index: 27, kind: output, shape index: {}]
  %s28 = sld [smem:[#allocation0]]
  $region141: #{vit_classifier_forward.1} parent=0
    _
  %s30 = ssub.s32 1, %s28
  %s31 = scalar_select 0, %s30, %s28
  %v32 = vstv %s26
  %33 = vst [vmem:[#allocation2] sm:$0x1] %v32
  loop: start=0, step=1, limit=4
  $region2: #{vit_classifier_forward.1} parent=0 // loop_pre_header
    _
  $region3: #{vit_classifier_forward.1} parent=0 // loop_header
    %s35 = sphi 0, %s39
    %p36 = scmp.ge.s32.totalorder %s35, 4
    %s45 = sphi 0, %s47
    %s48 = sphi 0, %s45
    %s49 = sphi 0, %s48
    %s65 = sphi 0, %s49
    %s69 = sphi 0, %s69
    %s71 = sphi 0, %s69
    %s72 = sphi 0, %s71
    %s86 = sphi 0, %s72
    %s90 = sphi 0, %s90
    %s92 = sphi 0, %s90
    %s93 = sphi 0, %s92
    %s107 = sphi 0, %s93
    %s111 = sphi 0, %s111
    %s113 = sphi 0, %s111
    %s114 = sphi 0, %s113
    %s128 = sphi 0, %s114
    %s132 = sphi 0, %s132
    %s134 = sphi 0, %s132
    %s135 = sphi 0, %s134
    %s149 = sphi 0, %s135
    %s153 = sphi 0, %s153
    %s155 = sphi 0, %s153
    %s156 = sphi 0, %s155
    %s170 = sphi 0, %s156
    %s174 = sphi 0, %s174
    %s176 = sphi 0, %s174
    %s177 = sphi 0, %s176
    %s191 = sphi 0, %s177
    %s195 = sphi 0, %s195
    %s197 = sphi 0, %s195
    %s198 = sphi 0, %s197
    %s212 = sphi 0, %s198
    %s216 = sphi 0, %s216
    %s218 = sphi 0, %s216
    %s219 = sphi 0, %s218
    %s233 = sphi 0, %s219
    %s237 = sphi 0, %s237
    %s239 = sphi 0, %s237
    %s240 = sphi 0, %s239
    %s254 = sphi 0, %s240
    %s258 = sphi 0, %s258
    %s260 = sphi 0, %s258
    %s261 = sphi 0, %s260
    %s275 = sphi 0, %s261
    %s279 = sphi 0, %s279
    %s281 = sphi 0, %s279
    %s282 = sphi 0, %s281
    %s296 = sphi 0, %s282
    %s300 = sphi 0, %s300
    %s302 = sphi 0, %s300
    %s303 = sphi 0, %s302
    %s317 = sphi 0, %s303
    %s321 = sphi 0, %s321
    %s323 = sphi 0, %s321
    %s324 = sphi 0, %s323
    %s338 = sphi 0, %s324
    %s342 = sphi 0, %s342
    %s344 = sphi 0, %s342
    %s345 = sphi 0, %s344
    %s359 = sphi 0, %s345
    %s363 = sphi 0, %s363
    %s365 = sphi 0, %s363
    %s366 = sphi 0, %s365
    %s380 = sphi 0, %s366
    %s384 = sphi 0, %s384
    %s386 = sphi 0, %s384
    %s387 = sphi 0, %s386
    %s401 = sphi 0, %s387
    %s405 = sphi 0, %s405
    %s407 = sphi 0, %s405
    %s408 = sphi 0, %s407
    %s422 = sphi 0, %s408
    %s426 = sphi 0, %s426
    %s428 = sphi 0, %s426
    %s429 = sphi 0, %s428
    %s443 = sphi 0, %s429
    %s447 = sphi 0, %s447
    %s449 = sphi 0, %s447
    %s450 = sphi 0, %s449
    %s464 = sphi 0, %s450
    %s468 = sphi 0, %s468
    %s470 = sphi 0, %s468
    %s471 = sphi 0, %s470
    %s485 = sphi 0, %s471
    %s489 = sphi 0, %s489
    %s491 = sphi 0, %s489
    %s492 = sphi 0, %s491
    %s506 = sphi 0, %s492
    %s510 = sphi 0, %s510
    %s512 = sphi 0, %s510
    %s513 = sphi 0, %s512
    %s527 = sphi 0, %s513
    %s531 = sphi 0, %s531
    %s533 = sphi 0, %s531
    %s534 = sphi 0, %s533
    %s548 = sphi 0, %s534
    %s552 = sphi 0, %s552
    %s554 = sphi 0, %s552
    %s555 = sphi 0, %s554
    %s569 = sphi 0, %s555
    %s573 = sphi 0, %s573
    %s575 = sphi 0, %s573
    %s576 = sphi 0, %s575
    %s590 = sphi 0, %s576
    %s594 = sphi 0, %s594
    %s596 = sphi 0, %s594
    %s597 = sphi 0, %s596
    %s611 = sphi 0, %s597
    %s617 = sphi 0, %s619
    %s620 = sphi 0, %s617
    %s621 = sphi 0, %s620
    %s637 = sphi 0, %s621
  $region4: #{vit_classifier_forward.1} parent=0 // loop_header_branch
    %38 = sbr.rel (%p36) target = $region8
  $region5: #{vit_classifier_forward.1} parent=0 // loop_body
    %s40 = ssub.s32 %s35, 1
    %s41 = ssub.s32 %s35, 2
    %s42 = sadd.s32 %s35, 1
    %s43 = ssub.s32 %s35, %s42
    %p44 = scmp.eq.s32.totalorder %s43, 0
    %s46 = sadd.s32 %s45, 1
    %s47 = scalar_select %p44, %s45, %s46
    %p50 = pneg %p44
    %p51 = scmp.eq.s32.totalorder %s35, 1
    %p52 = por %p50, %p51
    %p53 = scmp.ne.s32.totalorder %s45, %s48
    %p54 = scmp.eq.s32.totalorder %s35, 0
    %p55 = por %p53, %p54
    %p56 = scmp.ne.s32.totalorder %s45, %s48
    %p57 = scmp.eq.s32.totalorder %s40, 1
    %p58 = por %p56, %p57
    %p59 = scmp.ne.s32.totalorder %s48, %s49
    %p60 = scmp.eq.s32.totalorder %s40, 0
    %p61 = por %p59, %p60
    %p62 = scmp.ne.s32.totalorder %s48, %s49
    %p63 = scmp.eq.s32.totalorder %s41, 1
    %p64 = por %p62, %p63
    %p66 = scmp.ne.s32.totalorder %s49, %s65
    %p67 = scmp.eq.s32.totalorder %s41, 0
    %p68 = por %p66, %p67
    %s70 = sadd.s32 %s69, 1
    %p73 = scmp.eq.s32.totalorder %s35, 1
    %p74 = scmp.ne.s32.totalorder %s69, %s71
    %p75 = scmp.eq.s32.totalorder %s35, 0
    %p76 = por %p74, %p75
    %p77 = scmp.ne.s32.totalorder %s69, %s71
    %p78 = scmp.eq.s32.totalorder %s40, 1
    %p79 = por %p77, %p78
    %p80 = scmp.ne.s32.totalorder %s71, %s72
    %p81 = scmp.eq.s32.totalorder %s40, 0
    %p82 = por %p80, %p81
    %p83 = scmp.ne.s32.totalorder %s71, %s72
    %p84 = scmp.eq.s32.totalorder %s41, 1
    %p85 = por %p83, %p84
    %p87 = scmp.ne.s32.totalorder %s72, %s86
    %p88 = scmp.eq.s32.totalorder %s41, 0
    %p89 = por %p87, %p88
    %s91 = sadd.s32 %s90, 1
    %p94 = scmp.eq.s32.totalorder %s35, 1
    %p95 = scmp.ne.s32.totalorder %s90, %s92
    %p96 = scmp.eq.s32.totalorder %s35, 0
    %p97 = por %p95, %p96
    %p98 = scmp.ne.s32.totalorder %s90, %s92
    %p99 = scmp.eq.s32.totalorder %s40, 1
    %p100 = por %p98, %p99
    %p101 = scmp.ne.s32.totalorder %s92, %s93
    %p102 = scmp.eq.s32.totalorder %s40, 0
    %p103 = por %p101, %p102
    %p104 = scmp.ne.s32.totalorder %s92, %s93
    %p105 = scmp.eq.s32.totalorder %s41, 1
    %p106 = por %p104, %p105
    %p108 = scmp.ne.s32.totalorder %s93, %s107
    %p109 = scmp.eq.s32.totalorder %s41, 0
    %p110 = por %p108, %p109
    %s112 = sadd.s32 %s111, 1
    %p115 = scmp.eq.s32.totalorder %s35, 1
    %p116 = scmp.ne.s32.totalorder %s111, %s113
    %p117 = scmp.eq.s32.totalorder %s35, 0
    %p118 = por %p116, %p117
    %p119 = scmp.ne.s32.totalorder %s111, %s113
    %p120 = scmp.eq.s32.totalorder %s40, 1
    %p121 = por %p119, %p120
    %p122 = scmp.ne.s32.totalorder %s113, %s114
    %p123 = scmp.eq.s32.totalorder %s40, 0
    %p124 = por %p122, %p123
    %p125 = scmp.ne.s32.totalorder %s113, %s114
    %p126 = scmp.eq.s32.totalorder %s41, 1
    %p127 = por %p125, %p126
    %p129 = scmp.ne.s32.totalorder %s114, %s128
    %p130 = scmp.eq.s32.totalorder %s41, 0
    %p131 = por %p129, %p130
    %s133 = sadd.s32 %s132, 1
    %p136 = scmp.eq.s32.totalorder %s35, 1
    %p137 = scmp.ne.s32.totalorder %s132, %s134
    %p138 = scmp.eq.s32.totalorder %s35, 0
    %p139 = por %p137, %p138
    %p140 = scmp.ne.s32.totalorder %s132, %s134
    %p141 = scmp.eq.s32.totalorder %s40, 1
    %p142 = por %p140, %p141
    %p143 = scmp.ne.s32.totalorder %s134, %s135
    %p144 = scmp.eq.s32.totalorder %s40, 0
    %p145 = por %p143, %p144
    %p146 = scmp.ne.s32.totalorder %s134, %s135
    %p147 = scmp.eq.s32.totalorder %s41, 1
    %p148 = por %p146, %p147
    %p150 = scmp.ne.s32.totalorder %s135, %s149
    %p151 = scmp.eq.s32.totalorder %s41, 0
    %p152 = por %p150, %p151
    %s154 = sadd.s32 %s153, 1
    %p157 = scmp.eq.s32.totalorder %s35, 1
    %p158 = scmp.ne.s32.totalorder %s153, %s155
    %p159 = scmp.eq.s32.totalorder %s35, 0
    %p160 = por %p158, %p159
    %p161 = scmp.ne.s32.totalorder %s153, %s155
    %p162 = scmp.eq.s32.totalorder %s40, 1
    %p163 = por %p161, %p162
    %p164 = scmp.ne.s32.totalorder %s155, %s156
    %p165 = scmp.eq.s32.totalorder %s40, 0
    %p166 = por %p164, %p165
    %p167 = scmp.ne.s32.totalorder %s155, %s156
    %p168 = scmp.eq.s32.totalorder %s41, 1
    %p169 = por %p167, %p168
    %p171 = scmp.ne.s32.totalorder %s156, %s170
    %p172 = scmp.eq.s32.totalorder %s41, 0
    %p173 = por %p171, %p172
    %s175 = sadd.s32 %s174, 1
    %p178 = scmp.eq.s32.totalorder %s35, 1
    %p179 = scmp.ne.s32.totalorder %s174, %s176
    %p180 = scmp.eq.s32.totalorder %s35, 0
    %p181 = por %p179, %p180
    %p182 = scmp.ne.s32.totalorder %s174, %s176
    %p183 = scmp.eq.s32.totalorder %s40, 1
    %p184 = por %p182, %p183
    %p185 = scmp.ne.s32.totalorder %s176, %s177
    %p186 = scmp.eq.s32.totalorder %s40, 0
    %p187 = por %p185, %p186
    %p188 = scmp.ne.s32.totalorder %s176, %s177
    %p189 = scmp.eq.s32.totalorder %s41, 1
    %p190 = por %p188, %p189
    %p192 = scmp.ne.s32.totalorder %s177, %s191
    %p193 = scmp.eq.s32.totalorder %s41, 0
    %p194 = por %p192, %p193
    %s196 = sadd.s32 %s195, 1
    %p199 = scmp.eq.s32.totalorder %s35, 1
    %p200 = scmp.ne.s32.totalorder %s195, %s197
    %p201 = scmp.eq.s32.totalorder %s35, 0
    %p202 = por %p200, %p201
    %p203 = scmp.ne.s32.totalorder %s195, %s197
    %p204 = scmp.eq.s32.totalorder %s40, 1
    %p205 = por %p203, %p204
    %p206 = scmp.ne.s32.totalorder %s197, %s198
    %p207 = scmp.eq.s32.totalorder %s40, 0
    %p208 = por %p206, %p207
    %p209 = scmp.ne.s32.totalorder %s197, %s198
    %p210 = scmp.eq.s32.totalorder %s41, 1
    %p211 = por %p209, %p210
    %p213 = scmp.ne.s32.totalorder %s198, %s212
    %p214 = scmp.eq.s32.totalorder %s41, 0
    %p215 = por %p213, %p214
    %s217 = sadd.s32 %s216, 1
    %p220 = scmp.eq.s32.totalorder %s35, 1
    %p221 = scmp.ne.s32.totalorder %s216, %s218
    %p222 = scmp.eq.s32.totalorder %s35, 0
    %p223 = por %p221, %p222
    %p224 = scmp.ne.s32.totalorder %s216, %s218
    %p225 = scmp.eq.s32.totalorder %s40, 1
    %p226 = por %p224, %p225
    %p227 = scmp.ne.s32.totalorder %s218, %s219
    %p228 = scmp.eq.s32.totalorder %s40, 0
    %p229 = por %p227, %p228
    %p230 = scmp.ne.s32.totalorder %s218, %s219
    %p231 = scmp.eq.s32.totalorder %s41, 1
    %p232 = por %p230, %p231
    %p234 = scmp.ne.s32.totalorder %s219, %s233
    %p235 = scmp.eq.s32.totalorder %s41, 0
    %p236 = por %p234, %p235
    %s238 = sadd.s32 %s237, 1
    %p241 = scmp.eq.s32.totalorder %s35, 1
    %p242 = scmp.ne.s32.totalorder %s237, %s239
    %p243 = scmp.eq.s32.totalorder %s35, 0
    %p244 = por %p242, %p243
    %p245 = scmp.ne.s32.totalorder %s237, %s239
    %p246 = scmp.eq.s32.totalorder %s40, 1
    %p247 = por %p245, %p246
    %p248 = scmp.ne.s32.totalorder %s239, %s240
    %p249 = scmp.eq.s32.totalorder %s40, 0
    %p250 = por %p248, %p249
    %p251 = scmp.ne.s32.totalorder %s239, %s240
    %p252 = scmp.eq.s32.totalorder %s41, 1
    %p253 = por %p251, %p252
    %p255 = scmp.ne.s32.totalorder %s240, %s254
    %p256 = scmp.eq.s32.totalorder %s41, 0
    %p257 = por %p255, %p256
    %s259 = sadd.s32 %s258, 1
    %p262 = scmp.eq.s32.totalorder %s35, 1
    %p263 = scmp.ne.s32.totalorder %s258, %s260
    %p264 = scmp.eq.s32.totalorder %s35, 0
    %p265 = por %p263, %p264
    %p266 = scmp.ne.s32.totalorder %s258, %s260
    %p267 = scmp.eq.s32.totalorder %s40, 1
    %p268 = por %p266, %p267
    %p269 = scmp.ne.s32.totalorder %s260, %s261
    %p270 = scmp.eq.s32.totalorder %s40, 0
    %p271 = por %p269, %p270
    %p272 = scmp.ne.s32.totalorder %s260, %s261
    %p273 = scmp.eq.s32.totalorder %s41, 1
    %p274 = por %p272, %p273
    %p276 = scmp.ne.s32.totalorder %s261, %s275
    %p277 = scmp.eq.s32.totalorder %s41, 0
    %p278 = por %p276, %p277
    %s280 = sadd.s32 %s279, 1
    %p283 = scmp.eq.s32.totalorder %s35, 1
    %p284 = scmp.ne.s32.totalorder %s279, %s281
    %p285 = scmp.eq.s32.totalorder %s35, 0
    %p286 = por %p284, %p285
    %p287 = scmp.ne.s32.totalorder %s279, %s281
    %p288 = scmp.eq.s32.totalorder %s40, 1
    %p289 = por %p287, %p288
    %p290 = scmp.ne.s32.totalorder %s281, %s282
    %p291 = scmp.eq.s32.totalorder %s40, 0
    %p292 = por %p290, %p291
    %p293 = scmp.ne.s32.totalorder %s281, %s282
    %p294 = scmp.eq.s32.totalorder %s41, 1
    %p295 = por %p293, %p294
    %p297 = scmp.ne.s32.totalorder %s282, %s296
    %p298 = scmp.eq.s32.totalorder %s41, 0
    %p299 = por %p297, %p298
    %s301 = sadd.s32 %s300, 1
    %p304 = scmp.eq.s32.totalorder %s35, 1
    %p305 = scmp.ne.s32.totalorder %s300, %s302
    %p306 = scmp.eq.s32.totalorder %s35, 0
    %p307 = por %p305, %p306
    %p308 = scmp.ne.s32.totalorder %s300, %s302
    %p309 = scmp.eq.s32.totalorder %s40, 1
    %p310 = por %p308, %p309
    %p311 = scmp.ne.s32.totalorder %s302, %s303
    %p312 = scmp.eq.s32.totalorder %s40, 0
    %p313 = por %p311, %p312
    %p314 = scmp.ne.s32.totalorder %s302, %s303
    %p315 = scmp.eq.s32.totalorder %s41, 1
    %p316 = por %p314, %p315
    %p318 = scmp.ne.s32.totalorder %s303, %s317
    %p319 = scmp.eq.s32.totalorder %s41, 0
    %p320 = por %p318, %p319
    %s322 = sadd.s32 %s321, 1
    %p325 = scmp.eq.s32.totalorder %s35, 1
    %p326 = scmp.ne.s32.totalorder %s321, %s323
    %p327 = scmp.eq.s32.totalorder %s35, 0
    %p328 = por %p326, %p327
    %p329 = scmp.ne.s32.totalorder %s321, %s323
    %p330 = scmp.eq.s32.totalorder %s40, 1
    %p331 = por %p329, %p330
    %p332 = scmp.ne.s32.totalorder %s323, %s324
    %p333 = scmp.eq.s32.totalorder %s40, 0
    %p334 = por %p332, %p333
    %p335 = scmp.ne.s32.totalorder %s323, %s324
    %p336 = scmp.eq.s32.totalorder %s41, 1
    %p337 = por %p335, %p336
    %p339 = scmp.ne.s32.totalorder %s324, %s338
    %p340 = scmp.eq.s32.totalorder %s41, 0
    %p341 = por %p339, %p340
    %s343 = sadd.s32 %s342, 1
    %p346 = scmp.eq.s32.totalorder %s35, 1
    %p347 = scmp.ne.s32.totalorder %s342, %s344
    %p348 = scmp.eq.s32.totalorder %s35, 0
    %p349 = por %p347, %p348
    %p350 = scmp.ne.s32.totalorder %s342, %s344
    %p351 = scmp.eq.s32.totalorder %s40, 1
    %p352 = por %p350, %p351
    %p353 = scmp.ne.s32.totalorder %s344, %s345
    %p354 = scmp.eq.s32.totalorder %s40, 0
    %p355 = por %p353, %p354
    %p356 = scmp.ne.s32.totalorder %s344, %s345
    %p357 = scmp.eq.s32.totalorder %s41, 1
    %p358 = por %p356, %p357
    %p360 = scmp.ne.s32.totalorder %s345, %s359
    %p361 = scmp.eq.s32.totalorder %s41, 0
    %p362 = por %p360, %p361
    %s364 = sadd.s32 %s363, 1
    %p367 = scmp.eq.s32.totalorder %s35, 1
    %p368 = scmp.ne.s32.totalorder %s363, %s365
    %p369 = scmp.eq.s32.totalorder %s35, 0
    %p370 = por %p368, %p369
    %p371 = scmp.ne.s32.totalorder %s363, %s365
    %p372 = scmp.eq.s32.totalorder %s40, 1
    %p373 = por %p371, %p372
    %p374 = scmp.ne.s32.totalorder %s365, %s366
    %p375 = scmp.eq.s32.totalorder %s40, 0
    %p376 = por %p374, %p375
    %p377 = scmp.ne.s32.totalorder %s365, %s366
    %p378 = scmp.eq.s32.totalorder %s41, 1
    %p379 = por %p377, %p378
    %p381 = scmp.ne.s32.totalorder %s366, %s380
    %p382 = scmp.eq.s32.totalorder %s41, 0
    %p383 = por %p381, %p382
    %s385 = sadd.s32 %s384, 1
    %p388 = scmp.eq.s32.totalorder %s35, 1
    %p389 = scmp.ne.s32.totalorder %s384, %s386
    %p390 = scmp.eq.s32.totalorder %s35, 0
    %p391 = por %p389, %p390
    %p392 = scmp.ne.s32.totalorder %s384, %s386
    %p393 = scmp.eq.s32.totalorder %s40, 1
    %p394 = por %p392, %p393
    %p395 = scmp.ne.s32.totalorder %s386, %s387
    %p396 = scmp.eq.s32.totalorder %s40, 0
    %p397 = por %p395, %p396
    %p398 = scmp.ne.s32.totalorder %s386, %s387
    %p399 = scmp.eq.s32.totalorder %s41, 1
    %p400 = por %p398, %p399
    %p402 = scmp.ne.s32.totalorder %s387, %s401
    %p403 = scmp.eq.s32.totalorder %s41, 0
    %p404 = por %p402, %p403
    %s406 = sadd.s32 %s405, 1
    %p409 = scmp.eq.s32.totalorder %s35, 1
    %p410 = scmp.ne.s32.totalorder %s405, %s407
    %p411 = scmp.eq.s32.totalorder %s35, 0
    %p412 = por %p410, %p411
    %p413 = scmp.ne.s32.totalorder %s405, %s407
    %p414 = scmp.eq.s32.totalorder %s40, 1
    %p415 = por %p413, %p414
    %p416 = scmp.ne.s32.totalorder %s407, %s408
    %p417 = scmp.eq.s32.totalorder %s40, 0
    %p418 = por %p416, %p417
    %p419 = scmp.ne.s32.totalorder %s407, %s408
    %p420 = scmp.eq.s32.totalorder %s41, 1
    %p421 = por %p419, %p420
    %p423 = scmp.ne.s32.totalorder %s408, %s422
    %p424 = scmp.eq.s32.totalorder %s41, 0
    %p425 = por %p423, %p424
    %s427 = sadd.s32 %s426, 1
    %p430 = scmp.eq.s32.totalorder %s35, 1
    %p431 = scmp.ne.s32.totalorder %s426, %s428
    %p432 = scmp.eq.s32.totalorder %s35, 0
    %p433 = por %p431, %p432
    %p434 = scmp.ne.s32.totalorder %s426, %s428
    %p435 = scmp.eq.s32.totalorder %s40, 1
    %p436 = por %p434, %p435
    %p437 = scmp.ne.s32.totalorder %s428, %s429
    %p438 = scmp.eq.s32.totalorder %s40, 0
    %p439 = por %p437, %p438
    %p440 = scmp.ne.s32.totalorder %s428, %s429
    %p441 = scmp.eq.s32.totalorder %s41, 1
    %p442 = por %p440, %p441
    %p444 = scmp.ne.s32.totalorder %s429, %s443
    %p445 = scmp.eq.s32.totalorder %s41, 0
    %p446 = por %p444, %p445
    %s448 = sadd.s32 %s447, 1
    %p451 = scmp.eq.s32.totalorder %s35, 1
    %p452 = scmp.ne.s32.totalorder %s447, %s449
    %p453 = scmp.eq.s32.totalorder %s35, 0
    %p454 = por %p452, %p453
    %p455 = scmp.ne.s32.totalorder %s447, %s449
    %p456 = scmp.eq.s32.totalorder %s40, 1
    %p457 = por %p455, %p456
    %p458 = scmp.ne.s32.totalorder %s449, %s450
    %p459 = scmp.eq.s32.totalorder %s40, 0
    %p460 = por %p458, %p459
    %p461 = scmp.ne.s32.totalorder %s449, %s450
    %p462 = scmp.eq.s32.totalorder %s41, 1
    %p463 = por %p461, %p462
    %p465 = scmp.ne.s32.totalorder %s450, %s464
    %p466 = scmp.eq.s32.totalorder %s41, 0
    %p467 = por %p465, %p466
    %s469 = sadd.s32 %s468, 1
    %p472 = scmp.eq.s32.totalorder %s35, 1
    %p473 = scmp.ne.s32.totalorder %s468, %s470
    %p474 = scmp.eq.s32.totalorder %s35, 0
    %p475 = por %p473, %p474
    %p476 = scmp.ne.s32.totalorder %s468, %s470
    %p477 = scmp.eq.s32.totalorder %s40, 1
    %p478 = por %p476, %p477
    %p479 = scmp.ne.s32.totalorder %s470, %s471
    %p480 = scmp.eq.s32.totalorder %s40, 0
    %p481 = por %p479, %p480
    %p482 = scmp.ne.s32.totalorder %s470, %s471
    %p483 = scmp.eq.s32.totalorder %s41, 1
    %p484 = por %p482, %p483
    %p486 = scmp.ne.s32.totalorder %s471, %s485
    %p487 = scmp.eq.s32.totalorder %s41, 0
    %p488 = por %p486, %p487
    %s490 = sadd.s32 %s489, 1
    %p493 = scmp.eq.s32.totalorder %s35, 1
    %p494 = scmp.ne.s32.totalorder %s489, %s491
    %p495 = scmp.eq.s32.totalorder %s35, 0
    %p496 = por %p494, %p495
    %p497 = scmp.ne.s32.totalorder %s489, %s491
    %p498 = scmp.eq.s32.totalorder %s40, 1
    %p499 = por %p497, %p498
    %p500 = scmp.ne.s32.totalorder %s491, %s492
    %p501 = scmp.eq.s32.totalorder %s40, 0
    %p502 = por %p500, %p501
    %p503 = scmp.ne.s32.totalorder %s491, %s492
    %p504 = scmp.eq.s32.totalorder %s41, 1
    %p505 = por %p503, %p504
    %p507 = scmp.ne.s32.totalorder %s492, %s506
    %p508 = scmp.eq.s32.totalorder %s41, 0
    %p509 = por %p507, %p508
    %s511 = sadd.s32 %s510, 1
    %p514 = scmp.eq.s32.totalorder %s35, 1
    %p515 = scmp.ne.s32.totalorder %s510, %s512
    %p516 = scmp.eq.s32.totalorder %s35, 0
    %p517 = por %p515, %p516
    %p518 = scmp.ne.s32.totalorder %s510, %s512
    %p519 = scmp.eq.s32.totalorder %s40, 1
    %p520 = por %p518, %p519
    %p521 = scmp.ne.s32.totalorder %s512, %s513
    %p522 = scmp.eq.s32.totalorder %s40, 0
    %p523 = por %p521, %p522
    %p524 = scmp.ne.s32.totalorder %s512, %s513
    %p525 = scmp.eq.s32.totalorder %s41, 1
    %p526 = por %p524, %p525
    %p528 = scmp.ne.s32.totalorder %s513, %s527
    %p529 = scmp.eq.s32.totalorder %s41, 0
    %p530 = por %p528, %p529
    %s532 = sadd.s32 %s531, 1
    %p535 = scmp.eq.s32.totalorder %s35, 1
    %p536 = scmp.ne.s32.totalorder %s531, %s533
    %p537 = scmp.eq.s32.totalorder %s35, 0
    %p538 = por %p536, %p537
    %p539 = scmp.ne.s32.totalorder %s531, %s533
    %p540 = scmp.eq.s32.totalorder %s40, 1
    %p541 = por %p539, %p540
    %p542 = scmp.ne.s32.totalorder %s533, %s534
    %p543 = scmp.eq.s32.totalorder %s40, 0
    %p544 = por %p542, %p543
    %p545 = scmp.ne.s32.totalorder %s533, %s534
    %p546 = scmp.eq.s32.totalorder %s41, 1
    %p547 = por %p545, %p546
    %p549 = scmp.ne.s32.totalorder %s534, %s548
    %p550 = scmp.eq.s32.totalorder %s41, 0
    %p551 = por %p549, %p550
    %s553 = sadd.s32 %s552, 1
    %p556 = scmp.eq.s32.totalorder %s35, 1
    %p557 = scmp.ne.s32.totalorder %s552, %s554
    %p558 = scmp.eq.s32.totalorder %s35, 0
    %p559 = por %p557, %p558
    %p560 = scmp.ne.s32.totalorder %s552, %s554
    %p561 = scmp.eq.s32.totalorder %s40, 1
    %p562 = por %p560, %p561
    %p563 = scmp.ne.s32.totalorder %s554, %s555
    %p564 = scmp.eq.s32.totalorder %s40, 0
    %p565 = por %p563, %p564
    %p566 = scmp.ne.s32.totalorder %s554, %s555
    %p567 = scmp.eq.s32.totalorder %s41, 1
    %p568 = por %p566, %p567
    %p570 = scmp.ne.s32.totalorder %s555, %s569
    %p571 = scmp.eq.s32.totalorder %s41, 0
    %p572 = por %p570, %p571
    %s574 = sadd.s32 %s573, 1
    %p577 = scmp.eq.s32.totalorder %s35, 1
    %p578 = scmp.ne.s32.totalorder %s573, %s575
    %p579 = scmp.eq.s32.totalorder %s35, 0
    %p580 = por %p578, %p579
    %p581 = scmp.ne.s32.totalorder %s573, %s575
    %p582 = scmp.eq.s32.totalorder %s40, 1
    %p583 = por %p581, %p582
    %p584 = scmp.ne.s32.totalorder %s575, %s576
    %p585 = scmp.eq.s32.totalorder %s40, 0
    %p586 = por %p584, %p585
    %p587 = scmp.ne.s32.totalorder %s575, %s576
    %p588 = scmp.eq.s32.totalorder %s41, 1
    %p589 = por %p587, %p588
    %p591 = scmp.ne.s32.totalorder %s576, %s590
    %p592 = scmp.eq.s32.totalorder %s41, 0
    %p593 = por %p591, %p592
    %s595 = sadd.s32 %s594, 1
    %p598 = scmp.eq.s32.totalorder %s35, 1
    %p599 = scmp.ne.s32.totalorder %s594, %s596
    %p600 = scmp.eq.s32.totalorder %s35, 0
    %p601 = por %p599, %p600
    %p602 = scmp.ne.s32.totalorder %s594, %s596
    %p603 = scmp.eq.s32.totalorder %s40, 1
    %p604 = por %p602, %p603
    %p605 = scmp.ne.s32.totalorder %s596, %s597
    %p606 = scmp.eq.s32.totalorder %s40, 0
    %p607 = por %p605, %p606
    %p608 = scmp.ne.s32.totalorder %s596, %s597
    %p609 = scmp.eq.s32.totalorder %s41, 1
    %p610 = por %p608, %p609
    %p612 = scmp.ne.s32.totalorder %s597, %s611
    %p613 = scmp.eq.s32.totalorder %s41, 0
    %p614 = por %p612, %p613
    %s615 = ssub.s32 %s35, %s42
    %p616 = scmp.eq.s32.totalorder %s615, 0
    %s618 = sadd.s32 %s617, 1
    %s619 = scalar_select %p616, %s617, %s618
    %p622 = pneg %p616
    %p623 = scmp.eq.s32.totalorder %s35, 1
    %p624 = por %p622, %p623
    %p625 = scmp.ne.s32.totalorder %s617, %s620
    %p626 = scmp.eq.s32.totalorder %s35, 0
    %p627 = por %p625, %p626
    %p628 = scmp.ne.s32.totalorder %s617, %s620
    %p629 = scmp.eq.s32.totalorder %s40, 1
    %p630 = por %p628, %p629
    %p631 = scmp.ne.s32.totalorder %s620, %s621
    %p632 = scmp.eq.s32.totalorder %s40, 0
    %p633 = por %p631, %p632
    %p634 = scmp.ne.s32.totalorder %s620, %s621
    %p635 = scmp.eq.s32.totalorder %s41, 1
    %p636 = por %p634, %p635
    %p638 = scmp.ne.s32.totalorder %s621, %s637
    %p639 = scmp.eq.s32.totalorder %s41, 0
    %p640 = por %p638, %p639
    %p641 = scmp.le.s32.totalorder 1, %s35
    %p642 = scmp.lt.s32.totalorder %s35, 3
    %p643 = pnand %p641, %p642
    %p644 = pneg %p643
    // Predicated region
    $region9: #{vit_classifier_forward.1} parent=5 // pred_check
      _
    $region10: #{vit_classifier_forward.1} parent=5 // pred_check_branch
      %646 = sbr.rel (%p643) target = $region12
    $region11: #{vit_classifier_forward.1} parent=5 // pred_region
      %s647 = ssub.s32 %s35, 1
      // Predicated region
      $region13: #{vit_classifier_forward.1} parent=11 // pred_check
        %p648 = pneg %p82
      $region14: #{vit_classifier_forward.1} parent=11 // pred_check_branch
        %650 = sbr.rel (%p648) target = $region16
      $region15: #{vit_classifier_forward.1} parent=11 // pred_region
        _
      $region16: #{vit_classifier_forward.1} parent=11 // pred_fallthru
        _
      // Predicated region
      $region17: #{vit_classifier_forward.1} parent=11 // pred_check
        %p651 = pneg %p103
      $region18: #{vit_classifier_forward.1} parent=11 // pred_check_branch
        %653 = sbr.rel (%p651) target = $region20
      $region19: #{vit_classifier_forward.1} parent=11 // pred_region
        _
      $region20: #{vit_classifier_forward.1} parent=11 // pred_fallthru
        _
      // Predicated region
      $region21: #{vit_classifier_forward.1} parent=11 // pred_check
        %p654 = pneg %p124
      $region22: #{vit_classifier_forward.1} parent=11 // pred_check_branch
        %656 = sbr.rel (%p654) target = $region24
      $region23: #{vit_classifier_forward.1} parent=11 // pred_region
        _
      $region24: #{vit_classifier_forward.1} parent=11 // pred_fallthru
        _
      // Predicated region
      $region25: #{vit_classifier_forward.1} parent=11 // pred_check
        %p657 = pneg %p145
      $region26: #{vit_classifier_forward.1} parent=11 // pred_check_branch
        %659 = sbr.rel (%p657) target = $region28
      $region27: #{vit_classifier_forward.1} parent=11 // pred_region
        _
      $region28: #{vit_classifier_forward.1} parent=11 // pred_fallthru
        _
      // Predicated region
      $region29: #{vit_classifier_forward.1} parent=11 // pred_check
        %p660 = pneg %p166
      $region30: #{vit_classifier_forward.1} parent=11 // pred_check_branch
        %662 = sbr.rel (%p660) target = $region32
      $region31: #{vit_classifier_forward.1} parent=11 // pred_region
        _
      $region32: #{vit_classifier_forward.1} parent=11 // pred_fallthru
        _
      // Predicated region
      $region33: #{vit_classifier_forward.1} parent=11 // pred_check
        %p663 = pneg %p187
      $region34: #{vit_classifier_forward.1} parent=11 // pred_check_branch
        %665 = sbr.rel (%p663) target = $region36
      $region35: #{vit_classifier_forward.1} parent=11 // pred_region
        _
      $region36: #{vit_classifier_forward.1} parent=11 // pred_fallthru
        _
      // Predicated region
      $region37: #{vit_classifier_forward.1} parent=11 // pred_check
        %p666 = pneg %p208
      $region38: #{vit_classifier_forward.1} parent=11 // pred_check_branch
        %668 = sbr.rel (%p666) target = $region40
      $region39: #{vit_classifier_forward.1} parent=11 // pred_region
        _
      $region40: #{vit_classifier_forward.1} parent=11 // pred_fallthru
        _
      // Predicated region
      $region41: #{vit_classifier_forward.1} parent=11 // pred_check
        %p669 = pneg %p229
      $region42: #{vit_classifier_forward.1} parent=11 // pred_check_branch
        %671 = sbr.rel (%p669) target = $region44
      $region43: #{vit_classifier_forward.1} parent=11 // pred_region
        _
      $region44: #{vit_classifier_forward.1} parent=11 // pred_fallthru
        _
      // Predicated region
      $region45: #{vit_classifier_forward.1} parent=11 // pred_check
        %p672 = pneg %p250
      $region46: #{vit_classifier_forward.1} parent=11 // pred_check_branch
        %674 = sbr.rel (%p672) target = $region48
      $region47: #{vit_classifier_forward.1} parent=11 // pred_region
        _
      $region48: #{vit_classifier_forward.1} parent=11 // pred_fallthru
        _
      // Predicated region
      $region49: #{vit_classifier_forward.1} parent=11 // pred_check
        %p675 = pneg %p271
      $region50: #{vit_classifier_forward.1} parent=11 // pred_check_branch
        %677 = sbr.rel (%p675) target = $region52
      $region51: #{vit_classifier_forward.1} parent=11 // pred_region
        _
      $region52: #{vit_classifier_forward.1} parent=11 // pred_fallthru
        _
      // Predicated region
      $region53: #{vit_classifier_forward.1} parent=11 // pred_check
        %p678 = pneg %p292
      $region54: #{vit_classifier_forward.1} parent=11 // pred_check_branch
        %680 = sbr.rel (%p678) target = $region56
      $region55: #{vit_classifier_forward.1} parent=11 // pred_region
        _
      $region56: #{vit_classifier_forward.1} parent=11 // pred_fallthru
        _
      // Predicated region
      $region57: #{vit_classifier_forward.1} parent=11 // pred_check
        %p681 = pneg %p313
      $region58: #{vit_classifier_forward.1} parent=11 // pred_check_branch
        %683 = sbr.rel (%p681) target = $region60
      $region59: #{vit_classifier_forward.1} parent=11 // pred_region
        _
      $region60: #{vit_classifier_forward.1} parent=11 // pred_fallthru
        _
      // Predicated region
      $region61: #{vit_classifier_forward.1} parent=11 // pred_check
        %p684 = pneg %p334
      $region62: #{vit_classifier_forward.1} parent=11 // pred_check_branch
        %686 = sbr.rel (%p684) target = $region64
      $region63: #{vit_classifier_forward.1} parent=11 // pred_region
        _
      $region64: #{vit_classifier_forward.1} parent=11 // pred_fallthru
        _
      // Predicated region
      $region65: #{vit_classifier_forward.1} parent=11 // pred_check
        %p687 = pneg %p355
      $region66: #{vit_classifier_forward.1} parent=11 // pred_check_branch
        %689 = sbr.rel (%p687) target = $region68
      $region67: #{vit_classifier_forward.1} parent=11 // pred_region
        _
      $region68: #{vit_classifier_forward.1} parent=11 // pred_fallthru
        _
      // Predicated region
      $region69: #{vit_classifier_forward.1} parent=11 // pred_check
        %p690 = pneg %p376
      $region70: #{vit_classifier_forward.1} parent=11 // pred_check_branch
        %692 = sbr.rel (%p690) target = $region72
      $region71: #{vit_classifier_forward.1} parent=11 // pred_region
        _
      $region72: #{vit_classifier_forward.1} parent=11 // pred_fallthru
        _
      // Predicated region
      $region73: #{vit_classifier_forward.1} parent=11 // pred_check
        %p693 = pneg %p397
      $region74: #{vit_classifier_forward.1} parent=11 // pred_check_branch
        %695 = sbr.rel (%p693) target = $region76
      $region75: #{vit_classifier_forward.1} parent=11 // pred_region
        _
      $region76: #{vit_classifier_forward.1} parent=11 // pred_fallthru
        _
      // Predicated region
      $region77: #{vit_classifier_forward.1} parent=11 // pred_check
        %p696 = pneg %p418
      $region78: #{vit_classifier_forward.1} parent=11 // pred_check_branch
        %698 = sbr.rel (%p696) target = $region80
      $region79: #{vit_classifier_forward.1} parent=11 // pred_region
        _
      $region80: #{vit_classifier_forward.1} parent=11 // pred_fallthru
        _
      // Predicated region
      $region81: #{vit_classifier_forward.1} parent=11 // pred_check
        %p699 = pneg %p439
      $region82: #{vit_classifier_forward.1} parent=11 // pred_check_branch
        %701 = sbr.rel (%p699) target = $region84
      $region83: #{vit_classifier_forward.1} parent=11 // pred_region
        _
      $region84: #{vit_classifier_forward.1} parent=11 // pred_fallthru
        _
      // Predicated region
      $region85: #{vit_classifier_forward.1} parent=11 // pred_check
        %p702 = pneg %p460
      $region86: #{vit_classifier_forward.1} parent=11 // pred_check_branch
        %704 = sbr.rel (%p702) target = $region88
      $region87: #{vit_classifier_forward.1} parent=11 // pred_region
        _
      $region88: #{vit_classifier_forward.1} parent=11 // pred_fallthru
        _
      // Predicated region
      $region89: #{vit_classifier_forward.1} parent=11 // pred_check
        %p705 = pneg %p481
      $region90: #{vit_classifier_forward.1} parent=11 // pred_check_branch
        %707 = sbr.rel (%p705) target = $region92
      $region91: #{vit_classifier_forward.1} parent=11 // pred_region
        _
      $region92: #{vit_classifier_forward.1} parent=11 // pred_fallthru
        _
      // Predicated region
      $region93: #{vit_classifier_forward.1} parent=11 // pred_check
        %p708 = pneg %p502
      $region94: #{vit_classifier_forward.1} parent=11 // pred_check_branch
        %710 = sbr.rel (%p708) target = $region96
      $region95: #{vit_classifier_forward.1} parent=11 // pred_region
        _
      $region96: #{vit_classifier_forward.1} parent=11 // pred_fallthru
        _
      // Predicated region
      $region97: #{vit_classifier_forward.1} parent=11 // pred_check
        %p711 = pneg %p523
      $region98: #{vit_classifier_forward.1} parent=11 // pred_check_branch
        %713 = sbr.rel (%p711) target = $region100
      $region99: #{vit_classifier_forward.1} parent=11 // pred_region
        _
      $region100: #{vit_classifier_forward.1} parent=11 // pred_fallthru
        _
      // Predicated region
      $region101: #{vit_classifier_forward.1} parent=11 // pred_check
        %p714 = pneg %p544
      $region102: #{vit_classifier_forward.1} parent=11 // pred_check_branch
        %716 = sbr.rel (%p714) target = $region104
      $region103: #{vit_classifier_forward.1} parent=11 // pred_region
        _
      $region104: #{vit_classifier_forward.1} parent=11 // pred_fallthru
        _
      // Predicated region
      $region105: #{vit_classifier_forward.1} parent=11 // pred_check
        %p717 = pneg %p565
      $region106: #{vit_classifier_forward.1} parent=11 // pred_check_branch
        %719 = sbr.rel (%p717) target = $region108
      $region107: #{vit_classifier_forward.1} parent=11 // pred_region
        _
      $region108: #{vit_classifier_forward.1} parent=11 // pred_fallthru
        _
      // Predicated region
      $region109: #{vit_classifier_forward.1} parent=11 // pred_check
        %p720 = pneg %p586
      $region110: #{vit_classifier_forward.1} parent=11 // pred_check_branch
        %722 = sbr.rel (%p720) target = $region112
      $region111: #{vit_classifier_forward.1} parent=11 // pred_region
        _
      $region112: #{vit_classifier_forward.1} parent=11 // pred_fallthru
        _
      // Predicated region
      $region113: #{vit_classifier_forward.1} parent=11 // pred_check
        %p723 = pneg %p607
      $region114: #{vit_classifier_forward.1} parent=11 // pred_check_branch
        %725 = sbr.rel (%p723) target = $region116
      $region115: #{vit_classifier_forward.1} parent=11 // pred_region
        _
      $region116: #{vit_classifier_forward.1} parent=11 // pred_fallthru
        _
    $region12: #{vit_classifier_forward.1} parent=5 // pred_fallthru
      _
    %p726 = scmp.lt.s32.totalorder %s35, 2
    // Predicated region
    $region117: #{vit_classifier_forward.1} parent=5 // pred_check
      %p727 = pneg %p726
    $region118: #{vit_classifier_forward.1} parent=5 // pred_check_branch
      %729 = sbr.rel (%p727) target = $region120
    $region119: #{vit_classifier_forward.1} parent=5 // pred_region
      // Predicated region
      $region121: #{vit_classifier_forward.1} parent=119 // pred_check
        %p730 = pneg %p55
      $region122: #{vit_classifier_forward.1} parent=119 // pred_check_branch
        %732 = sbr.rel (%p730) target = $region124
      $region123: #{vit_classifier_forward.1} parent=119 // pred_region
        %p733 = scmp.lt.s32.totalorder %s35, 1
        %s734 = scalar_select %p733, %s35, 1
        %s735 = smul.addr %s734, 18
        %s736 = smul.addr %s735, 4
        %s737 = scalar_lea.vmem %s0, %s736
      $region124: #{vit_classifier_forward.1} parent=119 // pred_fallthru
        _
    $region120: #{vit_classifier_forward.1} parent=5 // pred_fallthru
      _
    %p738 = scmp.le.s32.totalorder 1, %s35
    %p739 = scmp.lt.s32.totalorder %s35, 3
    %p740 = pnand %p738, %p739
    %p741 = pneg %p740
    // Predicated region
    $region125: #{vit_classifier_forward.1} parent=5 // pred_check
      _
    $region126: #{vit_classifier_forward.1} parent=5 // pred_check_branch
      %743 = sbr.rel (%p740) target = $region128
    $region127: #{vit_classifier_forward.1} parent=5 // pred_region
      %s744 = ssub.s32 %s35, 1
      %p745 = scmp.lt.s32.totalorder %s40, 1
      %s746 = scalar_select %p745, %s40, 1
      %s747 = smul.addr %s746, 18
      %s748 = smul.addr %s747, 4
      %s749 = scalar_lea.vmem %s0, %s748
      %p750 = pneg %p61
      %p751 = pneg %p58
      %p752 = pneg %p82
      %p753 = pneg %p79
      %p754 = pneg %p103
      %p755 = pneg %p100
      %p756 = pneg %p124
      %p757 = pneg %p121
      %p758 = pneg %p145
      %p759 = pneg %p142
      %p760 = pneg %p166
      %p761 = pneg %p163
      %p762 = pneg %p187
      %p763 = pneg %p184
      %p764 = pneg %p208
      %p765 = pneg %p205
      %p766 = pneg %p229
      %p767 = pneg %p226
      %p768 = pneg %p250
      %p769 = pneg %p247
      %p770 = pneg %p271
      %p771 = pneg %p268
      %p772 = pneg %p292
      %p773 = pneg %p289
      %p774 = pneg %p313
      %p775 = pneg %p310
      %p776 = pneg %p334
      %p777 = pneg %p331
      %p778 = pneg %p355
      %p779 = pneg %p352
      %p780 = pneg %p376
      %p781 = pneg %p373
      %p782 = pneg %p397
      %p783 = pneg %p394
      %p784 = pneg %p418
      %p785 = pneg %p415
      %p786 = pneg %p439
      %p787 = pneg %p436
      %p788 = pneg %p460
      %p789 = pneg %p457
      %p790 = pneg %p481
      %p791 = pneg %p478
      %p792 = pneg %p502
      %p793 = pneg %p499
      %p794 = pneg %p523
      %p795 = pneg %p520
      %p796 = pneg %p544
      %p797 = pneg %p541
      %p798 = pneg %p565
      %p799 = pneg %p562
      %p800 = pneg %p586
      %p801 = pneg %p583
      %p802 = pneg %p607
      %p803 = pneg %p604
      %p804 = pneg %p633
      %p805 = pneg %p630
      %p806 = scmp.lt.s32.totalorder %s40, 1
      %s807 = scalar_select %p806, %s40, 1
      %s808 = smul.addr %s807, 3
      %s809 = smul.addr %s808, 8
      %s810 = scalar_lea.vmem %s27, %s809
      %p811 = scmp.lt.s32.totalorder %s40, 1
      %s812 = scalar_select %p811, %s40, 1
      %s813 = smul.addr %s812, 18
      %s814 = smul.addr %s813, 4
      %s815 = scalar_lea.vmem %s0, %s814
      %p816 = scmp.lt.s32.totalorder %s40, 1
      %s817 = scalar_select %p816, %s40, 1
      %s818 = smul.addr %s817, 3
      %s819 = smul.addr %s818, 8
      %s820 = scalar_lea.vmem %s27, %s819
      %v822 = vld [vmem:[%s815] sm:$0xff]
      %v823 = vld [vmem:[%s815 + $0x8] sm:$0xff]
      %v824 = vld [vmem:[%s815 + $0x10] sm:$0xff]
      %v825 = vld [vmem:[%s815 + $0x18] sm:$0xff]
      %v826 = vld [vmem:[%s815 + $0x20] sm:$0xff]
      %v827 = vld [vmem:[%s815 + $0x28] sm:$0xff]
      %v828 = vld [vmem:[%s815 + $0x30] sm:$0x33]
      %v829 = vld [vmem:[%s815 + $0x38] sm:$0x33]
      %v830 = vld [vmem:[%s815 + $0x40] sm:$0x33]
      %v831 = vld [vmem:[%s4] sm:$0xf]
      %v832 = vld [vmem:[%s4 + $0x4] sm:$0xf]
      %v833 = vld [vmem:[%s4 + $0x8] sm:$0xf]
      %v834 = vld [vmem:[%s4 + $0xc] sm:$0xf]
      %v835 = vld [vmem:[%s4 + $0x10] sm:$0xf]
      %v836 = vld [vmem:[%s4 + $0x14] sm:$0xf]
      %v837 = vld [vmem:[%s4 + $0x18] sm:$0xf]
      %v838 = vld [vmem:[%s4 + $0x1c] sm:$0xf]
      %v839 = vld [vmem:[%s4 + $0x20] sm:$0xf]
      %v840 = vld [vmem:[%s4 + $0x24] sm:$0xf]
      %v841 = vld [vmem:[%s4 + $0x28] sm:$0xf]
      %v842 = vld [vmem:[%s4 + $0x2c] sm:$0xf]
      %v843 = vld [vmem:[%s4 + $0x30] sm:$0xf]
      %v844 = vld [vmem:[%s4 + $0x34] sm:$0xf]
      %v845 = vld [vmem:[%s4 + $0x38] sm:$0xf]
      %v846 = vld [vmem:[%s4 + $0x3c] sm:$0xf]
      %v847 = vld [vmem:[%s4 + $0x40] sm:$0xf]
      %v848 = vld [vmem:[%s4 + $0x44] sm:$0xf]
      %v849 = vld [vmem:[%s4 + $0x48] sm:$0xf]
      %v850 = vld [vmem:[%s4 + $0x4c] sm:$0xf]
      %v851 = vld [vmem:[%s4 + $0x50] sm:$0xf]
      %v852 = vld [vmem:[%s4 + $0x54] sm:$0xf]
      %v853 = vld [vmem:[%s4 + $0x58] sm:$0xf]
      %v854 = vld [vmem:[%s4 + $0x5c] sm:$0xf]
      %v855 = vld [vmem:[%s4 + $0x60] sm:$0xf]
      %v856 = vld [vmem:[%s4 + $0x64] sm:$0xf]
      %v857 = vld [vmem:[%s4 + $0x68] sm:$0xf]
      %v858 = vld [vmem:[%s4 + $0x6c] sm:$0xf]
      %v859 = vld [vmem:[%s4 + $0x70] sm:$0xf]
      %v860 = vld [vmem:[%s4 + $0x74] sm:$0xf]
      %v861 = vld [vmem:[%s4 + $0x78] sm:$0xf]
      %v862 = vld [vmem:[%s4 + $0x7c] sm:$0xf]
      %v863 = vld [vmem:[%s4 + $0x80] sm:$0xf]
      %v864 = vld [vmem:[%s4 + $0x84] sm:$0xf]
      %v865 = vld [vmem:[%s4 + $0x88] sm:$0xf]
      %v866 = vld [vmem:[%s4 + $0x8c] sm:$0xf]
      %v867 = vld [vmem:[%s4 + $0x90] sm:$0xf]
      %v868 = vld [vmem:[%s4 + $0x94] sm:$0xf]
      %v869 = vld [vmem:[%s4 + $0x98] sm:$0xf]
      %v870 = vld [vmem:[%s4 + $0x9c] sm:$0xf]
      %v871 = vld [vmem:[%s4 + $0xa0] sm:$0xf]
      %v872 = vld [vmem:[%s4 + $0xa4] sm:$0xf]
      %v873 = vld [vmem:[%s4 + $0xa8] sm:$0xf]
      %v874 = vld [vmem:[%s4 + $0xac] sm:$0xf]
      %v875 = vld [vmem:[%s4 + $0xb0] sm:$0xf]
      %v876 = vld [vmem:[%s4 + $0xb4] sm:$0xf]
      %v877 = vld [vmem:[%s4 + $0xb8] sm:$0xf]
      %v878 = vld [vmem:[%s4 + $0xbc] sm:$0xf]
      %v879 = vld [vmem:[%s4 + $0xc0] sm:$0xf]
      %v880 = vld [vmem:[%s4 + $0xc4] sm:$0xf]
      %v881 = vld [vmem:[%s4 + $0xc8] sm:$0xf]
      %v882 = vld [vmem:[%s4 + $0xcc] sm:$0xf]
      %v883 = vld [vmem:[%s4 + $0xd0] sm:$0xf]
      %v884 = vld [vmem:[%s4 + $0xd4] sm:$0xf]
      %v885 = vld [vmem:[%s4 + $0xd8] sm:$0xf]
      %v886 = vld [vmem:[%s4 + $0xdc] sm:$0xf]
      %v887 = vld [vmem:[%s4 + $0xe0] sm:$0xf]
      %v888 = vld [vmem:[%s4 + $0xe4] sm:$0xf]
      %v889 = vld [vmem:[%s4 + $0xe8] sm:$0xf]
      %v890 = vld [vmem:[%s4 + $0xec] sm:$0xf]
      %v891 = vld [vmem:[%s4 + $0xf0] sm:$0xf]
      %v892 = vld [vmem:[%s4 + $0xf4] sm:$0xf]
      %v893 = vld [vmem:[%s4 + $0xf8] sm:$0xf]
      %v894 = vld [vmem:[%s4 + $0xfc] sm:$0xf]
      %v895 = vld [vmem:[%s4 + $0x100] sm:$0xf]
      %v896 = vld [vmem:[%s4 + $0x104] sm:$0xf]
      %v897 = vld [vmem:[%s4 + $0x108] sm:$0xf]
      %v898 = vld [vmem:[%s4 + $0x10c] sm:$0xf]
      %v899 = vld [vmem:[%s4 + $0x110] sm:$0xf]
      %v900 = vld [vmem:[%s4 + $0x114] sm:$0xf]
      %v901 = vld [vmem:[%s4 + $0x118] sm:$0xf]
      %v902 = vld [vmem:[%s4 + $0x11c] sm:$0xf]
      %v903 = vld [vmem:[%s4 + $0x120] sm:$0xf]
      %v904 = vld [vmem:[%s4 + $0x124] sm:$0xf]
      %v905 = vld [vmem:[%s4 + $0x128] sm:$0xf]
      %v906 = vld [vmem:[%s4 + $0x12c] sm:$0xf]
      %v907 = vld [vmem:[%s4 + $0x130] sm:$0xf]
      %v908 = vld [vmem:[%s4 + $0x134] sm:$0xf]
      %v909 = vld [vmem:[%s4 + $0x138] sm:$0xf]
      %v910 = vld [vmem:[%s4 + $0x13c] sm:$0xf]
      %v911 = vld [vmem:[%s4 + $0x140] sm:$0xf]
      %v912 = vld [vmem:[%s4 + $0x144] sm:$0xf]
      %v913 = vld [vmem:[%s4 + $0x148] sm:$0xf]
      %v914 = vld [vmem:[%s4 + $0x14c] sm:$0xf]
      %v915 = vld [vmem:[%s4 + $0x150] sm:$0xf]
      %v916 = vld [vmem:[%s4 + $0x154] sm:$0xf]
      %v917 = vld [vmem:[%s4 + $0x158] sm:$0xf]
      %v918 = vld [vmem:[%s4 + $0x15c] sm:$0xf]
      %v919 = vld [vmem:[%s4 + $0x160] sm:$0xf]
      %v920 = vld [vmem:[%s4 + $0x164] sm:$0xf]
      %v921 = vld [vmem:[%s4 + $0x168] sm:$0xf]
      %v922 = vld [vmem:[%s4 + $0x16c] sm:$0xf]
      %v923 = vld [vmem:[%s4 + $0x170] sm:$0xf]
      %v924 = vld [vmem:[%s4 + $0x174] sm:$0xf]
      %v925 = vld [vmem:[%s4 + $0x178] sm:$0xf]
      %v926 = vld [vmem:[%s4 + $0x17c] sm:$0xf]
      %v927 = vld [vmem:[%s1] sm:$0xff]
      %v928 = vld [vmem:[%s1 + $0x8] sm:$0xff]
      %v929 = vld [vmem:[%s1 + $0x10] sm:$0xf]
      %v939 = vunpack.c.l.b16 %v822
      %v940 = vunpack.c.h.b16 %v822
      %v941 = vunpack.c.l.b16 %v823
      %v942 = vunpack.c.h.b16 %v823
      %v943 = vunpack.c.l.b16 %v824
      %v944 = vunpack.c.h.b16 %v824
      %v945 = vunpack.c.l.b16 %v825
      %v946 = vunpack.c.h.b16 %v825
      %v947 = vunpack.c.l.b16 %v826
      %v948 = vunpack.c.h.b16 %v826
      %v949 = vunpack.c.l.b16 %v827
      %v950 = vunpack.c.h.b16 %v827
      %v951 = vunpack.c.l.b16 %v828
      %v952 = vunpack.c.h.b16 %v828
      %v953 = vunpack.c.l.b16 %v829
      %v954 = vunpack.c.h.b16 %v829
      %v955 = vunpack.c.l.b16 %v830
      %v956 = vunpack.c.h.b16 %v830
      %v957 = vpack.c.b16 %v945, %v939
      %v958 = vpack.c.b16 %v946, %v940
      %v959 = vpack.c.b16 %v947, %v941
      %v960 = vpack.c.b16 %v948, %v942
      %v961 = vpack.c.b16 %v949, %v943
      %v962 = vpack.c.b16 %v950, %v944
      %v963 = vpack.c.b16 %v951, %v951
      %v964 = vpack.c.b16 %v952, %v952
      %v965 = vpack.c.b16 %v953, %v953
      %v966 = vpack.c.b16 %v954, %v954
      %v967 = vpack.c.b16 %v955, %v955
      %v968 = vpack.c.b16 %v956, %v956
      %v1077 = vunpack.c.l.b16 %v831
      %v1078 = vunpack.c.l.b16 %v832
      %v1079 = vunpack.c.l.b16 %v833
      %v1080 = vunpack.c.l.b16 %v834
      %v1081 = vunpack.c.l.b16 %v835
      %v1082 = vunpack.c.l.b16 %v836
      %v1083 = vunpack.c.l.b16 %v837
      %v1084 = vunpack.c.l.b16 %v838
      %v1085 = vunpack.c.l.b16 %v839
      %v1086 = vunpack.c.l.b16 %v840
      %v1087 = vunpack.c.l.b16 %v841
      %v1088 = vunpack.c.l.b16 %v842
      %v1089 = vunpack.c.l.b16 %v843
      %v1090 = vunpack.c.l.b16 %v844
      %v1091 = vunpack.c.l.b16 %v845
      %v1092 = vunpack.c.l.b16 %v846
      %v1093 = vunpack.c.l.b16 %v847
      %v1094 = vunpack.c.l.b16 %v848
      %v1095 = vunpack.c.l.b16 %v849
      %v1096 = vunpack.c.l.b16 %v850
      %v1097 = vunpack.c.l.b16 %v851
      %v1098 = vunpack.c.l.b16 %v852
      %v1099 = vunpack.c.l.b16 %v853
      %v1100 = vunpack.c.l.b16 %v854
      %v1101 = vunpack.c.l.b16 %v855
      %v1102 = vunpack.c.l.b16 %v856
      %v1103 = vunpack.c.l.b16 %v857
      %v1104 = vunpack.c.l.b16 %v858
      %v1105 = vunpack.c.l.b16 %v859
      %v1106 = vunpack.c.l.b16 %v860
      %v1107 = vunpack.c.l.b16 %v861
      %v1108 = vunpack.c.l.b16 %v862
      %v1109 = vunpack.c.l.b16 %v863
      %v1110 = vunpack.c.l.b16 %v864
      %v1111 = vunpack.c.l.b16 %v865
      %v1112 = vunpack.c.l.b16 %v866
      %v1113 = vunpack.c.l.b16 %v867
      %v1114 = vunpack.c.l.b16 %v868
      %v1115 = vunpack.c.l.b16 %v869
      %v1116 = vunpack.c.l.b16 %v870
      %v1117 = vunpack.c.l.b16 %v871
      %v1118 = vunpack.c.l.b16 %v872
      %v1119 = vunpack.c.l.b16 %v873
      %v1120 = vunpack.c.l.b16 %v874
      %v1121 = vunpack.c.l.b16 %v875
      %v1122 = vunpack.c.l.b16 %v876
      %v1123 = vunpack.c.l.b16 %v877
      %v1124 = vunpack.c.l.b16 %v878
      %v1125 = vunpack.c.l.b16 %v879
      %v1126 = vunpack.c.l.b16 %v880
      %v1127 = vunpack.c.l.b16 %v881
      %v1128 = vunpack.c.l.b16 %v882
      %v1129 = vunpack.c.l.b16 %v883
      %v1130 = vunpack.c.l.b16 %v884
      %v1131 = vunpack.c.l.b16 %v885
      %v1132 = vunpack.c.l.b16 %v886
      %v1133 = vunpack.c.l.b16 %v887
      %v1134 = vunpack.c.l.b16 %v888
      %v1135 = vunpack.c.l.b16 %v889
      %v1136 = vunpack.c.l.b16 %v890
      %v1137 = vunpack.c.l.b16 %v891
      %v1138 = vunpack.c.l.b16 %v892
      %v1139 = vunpack.c.l.b16 %v893
      %v1140 = vunpack.c.l.b16 %v894
      %v1141 = vunpack.c.l.b16 %v895
      %v1142 = vunpack.c.l.b16 %v896
      %v1143 = vunpack.c.l.b16 %v897
      %v1144 = vunpack.c.l.b16 %v898
      %v1145 = vunpack.c.l.b16 %v899
      %v1146 = vunpack.c.l.b16 %v900
      %v1147 = vunpack.c.l.b16 %v901
      %v1148 = vunpack.c.l.b16 %v902
      %v1149 = vunpack.c.l.b16 %v903
      %v1150 = vunpack.c.l.b16 %v904
      %v1151 = vunpack.c.l.b16 %v905
      %v1152 = vunpack.c.l.b16 %v906
      %v1153 = vunpack.c.l.b16 %v907
      %v1154 = vunpack.c.l.b16 %v908
      %v1155 = vunpack.c.l.b16 %v909
      %v1156 = vunpack.c.l.b16 %v910
      %v1157 = vunpack.c.l.b16 %v911
      %v1158 = vunpack.c.l.b16 %v912
      %v1159 = vunpack.c.l.b16 %v913
      %v1160 = vunpack.c.l.b16 %v914
      %v1161 = vunpack.c.l.b16 %v915
      %v1162 = vunpack.c.l.b16 %v916
      %v1163 = vunpack.c.l.b16 %v917
      %v1164 = vunpack.c.l.b16 %v918
      %v1165 = vunpack.c.l.b16 %v919
      %v1166 = vunpack.c.l.b16 %v920
      %v1167 = vunpack.c.l.b16 %v921
      %v1168 = vunpack.c.l.b16 %v922
      %v1169 = vunpack.c.l.b16 %v923
      %v1170 = vunpack.c.l.b16 %v924
      %v1171 = vunpack.c.l.b16 %v925
      %v1172 = vunpack.c.l.b16 %v926
      %v1173 = vpack.c.b16 %v1078, %v1077
      %v1174 = vpack.c.b16 %v1080, %v1079
      %v1175 = vpack.c.b16 %v1082, %v1081
      %v1176 = vpack.c.b16 %v1084, %v1083
      %v1177 = vpack.c.b16 %v1086, %v1085
      %v1178 = vpack.c.b16 %v1088, %v1087
      %v1179 = vpack.c.b16 %v1090, %v1089
      %v1180 = vpack.c.b16 %v1092, %v1091
      %v1181 = vpack.c.b16 %v1094, %v1093
      %v1182 = vpack.c.b16 %v1096, %v1095
      %v1183 = vpack.c.b16 %v1098, %v1097
      %v1184 = vpack.c.b16 %v1100, %v1099
      %v1185 = vpack.c.b16 %v1102, %v1101
      %v1186 = vpack.c.b16 %v1104, %v1103
      %v1187 = vpack.c.b16 %v1106, %v1105
      %v1188 = vpack.c.b16 %v1108, %v1107
      %v1189 = vpack.c.b16 %v1110, %v1109
      %v1190 = vpack.c.b16 %v1112, %v1111
      %v1191 = vpack.c.b16 %v1114, %v1113
      %v1192 = vpack.c.b16 %v1116, %v1115
      %v1193 = vpack.c.b16 %v1118, %v1117
      %v1194 = vpack.c.b16 %v1120, %v1119
      %v1195 = vpack.c.b16 %v1122, %v1121
      %v1196 = vpack.c.b16 %v1124, %v1123
      %v1197 = vpack.c.b16 %v1126, %v1125
      %v1198 = vpack.c.b16 %v1128, %v1127
      %v1199 = vpack.c.b16 %v1130, %v1129
      %v1200 = vpack.c.b16 %v1132, %v1131
      %v1201 = vpack.c.b16 %v1134, %v1133
      %v1202 = vpack.c.b16 %v1136, %v1135
      %v1203 = vpack.c.b16 %v1138, %v1137
      %v1204 = vpack.c.b16 %v1140, %v1139
      %v1205 = vpack.c.b16 %v1142, %v1141
      %v1206 = vpack.c.b16 %v1144, %v1143
      %v1207 = vpack.c.b16 %v1146, %v1145
      %v1208 = vpack.c.b16 %v1148, %v1147
      %v1209 = vpack.c.b16 %v1150, %v1149
      %v1210 = vpack.c.b16 %v1152, %v1151
      %v1211 = vpack.c.b16 %v1154, %v1153
      %v1212 = vpack.c.b16 %v1156, %v1155
      %v1213 = vpack.c.b16 %v1158, %v1157
      %v1214 = vpack.c.b16 %v1160, %v1159
      %v1215 = vpack.c.b16 %v1162, %v1161
      %v1216 = vpack.c.b16 %v1164, %v1163
      %v1217 = vpack.c.b16 %v1166, %v1165
      %v1218 = vpack.c.b16 %v1168, %v1167
      %v1219 = vpack.c.b16 %v1170, %v1169
      %v1220 = vpack.c.b16 %v1172, %v1171
      %1269 = vmatprep.subr.bf16.mxu0 0
      %1270 = vmatpush1.bf16.msra.mxu0 %v1173
      %1271 = vmatprep.subr.bf16.mxu0 0
      %1272 = vmatpush1.bf16.msra.mxu0 %v1174
      %1273 = vmatprep.subr.bf16.mxu0 0
      %1274 = vmatpush1.bf16.msra.mxu0 %v1175
      %1275 = vmatprep.subr.bf16.mxu0 0
      %1276 = vmatpush1.bf16.msra.mxu0 %v1176
      %1277 = vmatprep.subr.bf16.mxu0 0
      %1278 = vmatpush1.bf16.msra.mxu0 %v1177
      %1279 = vmatprep.subr.bf16.mxu0 0
      %1280 = vmatpush1.bf16.msra.mxu0 %v1178
      %1281 = vmatprep.subr.bf16.mxu0 0
      %1282 = vmatpush1.bf16.msra.mxu0 %v1179
      %1283 = vmatprep.subr.bf16.mxu0 0
      %1284 = vmatpush1.bf16.msra.mxu0 %v1180
      %1285 = vmatprep.subr.bf16.mxu0 0
      %1286 = vmatpush1.bf16.msra.mxu0 %v1181
      %1287 = vmatprep.subr.bf16.mxu0 0
      %1288 = vmatpush1.bf16.msra.mxu0 %v1182
      %1289 = vmatprep.subr.bf16.mxu0 0
      %1290 = vmatpush1.bf16.msra.mxu0 %v1183
      %1291 = vmatprep.subr.bf16.mxu0 0
      %1292 = vmatpush1.bf16.msra.mxu0 %v1184
      %1293 = vmatprep.subr.bf16.mxu0 0
      %1294 = vmatpush1.bf16.msra.mxu0 %v1185
      %1295 = vmatprep.subr.bf16.mxu0 0
      %1296 = vmatpush1.bf16.msra.mxu0 %v1186
      %1297 = vmatprep.subr.bf16.mxu0 0
      %1298 = vmatpush1.bf16.msra.mxu0 %v1187
      %1299 = vmatprep.subr.bf16.mxu0 0
      %1300 = vmatpush1.bf16.msra.mxu0 %v1188
      %1301 = vmatprep.mubr.bf16.mxu0 %v958
      %1302 = vmatmul.mubr.bf16.gmra.mrb[0].mxu0 %v957
      %v1303 = vpop.f32.mrb[0].mxu0
      %v1304 = vadd.f32 %v927, %v1303
      %v1305 = vpop.f32.mrb[0].mxu0
      %v1306 = vpop.f32.mrb[0].mxu0
      %v1307 = vadd.f32 %v928, %v1306
      %v1308 = vpop.f32.mrb[0].mxu0
      %1309 = vmatprep.mubr.bf16.mxu0 %v964
      %1310 = vmatmul.mubr.bf16.gmra.mrb[0].mxu0 %v963
      %v1311 = vpop.f32.mrb[0].mxu0
      %v1312 = vadd.f32 %v929, %v1311
      %v1313 = vpop.f32.mrb[0].mxu0
      %v1314 = vpop.f32.mrb[0].mxu0
      %v1315 = vpop.f32.mrb[0].mxu0
      %1316 = vdwg.mxu0
      %1317 = vmatprep.subr.bf16.mxu0 0
      %1318 = vmatpush1.bf16.msra.mxu0 %v1189
      %1319 = vmatprep.subr.bf16.mxu0 0
      %1320 = vmatpush1.bf16.msra.mxu0 %v1190
      %1321 = vmatprep.subr.bf16.mxu0 0
      %1322 = vmatpush1.bf16.msra.mxu0 %v1191
      %1323 = vmatprep.subr.bf16.mxu0 0
      %1324 = vmatpush1.bf16.msra.mxu0 %v1192
      %1325 = vmatprep.subr.bf16.mxu0 0
      %1326 = vmatpush1.bf16.msra.mxu0 %v1193
      %1327 = vmatprep.subr.bf16.mxu0 0
      %1328 = vmatpush1.bf16.msra.mxu0 %v1194
      %1329 = vmatprep.subr.bf16.mxu0 0
      %1330 = vmatpush1.bf16.msra.mxu0 %v1195
      %1331 = vmatprep.subr.bf16.mxu0 0
      %1332 = vmatpush1.bf16.msra.mxu0 %v1196
      %1333 = vmatprep.subr.bf16.mxu0 0
      %1334 = vmatpush1.bf16.msra.mxu0 %v1197
      %1335 = vmatprep.subr.bf16.mxu0 0
      %1336 = vmatpush1.bf16.msra.mxu0 %v1198
      %1337 = vmatprep.subr.bf16.mxu0 0
      %1338 = vmatpush1.bf16.msra.mxu0 %v1199
      %1339 = vmatprep.subr.bf16.mxu0 0
      %1340 = vmatpush1.bf16.msra.mxu0 %v1200
      %1341 = vmatprep.subr.bf16.mxu0 0
      %1342 = vmatpush1.bf16.msra.mxu0 %v1201
      %1343 = vmatprep.subr.bf16.mxu0 0
      %1344 = vmatpush1.bf16.msra.mxu0 %v1202
      %1345 = vmatprep.subr.bf16.mxu0 0
      %1346 = vmatpush1.bf16.msra.mxu0 %v1203
      %1347 = vmatprep.subr.bf16.mxu0 0
      %1348 = vmatpush1.bf16.msra.mxu0 %v1204
      %1349 = vmatprep.mubr.bf16.mxu0 %v960
      %1350 = vmatmul.mubr.bf16.gmra.mrb[0].mxu0 %v959
      %v1351 = vpop.f32.mrb[0].mxu0
      %v1352 = vadd.f32 %v1304, %v1351
      %v1353 = vpop.f32.mrb[0].mxu0
      %v1354 = vpop.f32.mrb[0].mxu0
      %v1355 = vadd.f32 %v1307, %v1354
      %v1356 = vpop.f32.mrb[0].mxu0
      %1357 = vmatprep.mubr.bf16.mxu0 %v966
      %1358 = vmatmul.mubr.bf16.gmra.mrb[0].mxu0 %v965
      %v1359 = vpop.f32.mrb[0].mxu0
      %v1360 = vadd.f32 %v1312, %v1359
      %v1361 = vpop.f32.mrb[0].mxu0
      %v1362 = vpop.f32.mrb[0].mxu0
      %v1363 = vpop.f32.mrb[0].mxu0
      %1364 = vdwg.mxu0
      %1365 = vmatprep.subr.bf16.mxu0 0
      %1366 = vmatpush1.bf16.msra.mxu0 %v1205
      %1367 = vmatprep.subr.bf16.mxu0 0
      %1368 = vmatpush1.bf16.msra.mxu0 %v1206
      %1369 = vmatprep.subr.bf16.mxu0 0
      %1370 = vmatpush1.bf16.msra.mxu0 %v1207
      %1371 = vmatprep.subr.bf16.mxu0 0
      %1372 = vmatpush1.bf16.msra.mxu0 %v1208
      %1373 = vmatprep.subr.bf16.mxu0 0
      %1374 = vmatpush1.bf16.msra.mxu0 %v1209
      %1375 = vmatprep.subr.bf16.mxu0 0
      %1376 = vmatpush1.bf16.msra.mxu0 %v1210
      %1377 = vmatprep.subr.bf16.mxu0 0
      %1378 = vmatpush1.bf16.msra.mxu0 %v1211
      %1379 = vmatprep.subr.bf16.mxu0 0
      %1380 = vmatpush1.bf16.msra.mxu0 %v1212
      %1381 = vmatprep.subr.bf16.mxu0 0
      %1382 = vmatpush1.bf16.msra.mxu0 %v1213
      %1383 = vmatprep.subr.bf16.mxu0 0
      %1384 = vmatpush1.bf16.msra.mxu0 %v1214
      %1385 = vmatprep.subr.bf16.mxu0 0
      %1386 = vmatpush1.bf16.msra.mxu0 %v1215
      %1387 = vmatprep.subr.bf16.mxu0 0
      %1388 = vmatpush1.bf16.msra.mxu0 %v1216
      %1389 = vmatprep.subr.bf16.mxu0 0
      %1390 = vmatpush1.bf16.msra.mxu0 %v1217
      %1391 = vmatprep.subr.bf16.mxu0 0
      %1392 = vmatpush1.bf16.msra.mxu0 %v1218
      %1393 = vmatprep.subr.bf16.mxu0 0
      %1394 = vmatpush1.bf16.msra.mxu0 %v1219
      %1395 = vmatprep.subr.bf16.mxu0 0
      %1396 = vmatpush1.bf16.msra.mxu0 %v1220
      %1397 = vmatprep.mubr.bf16.mxu0 %v962
      %1398 = vmatmul.mubr.bf16.gmra.mrb[0].mxu0 %v961
      %v1399 = vpop.f32.mrb[0].mxu0
      %v1400 = vadd.f32 %v1352, %v1399
      %v1401 = vpop.f32.mrb[0].mxu0
      %v1402 = vpop.f32.mrb[0].mxu0
      %v1403 = vadd.f32 %v1355, %v1402
      %v1404 = vpop.f32.mrb[0].mxu0
      %1405 = vmatprep.mubr.bf16.mxu0 %v968
      %1406 = vmatmul.mubr.bf16.gmra.mrb[0].mxu0 %v967
      %v1407 = vpop.f32.mrb[0].mxu0
      %v1408 = vadd.f32 %v1360, %v1407
      %v1409 = vpop.f32.mrb[0].mxu0
      %v1410 = vpop.f32.mrb[0].mxu0
      %v1411 = vpop.f32.mrb[0].mxu0
      %1412 = vdwg.mxu0
      %v1413 = vld [vmem:[%s2] sm:$0xff]
      %v1414 = vld [vmem:[%s2 + $0x8] sm:$0xff]
      %v1415 = vld [vmem:[%s2 + $0x10] sm:$0xf]
      %v1416 = vld [vmem:[%s5] sm:$0x1]
      %v1417 = vld [vmem:[%s6] sm:$0x1]
      %vm1418 = vcmask 523264
      %v1419 = vsel %vm1418, %v1400, 0.0
      %1420 = vadd.xlane.f32.xlu0 %v1419
      %v1421 = vpop.xlane.xlu0 %1420
      %v1422 = vsel %vm1418, %v1403, 0.0
      %1423 = vadd.xlane.f32.xlu0 %v1422
      %v1424 = vpop.xlane.xlu0 %1423
      %vm1425 = vcmask 519168
      %v1426 = vsel %vm1425, %v1408, 0.0
      %1427 = vadd.xlane.f32.xlu0 %v1426
      %v1428 = vpop.xlane.xlu0 %1427
      %v1429 = vrcp.pop 64.0
      %v1430 = vmul.f32 %v1421, %v1429
      %v1431 = vmul.f32 %v1424, %v1429
      %v1432 = vmul.f32 %v1428, %v1429
      %v1433 = vsub.f32 %v1400, %v1430
      %v1434 = vsub.f32 %v1403, %v1431
      %v1435 = vsub.f32 %v1408, %v1432
      %v1436 = vmul.f32 %v1433, %v1433
      %v1437 = vmul.f32 %v1434, %v1434
      %v1438 = vmul.f32 %v1435, %v1435
      %v1439 = vsel %vm1418, %v1436, 0.0
      %1440 = vadd.xlane.f32.xlu0 %v1439
      %v1441 = vpop.xlane.xlu0 %1440
      %v1442 = vsel %vm1418, %v1437, 0.0
      %1443 = vadd.xlane.f32.xlu0 %v1442
      %v1444 = vpop.xlane.xlu0 %1443
      %v1445 = vsel %vm1425, %v1438, 0.0
      %1446 = vadd.xlane.f32.xlu0 %v1445
      %v1447 = vpop.xlane.xlu0 %1446
      %v1448 = vmul.f32 %v1441, %v1429
      %v1449 = vmul.f32 %v1444, %v1429
      %v1450 = vmul.f32 %v1447, %v1429
      %v1451 = vadd.f32 %v1448, 1e-06
      %v1452 = vadd.f32 %v1449, 1e-06
      %v1453 = vadd.f32 %v1450, 1e-06
      %v1454 = vrsqrt.pop %v1451
      %v1455 = vrsqrt.pop %v1452
      %v1456 = vrsqrt.pop %v1453
      %v1457 = vmul.f32 %v1433, %v1454
      %v1458 = vmul.f32 %v1434, %v1455
      %v1459 = vmul.f32 %v1435, %v1456
      %v1461 = vlaneseq
      %v1462 = vshrl.u32 %v1461, 7
      %v1463 = vsub.s32 0, %v1462
      %v1464 = vrot.slane %v1416, %v1463
      %v1466 = vmul.f32 %v1457, %v1464
      %v1467 = vmul.f32 %v1458, %v1464
      %v1468 = vmul.f32 %v1459, %v1464
      %v1470 = vlaneseq
      %v1471 = vshrl.u32 %v1470, 7
      %v1472 = vsub.s32 0, %v1471
      %v1473 = vrot.slane %v1417, %v1472
      %v1475 = vadd.f32 %v1466, %v1473
      %v1476 = vadd.f32 %v1467, %v1473
      %v1477 = vadd.f32 %v1468, %v1473
      %v1478 = vpack.c.bf16 %v1476, %v1475
      %v1479 = vpack.c.bf16 %v1477, %v1477
      %v1480 = vld [vmem:[%s7] sm:$0xf]
      %v1481 = vld [vmem:[%s7 + $0x4] sm:$0xf]
      %v1482 = vld [vmem:[%s7 + $0x8] sm:$0xf]
      %v1483 = vld [vmem:[%s7 + $0xc] sm:$0xf]
      %v1484 = vld [vmem:[%s7 + $0x10] sm:$0xf]
      %v1485 = vld [vmem:[%s7 + $0x14] sm:$0xf]
      %v1486 = vld [vmem:[%s7 + $0x18] sm:$0xf]
      %v1487 = vld [vmem:[%s7 + $0x1c] sm:$0xf]
      %v1488 = vld [vmem:[%s10] sm:$0x1]
      %v1490 = vlaneseq
      %v1491 = vshrl.u32 %v1490, 7
      %v1492 = vsub.s32 0, %v1491
      %v1493 = vrot.slane %v1488, %v1492
      %v1503 = vunpack.c.l.b16 %v1480
      %v1504 = vunpack.c.l.b16 %v1481
      %v1505 = vunpack.c.l.b16 %v1482
      %v1506 = vunpack.c.l.b16 %v1483
      %v1507 = vunpack.c.l.b16 %v1484
      %v1508 = vunpack.c.l.b16 %v1485
      %v1509 = vunpack.c.l.b16 %v1486
      %v1510 = vunpack.c.l.b16 %v1487
      %v1511 = vpack.c.b16 %v1504, %v1503
      %v1512 = vpack.c.b16 %v1506, %v1505
      %v1513 = vpack.c.b16 %v1508, %v1507
      %v1514 = vpack.c.b16 %v1510, %v1509
      %v1520 = vsel %vm1418, %v1478, 0
      %v1523 = vsel %vm1418, %v1479, 0
      %1525 = vmatprep.subr.bf16.mxu0 0
      %1526 = vmatpush1.bf16.msra.mxu0 %v1511
      %1527 = vmatprep.subr.bf16.mxu0 0
      %1528 = vmatpush1.bf16.msra.mxu0 %v1512
      %1529 = vmatprep.subr.bf16.mxu0 0
      %1530 = vmatpush1.bf16.msra.mxu0 %v1513
      %1531 = vmatprep.subr.bf16.mxu0 0
      %1532 = vmatpush1.bf16.msra.mxu0 %v1514
      %1533 = vmatprep.subr.bf16.mxu0 0
      %1534 = vmatpush1.bf16.msra.mxu0 0
      %1535 = vmatprep.subr.bf16.mxu0 0
      %1536 = vmatpush1.bf16.msra.mxu0 0
      %1537 = vmatprep.subr.bf16.mxu0 0
      %1538 = vmatpush1.bf16.msra.mxu0 0
      %1539 = vmatprep.subr.bf16.mxu0 0
      %1540 = vmatpush1.bf16.msra.mxu0 0
      %1541 = vmatprep.subr.bf16.mxu0 0
      %1542 = vmatpush1.bf16.msra.mxu0 0
      %1543 = vmatprep.subr.bf16.mxu0 0
      %1544 = vmatpush1.bf16.msra.mxu0 0
      %1545 = vmatprep.subr.bf16.mxu0 0
      %1546 = vmatpush1.bf16.msra.mxu0 0
      %1547 = vmatprep.subr.bf16.mxu0 0
      %1548 = vmatpush1.bf16.msra.mxu0 0
      %1549 = vmatprep.subr.bf16.mxu0 0
      %1550 = vmatpush1.bf16.msra.mxu0 0
      %1551 = vmatprep.subr.bf16.mxu0 0
      %1552 = vmatpush1.bf16.msra.mxu0 0
      %1553 = vmatprep.subr.bf16.mxu0 0
      %1554 = vmatpush1.bf16.msra.mxu0 0
      %1555 = vmatprep.subr.bf16.mxu0 0
      %1556 = vmatpush1.bf16.msra.mxu0 0
      %1557 = vmatprep.mubr.bf16.mxu0 0
      %1558 = vmatmul.mubr.bf16.gmra.mrb[0].mxu0 %v1520
      %v1559 = vpop.f32.mrb[0].mxu0
      %v1560 = vadd.f32 %v1493, %v1559
      %v1561 = vpop.f32.mrb[0].mxu0
      %v1562 = vpop.f32.mrb[0].mxu0
      %v1563 = vadd.f32 %v1493, %v1562
      %v1564 = vpop.f32.mrb[0].mxu0
      %1565 = vmatprep.mubr.bf16.mxu0 0
      %1566 = vmatmul.mubr.bf16.gmra.mrb[0].mxu0 %v1523
      %v1567 = vpop.f32.mrb[0].mxu0
      %v1568 = vadd.f32 %v1493, %v1567
      %v1569 = vpop.f32.mrb[0].mxu0
      %v1570 = vpop.f32.mrb[0].mxu0
      %v1571 = vpop.f32.mrb[0].mxu0
      %1572 = vdwg.mxu0
      %v1573 = vmul.f32 %v1560, 0.25
      %v1574 = vmul.f32 %v1563, 0.25
      %v1575 = vmul.f32 %v1568, 0.25
      %v1576 = vld [vmem:[%s8] sm:$0xf]
      %v1577 = vld [vmem:[%s8 + $0x4] sm:$0xf]
      %v1578 = vld [vmem:[%s8 + $0x8] sm:$0xf]
      %v1579 = vld [vmem:[%s8 + $0xc] sm:$0xf]
      %v1580 = vld [vmem:[%s8 + $0x10] sm:$0xf]
      %v1581 = vld [vmem:[%s8 + $0x14] sm:$0xf]
      %v1582 = vld [vmem:[%s8 + $0x18] sm:$0xf]
      %v1583 = vld [vmem:[%s8 + $0x1c] sm:$0xf]
      %v1584 = vld [vmem:[%s11] sm:$0x1]
      %v1586 = vlaneseq
      %v1587 = vshrl.u32 %v1586, 7
      %v1588 = vsub.s32 0, %v1587
      %v1589 = vrot.slane %v1584, %v1588
      %v1599 = vunpack.c.l.b16 %v1576
      %v1600 = vunpack.c.l.b16 %v1577
      %v1601 = vunpack.c.l.b16 %v1578
      %v1602 = vunpack.c.l.b16 %v1579
      %v1603 = vunpack.c.l.b16 %v1580
      %v1604 = vunpack.c.l.b16 %v1581
      %v1605 = vunpack.c.l.b16 %v1582
      %v1606 = vunpack.c.l.b16 %v1583
      %v1607 = vpack.c.b16 %v1600, %v1599
      %v1608 = vpack.c.b16 %v1602, %v1601
      %v1609 = vpack.c.b16 %v1604, %v1603
      %v1610 = vpack.c.b16 %v1606, %v1605
      %1615 = vmatprep.subr.bf16.mxu0 0
      %1616 = vmatpush1.bf16.msra.mxu0 %v1607
      %1617 = vmatprep.subr.bf16.mxu0 0
      %1618 = vmatpush1.bf16.msra.mxu0 %v1608
      %1619 = vmatprep.subr.bf16.mxu0 0
      %1620 = vmatpush1.bf16.msra.mxu0 %v1609
      %1621 = vmatprep.subr.bf16.mxu0 0
      %1622 = vmatpush1.bf16.msra.mxu0 %v1610
      %1623 = vmatprep.subr.bf16.mxu0 0
      %1624 = vmatpush1.bf16.msra.mxu0 0
      %1625 = vmatprep.subr.bf16.mxu0 0
      %1626 = vmatpush1.bf16.msra.mxu0 0
      %1627 = vmatprep.subr.bf16.mxu0 0
      %1628 = vmatpush1.bf16.msra.mxu0 0
      %1629 = vmatprep.subr.bf16.mxu0 0
      %1630 = vmatpush1.bf16.msra.mxu0 0
      %1631 = vmatprep.subr.bf16.mxu0 0
      %1632 = vmatpush1.bf16.msra.mxu0 0
      %1633 = vmatprep.subr.bf16.mxu0 0
      %1634 = vmatpush1.bf16.msra.mxu0 0
      %1635 = vmatprep.subr.bf16.mxu0 0
      %1636 = vmatpush1.bf16.msra.mxu0 0
      %1637 = vmatprep.subr.bf16.mxu0 0
      %1638 = vmatpush1.bf16.msra.mxu0 0
      %1639 = vmatprep.subr.bf16.mxu0 0
      %1640 = vmatpush1.bf16.msra.mxu0 0
      %1641 = vmatprep.subr.bf16.mxu0 0
      %1642 = vmatpush1.bf16.msra.mxu0 0
      %1643 = vmatprep.subr.bf16.mxu0 0
      %1644 = vmatpush1.bf16.msra.mxu0 0
      %1645 = vmatprep.subr.bf16.mxu0 0
      %1646 = vmatpush1.bf16.msra.mxu0 0
      %1647 = vmatprep.mubr.bf16.mxu0 0
      %1648 = vmatmul.mubr.bf16.gmra.mrb[0].mxu0 %v1520
      %v1649 = vpop.f32.mrb[0].mxu0
      %v1650 = vadd.f32 %v1589, %v1649
      %v1651 = vpop.f32.mrb[0].mxu0
      %v1652 = vpop.f32.mrb[0].mxu0
      %v1653 = vadd.f32 %v1589, %v1652
      %v1654 = vpop.f32.mrb[0].mxu0
      %1655 = vmatprep.mubr.bf16.mxu0 0
      %1656 = vmatmul.mubr.bf16.gmra.mrb[0].mxu0 %v1523
      %v1657 = vpop.f32.mrb[0].mxu0
      %v1658 = vadd.f32 %v1589, %v1657
      %v1659 = vpop.f32.mrb[0].mxu0
      %v1660 = vpop.f32.mrb[0].mxu0
      %v1661 = vpop.f32.mrb[0].mxu0
      %1662 = vdwg.mxu0
      %v1663 = vld [vmem:[%s9] sm:$0xf]
      %v1664 = vld [vmem:[%s9 + $0x4] sm:$0xf]
      %v1665 = vld [vmem:[%s9 + $0x8] sm:$0xf]
      %v1666 = vld [vmem:[%s9 + $0xc] sm:$0xf]
      %v1667 = vld [vmem:[%s9 + $0x10] sm:$0xf]
      %v1668 = vld [vmem:[%s9 + $0x14] sm:$0xf]
      %v1669 = vld [vmem:[%s9 + $0x18] sm:$0xf]
      %v1670 = vld [vmem:[%s9 + $0x1c] sm:$0xf]
      %v1671 = vld [vmem:[%s12] sm:$0x1]
      %v1673 = vlaneseq
      %v1674 = vshrl.u32 %v1673, 7
      %v1675 = vsub.s32 0, %v1674
      %v1676 = vrot.slane %v1671, %v1675
      %v1686 = vunpack.c.l.b16 %v1663
      %v1687 = vunpack.c.l.b16 %v1664
      %v1688 = vunpack.c.l.b16 %v1665
      %v1689 = vunpack.c.l.b16 %v1666
      %v1690 = vunpack.c.l.b16 %v1667
      %v1691 = vunpack.c.l.b16 %v1668
      %v1692 = vunpack.c.l.b16 %v1669
      %v1693 = vunpack.c.l.b16 %v1670
      %v1694 = vpack.c.b16 %v1687, %v1686
      %v1695 = vpack.c.b16 %v1689, %v1688
      %v1696 = vpack.c.b16 %v1691, %v1690
      %v1697 = vpack.c.b16 %v1693, %v1692
      %1702 = vmatprep.subr.bf16.mxu0 0
      %1703 = vmatpush1.bf16.msra.mxu0 %v1694
      %1704 = vmatprep.subr.bf16.mxu0 0
      %1705 = vmatpush1.bf16.msra.mxu0 %v1695
      %1706 = vmatprep.subr.bf16.mxu0 0
      %1707 = vmatpush1.bf16.msra.mxu0 %v1696
      %1708 = vmatprep.subr.bf16.mxu0 0
      %1709 = vmatpush1.bf16.msra.mxu0 %v1697
      %1710 = vmatprep.subr.bf16.mxu0 0
      %1711 = vmatpush1.bf16.msra.mxu0 0
      %1712 = vmatprep.subr.bf16.mxu0 0
      %1713 = vmatpush1.bf16.msra.mxu0 0
      %1714 = vmatprep.subr.bf16.mxu0 0
      %1715 = vmatpush1.bf16.msra.mxu0 0
      %1716 = vmatprep.subr.bf16.mxu0 0
      %1717 = vmatpush1.bf16.msra.mxu0 0
      %1718 = vmatprep.subr.bf16.mxu0 0
      %1719 = vmatpush1.bf16.msra.mxu0 0
      %1720 = vmatprep.subr.bf16.mxu0 0
      %1721 = vmatpush1.bf16.msra.mxu0 0
      %1722 = vmatprep.subr.bf16.mxu0 0
      %1723 = vmatpush1.bf16.msra.mxu0 0
      %1724 = vmatprep.subr.bf16.mxu0 0
      %1725 = vmatpush1.bf16.msra.mxu0 0
      %1726 = vmatprep.subr.bf16.mxu0 0
      %1727 = vmatpush1.bf16.msra.mxu0 0
      %1728 = vmatprep.subr.bf16.mxu0 0
      %1729 = vmatpush1.bf16.msra.mxu0 0
      %1730 = vmatprep.subr.bf16.mxu0 0
      %1731 = vmatpush1.bf16.msra.mxu0 0
      %1732 = vmatprep.subr.bf16.mxu0 0
      %1733 = vmatpush1.bf16.msra.mxu0 0
      %1734 = vmatprep.mubr.bf16.mxu0 0
      %1735 = vmatmul.mubr.bf16.gmra.mrb[0].mxu0 %v1520
      %v1736 = vpop.f32.mrb[0].mxu0
      %v1737 = vadd.f32 %v1676, %v1736
      %v1738 = vpop.f32.mrb[0].mxu0
      %v1739 = vpop.f32.mrb[0].mxu0
      %v1740 = vadd.f32 %v1676, %v1739
      %v1741 = vpop.f32.mrb[0].mxu0
      %1742 = vmatprep.mubr.bf16.mxu0 0
      %1743 = vmatmul.mubr.bf16.gmra.mrb[0].mxu0 %v1523
      %v1744 = vpop.f32.mrb[0].mxu0
      %v1745 = vadd.f32 %v1676, %v1744
      %v1746 = vpop.f32.mrb[0].mxu0
      %v1747 = vpop.f32.mrb[0].mxu0
      %v1748 = vpop.f32.mrb[0].mxu0
      %1749 = vdwg.mxu0
      %v1750 = vpack.c.bf16 %v1574, %v1573
      %v1751 = vpack.c.bf16 %v1575, %v1575
      %v1752 = vpack.c.bf16 %v1740, %v1737
      %v1753 = vpack.c.bf16 %v1745, %v1745
      %v1754 = vld [vmem:[%s3] sm:$0x1]
      %v1756 = vlaneseq
      %v1757 = vshrl.u32 %v1756, 7
      %v1758 = vsub.s32 0, %v1757
      %v1759 = vrot.slane %v1754, %v1758
      %v1761 = vmul.f32 %v1650, %v1759
      %v1762 = vmul.f32 %v1653, %v1759
      %v1763 = vmul.f32 %v1658, %v1759
      %v1764 = vpack.c.bf16 %v1762, %v1761
      %v1765 = vpack.c.bf16 %v1763, %v1763
      %v1767 = vsel %vm1418, %v1750, 0
      %v1770 = vsel %vm1418, %v1751, 0
      %v1773 = vsel %vm1418, %v1764, 0
      %v1776 = vsel %vm1418, %v1765, 0
      %1778 = vmatprep.subr.bf16.mxu0 0
      %1779 = vmatpush1.bf16.xpose.msra.mxu0 %v1773
      %1780 = vmatprep.subr.bf16.mxu0 0
      %1781 = vmatpush1.bf16.xpose.msra.mxu0 %v1776
      %1782 = vmatprep.subr.bf16.mxu0 0
      %1783 = vmatpush1.bf16.xpose.msra.mxu0 0
      %1784 = vmatprep.subr.bf16.mxu0 0
      %1785 = vmatpush1.bf16.xpose.msra.mxu0 0
      %1786 = vmatprep.subr.bf16.mxu0 0
      %1787 = vmatpush1.bf16.xpose.msra.mxu0 0
      %1788 = vmatprep.subr.bf16.mxu0 0
      %1789 = vmatpush1.bf16.xpose.msra.mxu0 0
      %1790 = vmatprep.subr.bf16.mxu0 0
      %1791 = vmatpush1.bf16.xpose.msra.mxu0 0
      %1792 = vmatprep.subr.bf16.mxu0 0
      %1793 = vmatpush1.bf16.xpose.msra.mxu0 0
      %1794 = vmatprep.subr.bf16.mxu0 0
      %1795 = vmatpush1.bf16.xpose.msra.mxu0 0
      %1796 = vmatprep.subr.bf16.mxu0 0
      %1797 = vmatpush1.bf16.xpose.msra.mxu0 0
      %1798 = vmatprep.subr.bf16.mxu0 0
      %1799 = vmatpush1.bf16.xpose.msra.mxu0 0
      %1800 = vmatprep.subr.bf16.mxu0 0
      %1801 = vmatpush1.bf16.xpose.msra.mxu0 0
      %1802 = vmatprep.subr.bf16.mxu0 0
      %1803 = vmatpush1.bf16.xpose.msra.mxu0 0
      %1804 = vmatprep.subr.bf16.mxu0 0
      %1805 = vmatpush1.bf16.xpose.msra.mxu0 0
      %1806 = vmatprep.subr.bf16.mxu0 0
      %1807 = vmatpush1.bf16.xpose.msra.mxu0 0
      %1808 = vmatprep.subr.bf16.mxu0 0
      %1809 = vmatpush1.bf16.xpose.msra.mxu0 0
      %1810 = vmatprep.mubr.bf16.mxu0 0
      %1811 = vmatmul.mubr.bf16.gmra.mrb[0].mxu0 %v1767
      %v1812 = vpop.f32.mrb[0].mxu0
      %v1813 = vadd.f32 %v1413, %v1812
      %v1814 = vpop.f32.mrb[0].mxu0
      %v1815 = vpop.f32.mrb[0].mxu0
      %v1816 = vadd.f32 %v1414, %v1815
      %v1817 = vpop.f32.mrb[0].mxu0
      %1818 = vmatprep.mubr.bf16.mxu0 0
      %1819 = vmatmul.mubr.bf16.gmra.mrb[0].mxu0 %v1770
      %v1820 = vpop.f32.mrb[0].mxu0
      %v1821 = vadd.f32 %v1415, %v1820
      %v1822 = vpop.f32.mrb[0].mxu0
      %v1823 = vpop.f32.mrb[0].mxu0
      %v1824 = vpop.f32.mrb[0].mxu0
      %1825 = vdwg.mxu0
      %vm1826 = vcmask 162816
      %v1827 = vsel %vm1826, %v1813, -inf
      %1828 = vmax.xlane.f32.xlu0 %v1827
      %v1829 = vpop.xlane.xlu0 %1828
      %v1830 = vsel %vm1826, %v1816, -inf
      %1831 = vmax.xlane.f32.xlu0 %v1830
      %v1832 = vpop.xlane.xlu0 %1831
      %vm1833 = vcmask 158720
      %v1834 = vsel %vm1833, %v1821, -inf
      %1835 = vmax.xlane.f32.xlu0 %v1834
      %v1836 = vpop.xlane.xlu0 %1835
      %v1837 = vsub.f32 %v1813, %v1829
      %v1838 = vsub.f32 %v1816, %v1832
      %v1839 = vsub.f32 %v1821, %v1836
      %v1840 = vmul.f32 %v1837, 1.442695
      %v1841 = vpow.pop %v1840
      %v1842 = vmul.f32 %v1838, 1.442695
      %v1843 = vpow.pop %v1842
      %v1844 = vmul.f32 %v1839, 1.442695
      %v1845 = vpow.pop %v1844
      %v1846 = vsel %vm1826, %v1841, 0.0
      %1847 = vadd.xlane.f32.xlu0 %v1846
      %v1848 = vpop.xlane.xlu0 %1847
      %v1849 = vsel %vm1826, %v1843, 0.0
      %1850 = vadd.xlane.f32.xlu0 %v1849
      %v1851 = vpop.xlane.xlu0 %1850
      %v1852 = vsel %vm1833, %v1845, 0.0
      %1853 = vadd.xlane.f32.xlu0 %v1852
      %v1854 = vpop.xlane.xlu0 %1853
      %v1855 = vrcp.pop %v1848
      %v1856 = vrcp.pop %v1851
      %v1857 = vrcp.pop %v1854
      %v1858 = vmul.f32 %v1841, %v1855
      %v1859 = vmul.f32 %v1843, %v1856
      %v1860 = vmul.f32 %v1845, %v1857
      %v1861 = vpack.c.bf16 %v1859, %v1858
      %v1862 = vpack.c.bf16 %v1860, %v1860
      %v1864 = vsel %vm1826, %v1861, 0
      %v1867 = vsel %vm1826, %v1862, 0
      %vm1869 = vcmask 1041408
      %v1871 = vsel %vm1869, %v1753, 0
      %1873 = vmatprep.subr.bf16.mxu0 0
      %1874 = vmatpush1.bf16.msra.mxu0 %v1752
      %1875 = vmatprep.subr.bf16.mxu0 0
      %1876 = vmatpush1.bf16.msra.mxu0 %v1871
      %1877 = vmatprep.subr.bf16.mxu0 0
      %1878 = vmatpush1.bf16.msra.mxu0 0
      %1879 = vmatprep.subr.bf16.mxu0 0
      %1880 = vmatpush1.bf16.msra.mxu0 0
      %1881 = vmatprep.subr.bf16.mxu0 0
      %1882 = vmatpush1.bf16.msra.mxu0 0
      %1883 = vmatprep.subr.bf16.mxu0 0
      %1884 = vmatpush1.bf16.msra.mxu0 0
      %1885 = vmatprep.subr.bf16.mxu0 0
      %1886 = vmatpush1.bf16.msra.mxu0 0
      %1887 = vmatprep.subr.bf16.mxu0 0
      %1888 = vmatpush1.bf16.msra.mxu0 0
      %1889 = vmatprep.subr.bf16.mxu0 0
      %1890 = vmatpush1.bf16.msra.mxu0 0
      %1891 = vmatprep.subr.bf16.mxu0 0
      %1892 = vmatpush1.bf16.msra.mxu0 0
      %1893 = vmatprep.subr.bf16.mxu0 0
      %1894 = vmatpush1.bf16.msra.mxu0 0
      %1895 = vmatprep.subr.bf16.mxu0 0
      %1896 = vmatpush1.bf16.msra.mxu0 0
      %1897 = vmatprep.subr.bf16.mxu0 0
      %1898 = vmatpush1.bf16.msra.mxu0 0
      %1899 = vmatprep.subr.bf16.mxu0 0
      %1900 = vmatpush1.bf16.msra.mxu0 0
      %1901 = vmatprep.subr.bf16.mxu0 0
      %1902 = vmatpush1.bf16.msra.mxu0 0
      %1903 = vmatprep.subr.bf16.mxu0 0
      %1904 = vmatpush1.bf16.msra.mxu0 0
      %1905 = vmatprep.mubr.bf16.mxu0 0
      %1906 = vmatmul.mubr.bf16.gmra.mrb[0].mxu0 %v1864
      %v1907 = vpop.f32.mrb[0].mxu0
      %v1908 = vadd.f32 0.0, %v1907
      %v1909 = vpop.f32.mrb[0].mxu0
      %v1910 = vpop.f32.mrb[0].mxu0
      %v1911 = vadd.f32 0.0, %v1910
      %v1912 = vpop.f32.mrb[0].mxu0
      %1913 = vmatprep.mubr.bf16.mxu0 0
      %1914 = vmatmul.mubr.bf16.gmra.mrb[0].mxu0 %v1867
      %v1915 = vpop.f32.mrb[0].mxu0
      %v1916 = vadd.f32 0.0, %v1915
      %v1917 = vpop.f32.mrb[0].mxu0
      %v1918 = vpop.f32.mrb[0].mxu0
      %v1919 = vpop.f32.mrb[0].mxu0
      %1920 = vdwg.mxu0
      %v1921 = vmul.f32 %v1908, %v1759
      %v1922 = vmul.f32 %v1911, %v1759
      %v1923 = vmul.f32 %v1916, %v1759
      %s1924 = scalar_lea.vmem %s3, 1
      %v1925 = vld [vmem:[%s1924] sm:$0x1]
      %v1927 = vlaneseq
      %v1928 = vshrl.u32 %v1927, 7
      %v1929 = vsub.s32 0, %v1928
      %v1930 = vrot.slane %v1925, %v1929
      %v1932 = vmul.f32 %v1650, %v1930
      %v1933 = vmul.f32 %v1653, %v1930
      %v1934 = vmul.f32 %v1658, %v1930
      %v1935 = vpack.c.bf16 %v1933, %v1932
      %v1936 = vpack.c.bf16 %v1934, %v1934
      %v1938 = vsel %vm1418, %v1935, 0
      %v1941 = vsel %vm1418, %v1936, 0
      %1943 = vmatprep.subr.bf16.mxu0 0
      %1944 = vmatpush1.bf16.xpose.msra.mxu0 %v1938
      %1945 = vmatprep.subr.bf16.mxu0 0
      %1946 = vmatpush1.bf16.xpose.msra.mxu0 %v1941
      %1947 = vmatprep.subr.bf16.mxu0 0
      %1948 = vmatpush1.bf16.xpose.msra.mxu0 0
      %1949 = vmatprep.subr.bf16.mxu0 0
      %1950 = vmatpush1.bf16.xpose.msra.mxu0 0
      %1951 = vmatprep.subr.bf16.mxu0 0
      %1952 = vmatpush1.bf16.xpose.msra.mxu0 0
      %1953 = vmatprep.subr.bf16.mxu0 0
      %1954 = vmatpush1.bf16.xpose.msra.mxu0 0
      %1955 = vmatprep.subr.bf16.mxu0 0
      %1956 = vmatpush1.bf16.xpose.msra.mxu0 0
      %1957 = vmatprep.subr.bf16.mxu0 0
      %1958 = vmatpush1.bf16.xpose.msra.mxu0 0
      %1959 = vmatprep.subr.bf16.mxu0 0
      %1960 = vmatpush1.bf16.xpose.msra.mxu0 0
      %1961 = vmatprep.subr.bf16.mxu0 0
      %1962 = vmatpush1.bf16.xpose.msra.mxu0 0
      %1963 = vmatprep.subr.bf16.mxu0 0
      %1964 = vmatpush1.bf16.xpose.msra.mxu0 0
      %1965 = vmatprep.subr.bf16.mxu0 0
      %1966 = vmatpush1.bf16.xpose.msra.mxu0 0
      %1967 = vmatprep.subr.bf16.mxu0 0
      %1968 = vmatpush1.bf16.xpose.msra.mxu0 0
      %1969 = vmatprep.subr.bf16.mxu0 0
      %1970 = vmatpush1.bf16.xpose.msra.mxu0 0
      %1971 = vmatprep.subr.bf16.mxu0 0
      %1972 = vmatpush1.bf16.xpose.msra.mxu0 0
      %1973 = vmatprep.subr.bf16.mxu0 0
      %1974 = vmatpush1.bf16.xpose.msra.mxu0 0
      %1975 = vmatprep.mubr.bf16.mxu0 0
      %1976 = vmatmul.mubr.bf16.gmra.mrb[0].mxu0 %v1767
      %v1977 = vpop.f32.mrb[0].mxu0
      %v1978 = vadd.f32 %v1413, %v1977
      %v1979 = vpop.f32.mrb[0].mxu0
      %v1980 = vpop.f32.mrb[0].mxu0
      %v1981 = vadd.f32 %v1414, %v1980
      %v1982 = vpop.f32.mrb[0].mxu0
      %1983 = vmatprep.mubr.bf16.mxu0 0
      %1984 = vmatmul.mubr.bf16.gmra.mrb[0].mxu0 %v1770
      %v1985 = vpop.f32.mrb[0].mxu0
      %v1986 = vadd.f32 %v1415, %v1985
      %v1987 = vpop.f32.mrb[0].mxu0
      %v1988 = vpop.f32.mrb[0].mxu0
      %v1989 = vpop.f32.mrb[0].mxu0
      %1990 = vdwg.mxu0
      %v1991 = vsel %vm1826, %v1978, -inf
      %1992 = vmax.xlane.f32.xlu0 %v1991
      %v1993 = vpop.xlane.xlu0 %1992
      %v1994 = vsel %vm1826, %v1981, -inf
      %1995 = vmax.xlane.f32.xlu0 %v1994
      %v1996 = vpop.xlane.xlu0 %1995
      %v1997 = vsel %vm1833, %v1986, -inf
      %1998 = vmax.xlane.f32.xlu0 %v1997
      %v1999 = vpop.xlane.xlu0 %1998
      %v2000 = vsub.f32 %v1978, %v1993
      %v2001 = vsub.f32 %v1981, %v1996
      %v2002 = vsub.f32 %v1986, %v1999
      %v2003 = vmul.f32 %v2000, 1.442695
      %v2004 = vpow.pop %v2003
      %v2005 = vmul.f32 %v2001, 1.442695
      %v2006 = vpow.pop %v2005
      %v2007 = vmul.f32 %v2002, 1.442695
      %v2008 = vpow.pop %v2007
      %v2009 = vsel %vm1826, %v2004, 0.0
      %2010 = vadd.xlane.f32.xlu0 %v2009
      %v2011 = vpop.xlane.xlu0 %2010
      %v2012 = vsel %vm1826, %v2006, 0.0
      %2013 = vadd.xlane.f32.xlu0 %v2012
      %v2014 = vpop.xlane.xlu0 %2013
      %v2015 = vsel %vm1833, %v2008, 0.0
      %2016 = vadd.xlane.f32.xlu0 %v2015
      %v2017 = vpop.xlane.xlu0 %2016
      %v2018 = vrcp.pop %v2011
      %v2019 = vrcp.pop %v2014
      %v2020 = vrcp.pop %v2017
      %v2021 = vmul.f32 %v2004, %v2018
      %v2022 = vmul.f32 %v2006, %v2019
      %v2023 = vmul.f32 %v2008, %v2020
      %v2024 = vpack.c.bf16 %v2022, %v2021
      %v2025 = vpack.c.bf16 %v2023, %v2023
      %v2027 = vsel %vm1826, %v2024, 0
      %v2030 = vsel %vm1826, %v2025, 0
      %2032 = vmatprep.subr.bf16.mxu0 0
      %2033 = vmatpush1.bf16.msra.mxu0 %v1752
      %2034 = vmatprep.subr.bf16.mxu0 0
      %2035 = vmatpush1.bf16.msra.mxu0 %v1871
      %2036 = vmatprep.subr.bf16.mxu0 0
      %2037 = vmatpush1.bf16.msra.mxu0 0
      %2038 = vmatprep.subr.bf16.mxu0 0
      %2039 = vmatpush1.bf16.msra.mxu0 0
      %2040 = vmatprep.subr.bf16.mxu0 0
      %2041 = vmatpush1.bf16.msra.mxu0 0
      %2042 = vmatprep.subr.bf16.mxu0 0
      %2043 = vmatpush1.bf16.msra.mxu0 0
      %2044 = vmatprep.subr.bf16.mxu0 0
      %2045 = vmatpush1.bf16.msra.mxu0 0
      %2046 = vmatprep.subr.bf16.mxu0 0
      %2047 = vmatpush1.bf16.msra.mxu0 0
      %2048 = vmatprep.subr.bf16.mxu0 0
      %2049 = vmatpush1.bf16.msra.mxu0 0
      %2050 = vmatprep.subr.bf16.mxu0 0
      %2051 = vmatpush1.bf16.msra.mxu0 0
      %2052 = vmatprep.subr.bf16.mxu0 0
      %2053 = vmatpush1.bf16.msra.mxu0 0
      %2054 = vmatprep.subr.bf16.mxu0 0
      %2055 = vmatpush1.bf16.msra.mxu0 0
      %2056 = vmatprep.subr.bf16.mxu0 0
      %2057 = vmatpush1.bf16.msra.mxu0 0
      %2058 = vmatprep.subr.bf16.mxu0 0
      %2059 = vmatpush1.bf16.msra.mxu0 0
      %2060 = vmatprep.subr.bf16.mxu0 0
      %2061 = vmatpush1.bf16.msra.mxu0 0
      %2062 = vmatprep.subr.bf16.mxu0 0
      %2063 = vmatpush1.bf16.msra.mxu0 0
      %2064 = vmatprep.mubr.bf16.mxu0 0
      %2065 = vmatmul.mubr.bf16.gmra.mrb[0].mxu0 %v2027
      %v2066 = vpop.f32.mrb[0].mxu0
      %v2067 = vadd.f32 0.0, %v2066
      %v2068 = vpop.f32.mrb[0].mxu0
      %v2069 = vpop.f32.mrb[0].mxu0
      %v2070 = vadd.f32 0.0, %v2069
      %v2071 = vpop.f32.mrb[0].mxu0
      %2072 = vmatprep.mubr.bf16.mxu0 0
      %2073 = vmatmul.mubr.bf16.gmra.mrb[0].mxu0 %v2030
      %v2074 = vpop.f32.mrb[0].mxu0
      %v2075 = vadd.f32 0.0, %v2074
      %v2076 = vpop.f32.mrb[0].mxu0
      %v2077 = vpop.f32.mrb[0].mxu0
      %v2078 = vpop.f32.mrb[0].mxu0
      %2079 = vdwg.mxu0
      %v2080 = vmul.f32 %v2067, %v1930
      %v2081 = vmul.f32 %v2070, %v1930
      %v2082 = vmul.f32 %v2075, %v1930
      %v2083 = vadd.f32 %v1921, %v2080
      %v2084 = vadd.f32 %v1922, %v2081
      %v2085 = vadd.f32 %v1923, %v2082
      %s2086 = scalar_lea.vmem %s3, 2
      %v2087 = vld [vmem:[%s2086] sm:$0x1]
      %v2089 = vlaneseq
      %v2090 = vshrl.u32 %v2089, 7
      %v2091 = vsub.s32 0, %v2090
      %v2092 = vrot.slane %v2087, %v2091
      %v2094 = vmul.f32 %v1650, %v2092
      %v2095 = vmul.f32 %v1653, %v2092
      %v2096 = vmul.f32 %v1658, %v2092
      %v2097 = vpack.c.bf16 %v2095, %v2094
      %v2098 = vpack.c.bf16 %v2096, %v2096
      %v2100 = vsel %vm1418, %v2097, 0
      %v2103 = vsel %vm1418, %v2098, 0
      %2105 = vmatprep.subr.bf16.mxu0 0
      %2106 = vmatpush1.bf16.xpose.msra.mxu0 %v2100
      %2107 = vmatprep.subr.bf16.mxu0 0
      %2108 = vmatpush1.bf16.xpose.msra.mxu0 %v2103
      %2109 = vmatprep.subr.bf16.mxu0 0
      %2110 = vmatpush1.bf16.xpose.msra.mxu0 0
      %2111 = vmatprep.subr.bf16.mxu0 0
      %2112 = vmatpush1.bf16.xpose.msra.mxu0 0
      %2113 = vmatprep.subr.bf16.mxu0 0
      %2114 = vmatpush1.bf16.xpose.msra.mxu0 0
      %2115 = vmatprep.subr.bf16.mxu0 0
      %2116 = vmatpush1.bf16.xpose.msra.mxu0 0
      %2117 = vmatprep.subr.bf16.mxu0 0
      %2118 = vmatpush1.bf16.xpose.msra.mxu0 0
      %2119 = vmatprep.subr.bf16.mxu0 0
      %2120 = vmatpush1.bf16.xpose.msra.mxu0 0
      %2121 = vmatprep.subr.bf16.mxu0 0
      %2122 = vmatpush1.bf16.xpose.msra.mxu0 0
      %2123 = vmatprep.subr.bf16.mxu0 0
      %2124 = vmatpush1.bf16.xpose.msra.mxu0 0
      %2125 = vmatprep.subr.bf16.mxu0 0
      %2126 = vmatpush1.bf16.xpose.msra.mxu0 0
      %2127 = vmatprep.subr.bf16.mxu0 0
      %2128 = vmatpush1.bf16.xpose.msra.mxu0 0
      %2129 = vmatprep.subr.bf16.mxu0 0
      %2130 = vmatpush1.bf16.xpose.msra.mxu0 0
      %2131 = vmatprep.subr.bf16.mxu0 0
      %2132 = vmatpush1.bf16.xpose.msra.mxu0 0
      %2133 = vmatprep.subr.bf16.mxu0 0
      %2134 = vmatpush1.bf16.xpose.msra.mxu0 0
      %2135 = vmatprep.subr.bf16.mxu0 0
      %2136 = vmatpush1.bf16.xpose.msra.mxu0 0
      %2137 = vmatprep.mubr.bf16.mxu0 0
      %2138 = vmatmul.mubr.bf16.gmra.mrb[0].mxu0 %v1767
      %v2139 = vpop.f32.mrb[0].mxu0
      %v2140 = vadd.f32 %v1413, %v2139
      %v2141 = vpop.f32.mrb[0].mxu0
      %v2142 = vpop.f32.mrb[0].mxu0
      %v2143 = vadd.f32 %v1414, %v2142
      %v2144 = vpop.f32.mrb[0].mxu0
      %2145 = vmatprep.mubr.bf16.mxu0 0
      %2146 = vmatmul.mubr.bf16.gmra.mrb[0].mxu0 %v1770
      %v2147 = vpop.f32.mrb[0].mxu0
      %v2148 = vadd.f32 %v1415, %v2147
      %v2149 = vpop.f32.mrb[0].mxu0
      %v2150 = vpop.f32.mrb[0].mxu0
      %v2151 = vpop.f32.mrb[0].mxu0
      %2152 = vdwg.mxu0
      %v2153 = vsel %vm1826, %v2140, -inf
      %2154 = vmax.xlane.f32.xlu0 %v2153
      %v2155 = vpop.xlane.xlu0 %2154
      %v2156 = vsel %vm1826, %v2143, -inf
      %2157 = vmax.xlane.f32.xlu0 %v2156
      %v2158 = vpop.xlane.xlu0 %2157
      %v2159 = vsel %vm1833, %v2148, -inf
      %2160 = vmax.xlane.f32.xlu0 %v2159
      %v2161 = vpop.xlane.xlu0 %2160
      %v2162 = vsub.f32 %v2140, %v2155
      %v2163 = vsub.f32 %v2143, %v2158
      %v2164 = vsub.f32 %v2148, %v2161
      %v2165 = vmul.f32 %v2162, 1.442695
      %v2166 = vpow.pop %v2165
      %v2167 = vmul.f32 %v2163, 1.442695
      %v2168 = vpow.pop %v2167
      %v2169 = vmul.f32 %v2164, 1.442695
      %v2170 = vpow.pop %v2169
      %v2171 = vsel %vm1826, %v2166, 0.0
      %2172 = vadd.xlane.f32.xlu0 %v2171
      %v2173 = vpop.xlane.xlu0 %2172
      %v2174 = vsel %vm1826, %v2168, 0.0
      %2175 = vadd.xlane.f32.xlu0 %v2174
      %v2176 = vpop.xlane.xlu0 %2175
      %v2177 = vsel %vm1833, %v2170, 0.0
      %2178 = vadd.xlane.f32.xlu0 %v2177
      %v2179 = vpop.xlane.xlu0 %2178
      %v2180 = vrcp.pop %v2173
      %v2181 = vrcp.pop %v2176
      %v2182 = vrcp.pop %v2179
      %v2183 = vmul.f32 %v2166, %v2180
      %v2184 = vmul.f32 %v2168, %v2181
      %v2185 = vmul.f32 %v2170, %v2182
      %v2186 = vpack.c.bf16 %v2184, %v2183
      %v2187 = vpack.c.bf16 %v2185, %v2185
      %v2189 = vsel %vm1826, %v2186, 0
      %v2192 = vsel %vm1826, %v2187, 0
      %2194 = vmatprep.subr.bf16.mxu0 0
      %2195 = vmatpush1.bf16.msra.mxu0 %v1752
      %2196 = vmatprep.subr.bf16.mxu0 0
      %2197 = vmatpush1.bf16.msra.mxu0 %v1871
      %2198 = vmatprep.subr.bf16.mxu0 0
      %2199 = vmatpush1.bf16.msra.mxu0 0
      %2200 = vmatprep.subr.bf16.mxu0 0
      %2201 = vmatpush1.bf16.msra.mxu0 0
      %2202 = vmatprep.subr.bf16.mxu0 0
      %2203 = vmatpush1.bf16.msra.mxu0 0
      %2204 = vmatprep.subr.bf16.mxu0 0
      %2205 = vmatpush1.bf16.msra.mxu0 0
      %2206 = vmatprep.subr.bf16.mxu0 0
      %2207 = vmatpush1.bf16.msra.mxu0 0
      %2208 = vmatprep.subr.bf16.mxu0 0
      %2209 = vmatpush1.bf16.msra.mxu0 0
      %2210 = vmatprep.subr.bf16.mxu0 0
      %2211 = vmatpush1.bf16.msra.mxu0 0
      %2212 = vmatprep.subr.bf16.mxu0 0
      %2213 = vmatpush1.bf16.msra.mxu0 0
      %2214 = vmatprep.subr.bf16.mxu0 0
      %2215 = vmatpush1.bf16.msra.mxu0 0
      %2216 = vmatprep.subr.bf16.mxu0 0
      %2217 = vmatpush1.bf16.msra.mxu0 0
      %2218 = vmatprep.subr.bf16.mxu0 0
      %2219 = vmatpush1.bf16.msra.mxu0 0
      %2220 = vmatprep.subr.bf16.mxu0 0
      %2221 = vmatpush1.bf16.msra.mxu0 0
      %2222 = vmatprep.subr.bf16.mxu0 0
      %2223 = vmatpush1.bf16.msra.mxu0 0
      %2224 = vmatprep.subr.bf16.mxu0 0
      %2225 = vmatpush1.bf16.msra.mxu0 0
      %2226 = vmatprep.mubr.bf16.mxu0 0
      %2227 = vmatmul.mubr.bf16.gmra.mrb[0].mxu0 %v2189
      %v2228 = vpop.f32.mrb[0].mxu0
      %v2229 = vadd.f32 0.0, %v2228
      %v2230 = vpop.f32.mrb[0].mxu0
      %v2231 = vpop.f32.mrb[0].mxu0
      %v2232 = vadd.f32 0.0, %v2231
      %v2233 = vpop.f32.mrb[0].mxu0
      %2234 = vmatprep.mubr.bf16.mxu0 0
      %2235 = vmatmul.mubr.bf16.gmra.mrb[0].mxu0 %v2192
      %v2236 = vpop.f32.mrb[0].mxu0
      %v2237 = vadd.f32 0.0, %v2236
      %v2238 = vpop.f32.mrb[0].mxu0
      %v2239 = vpop.f32.mrb[0].mxu0
      %v2240 = vpop.f32.mrb[0].mxu0
      %2241 = vdwg.mxu0
      %v2242 = vmul.f32 %v2229, %v2092
      %v2243 = vmul.f32 %v2232, %v2092
      %v2244 = vmul.f32 %v2237, %v2092
      %v2245 = vadd.f32 %v2083, %v2242
      %v2246 = vadd.f32 %v2084, %v2243
      %v2247 = vadd.f32 %v2085, %v2244
      %s2248 = scalar_lea.vmem %s3, 3
      %v2249 = vld [vmem:[%s2248] sm:$0x1]
      %v2251 = vlaneseq
      %v2252 = vshrl.u32 %v2251, 7
      %v2253 = vsub.s32 0, %v2252
      %v2254 = vrot.slane %v2249, %v2253
      %v2256 = vmul.f32 %v1650, %v2254
      %v2257 = vmul.f32 %v1653, %v2254
      %v2258 = vmul.f32 %v1658, %v2254
      %v2259 = vpack.c.bf16 %v2257, %v2256
      %v2260 = vpack.c.bf16 %v2258, %v2258
      %v2262 = vsel %vm1418, %v2259, 0
      %v2265 = vsel %vm1418, %v2260, 0
      %2267 = vmatprep.subr.bf16.mxu0 0
      %2268 = vmatpush1.bf16.xpose.msra.mxu0 %v2262
      %2269 = vmatprep.subr.bf16.mxu0 0
      %2270 = vmatpush1.bf16.xpose.msra.mxu0 %v2265
      %2271 = vmatprep.subr.bf16.mxu0 0
      %2272 = vmatpush1.bf16.xpose.msra.mxu0 0
      %2273 = vmatprep.subr.bf16.mxu0 0
      %2274 = vmatpush1.bf16.xpose.msra.mxu0 0
      %2275 = vmatprep.subr.bf16.mxu0 0
      %2276 = vmatpush1.bf16.xpose.msra.mxu0 0
      %2277 = vmatprep.subr.bf16.mxu0 0
      %2278 = vmatpush1.bf16.xpose.msra.mxu0 0
      %2279 = vmatprep.subr.bf16.mxu0 0
      %2280 = vmatpush1.bf16.xpose.msra.mxu0 0
      %2281 = vmatprep.subr.bf16.mxu0 0
      %2282 = vmatpush1.bf16.xpose.msra.mxu0 0
      %2283 = vmatprep.subr.bf16.mxu0 0
      %2284 = vmatpush1.bf16.xpose.msra.mxu0 0
      %2285 = vmatprep.subr.bf16.mxu0 0
      %2286 = vmatpush1.bf16.xpose.msra.mxu0 0
      %2287 = vmatprep.subr.bf16.mxu0 0
      %2288 = vmatpush1.bf16.xpose.msra.mxu0 0
      %2289 = vmatprep.subr.bf16.mxu0 0
      %2290 = vmatpush1.bf16.xpose.msra.mxu0 0
      %2291 = vmatprep.subr.bf16.mxu0 0
      %2292 = vmatpush1.bf16.xpose.msra.mxu0 0
      %2293 = vmatprep.subr.bf16.mxu0 0
      %2294 = vmatpush1.bf16.xpose.msra.mxu0 0
      %2295 = vmatprep.subr.bf16.mxu0 0
      %2296 = vmatpush1.bf16.xpose.msra.mxu0 0
      %2297 = vmatprep.subr.bf16.mxu0 0
      %2298 = vmatpush1.bf16.xpose.msra.mxu0 0
      %2299 = vmatprep.mubr.bf16.mxu0 0
      %2300 = vmatmul.mubr.bf16.gmra.mrb[0].mxu0 %v1767
      %v2301 = vpop.f32.mrb[0].mxu0
      %v2302 = vadd.f32 %v1413, %v2301
      %v2303 = vpop.f32.mrb[0].mxu0
      %v2304 = vpop.f32.mrb[0].mxu0
      %v2305 = vadd.f32 %v1414, %v2304
      %v2306 = vpop.f32.mrb[0].mxu0
      %2307 = vmatprep.mubr.bf16.mxu0 0
      %2308 = vmatmul.mubr.bf16.gmra.mrb[0].mxu0 %v1770
      %v2309 = vpop.f32.mrb[0].mxu0
      %v2310 = vadd.f32 %v1415, %v2309
      %v2311 = vpop.f32.mrb[0].mxu0
      %v2312 = vpop.f32.mrb[0].mxu0
      %v2313 = vpop.f32.mrb[0].mxu0
      %2314 = vdwg.mxu0
      %v2315 = vsel %vm1826, %v2302, -inf
      %2316 = vmax.xlane.f32.xlu0 %v2315
      %v2317 = vpop.xlane.xlu0 %2316
      %v2318 = vsel %vm1826, %v2305, -inf
      %2319 = vmax.xlane.f32.xlu0 %v2318
      %v2320 = vpop.xlane.xlu0 %2319
      %v2321 = vsel %vm1833, %v2310, -inf
      %2322 = vmax.xlane.f32.xlu0 %v2321
      %v2323 = vpop.xlane.xlu0 %2322
      %v2324 = vsub.f32 %v2302, %v2317
      %v2325 = vsub.f32 %v2305, %v2320
      %v2326 = vsub.f32 %v2310, %v2323
      %v2327 = vmul.f32 %v2324, 1.442695
      %v2328 = vpow.pop %v2327
      %v2329 = vmul.f32 %v2325, 1.442695
      %v2330 = vpow.pop %v2329
      %v2331 = vmul.f32 %v2326, 1.442695
      %v2332 = vpow.pop %v2331
      %v2333 = vsel %vm1826, %v2328, 0.0
      %2334 = vadd.xlane.f32.xlu0 %v2333
      %v2335 = vpop.xlane.xlu0 %2334
      %v2336 = vsel %vm1826, %v2330, 0.0
      %2337 = vadd.xlane.f32.xlu0 %v2336
      %v2338 = vpop.xlane.xlu0 %2337
      %v2339 = vsel %vm1833, %v2332, 0.0
      %2340 = vadd.xlane.f32.xlu0 %v2339
      %v2341 = vpop.xlane.xlu0 %2340
      %v2342 = vrcp.pop %v2335
      %v2343 = vrcp.pop %v2338
      %v2344 = vrcp.pop %v2341
      %v2345 = vmul.f32 %v2328, %v2342
      %v2346 = vmul.f32 %v2330, %v2343
      %v2347 = vmul.f32 %v2332, %v2344
      %v2348 = vpack.c.bf16 %v2346, %v2345
      %v2349 = vpack.c.bf16 %v2347, %v2347
      %v2351 = vsel %vm1826, %v2348, 0
      %v2354 = vsel %vm1826, %v2349, 0
      %2356 = vmatprep.subr.bf16.mxu0 0
      %2357 = vmatpush1.bf16.msra.mxu0 %v1752
      %2358 = vmatprep.subr.bf16.mxu0 0
      %2359 = vmatpush1.bf16.msra.mxu0 %v1871
      %2360 = vmatprep.subr.bf16.mxu0 0
      %2361 = vmatpush1.bf16.msra.mxu0 0
      %2362 = vmatprep.subr.bf16.mxu0 0
      %2363 = vmatpush1.bf16.msra.mxu0 0
      %2364 = vmatprep.subr.bf16.mxu0 0
      %2365 = vmatpush1.bf16.msra.mxu0 0
      %2366 = vmatprep.subr.bf16.mxu0 0
      %2367 = vmatpush1.bf16.msra.mxu0 0
      %2368 = vmatprep.subr.bf16.mxu0 0
      %2369 = vmatpush1.bf16.msra.mxu0 0
      %2370 = vmatprep.subr.bf16.mxu0 0
      %2371 = vmatpush1.bf16.msra.mxu0 0
      %2372 = vmatprep.subr.bf16.mxu0 0
      %2373 = vmatpush1.bf16.msra.mxu0 0
      %2374 = vmatprep.subr.bf16.mxu0 0
      %2375 = vmatpush1.bf16.msra.mxu0 0
      %2376 = vmatprep.subr.bf16.mxu0 0
      %2377 = vmatpush1.bf16.msra.mxu0 0
      %2378 = vmatprep.subr.bf16.mxu0 0
      %2379 = vmatpush1.bf16.msra.mxu0 0
      %2380 = vmatprep.subr.bf16.mxu0 0
      %2381 = vmatpush1.bf16.msra.mxu0 0
      %2382 = vmatprep.subr.bf16.mxu0 0
      %2383 = vmatpush1.bf16.msra.mxu0 0
      %2384 = vmatprep.subr.bf16.mxu0 0
      %2385 = vmatpush1.bf16.msra.mxu0 0
      %2386 = vmatprep.subr.bf16.mxu0 0
      %2387 = vmatpush1.bf16.msra.mxu0 0
      %2388 = vmatprep.mubr.bf16.mxu0 0
      %2389 = vmatmul.mubr.bf16.gmra.mrb[0].mxu0 %v2351
      %v2390 = vpop.f32.mrb[0].mxu0
      %v2391 = vadd.f32 0.0, %v2390
      %v2392 = vpop.f32.mrb[0].mxu0
      %v2393 = vpop.f32.mrb[0].mxu0
      %v2394 = vadd.f32 0.0, %v2393
      %v2395 = vpop.f32.mrb[0].mxu0
      %2396 = vmatprep.mubr.bf16.mxu0 0
      %2397 = vmatmul.mubr.bf16.gmra.mrb[0].mxu0 %v2354
      %v2398 = vpop.f32.mrb[0].mxu0
      %v2399 = vadd.f32 0.0, %v2398
      %v2400 = vpop.f32.mrb[0].mxu0
      %v2401 = vpop.f32.mrb[0].mxu0
      %v2402 = vpop.f32.mrb[0].mxu0
      %2403 = vdwg.mxu0
      %v2404 = vmul.f32 %v2391, %v2254
      %v2405 = vmul.f32 %v2394, %v2254
      %v2406 = vmul.f32 %v2399, %v2254
      %v2407 = vadd.f32 %v2245, %v2404
      %v2408 = vadd.f32 %v2246, %v2405
      %v2409 = vadd.f32 %v2247, %v2406
      %v2410 = vpack.c.bf16 %v2408, %v2407
      %v2411 = vpack.c.bf16 %v2409, %v2409
      %v2412 = vld [vmem:[%s13] sm:$0xf]
      %v2413 = vld [vmem:[%s13 + $0x4] sm:$0xf]
      %v2414 = vld [vmem:[%s13 + $0x8] sm:$0xf]
      %v2415 = vld [vmem:[%s13 + $0xc] sm:$0xf]
      %v2416 = vld [vmem:[%s13 + $0x10] sm:$0xf]
      %v2417 = vld [vmem:[%s13 + $0x14] sm:$0xf]
      %v2418 = vld [vmem:[%s13 + $0x18] sm:$0xf]
      %v2419 = vld [vmem:[%s13 + $0x1c] sm:$0xf]
      %v2420 = vld [vmem:[%s14] sm:$0x1]
      %v2422 = vlaneseq
      %v2423 = vshrl.u32 %v2422, 7
      %v2424 = vsub.s32 0, %v2423
      %v2425 = vrot.slane %v2420, %v2424
      %v2435 = vunpack.c.l.b16 %v2412
      %v2436 = vunpack.c.l.b16 %v2413
      %v2437 = vunpack.c.l.b16 %v2414
      %v2438 = vunpack.c.l.b16 %v2415
      %v2439 = vunpack.c.l.b16 %v2416
      %v2440 = vunpack.c.l.b16 %v2417
      %v2441 = vunpack.c.l.b16 %v2418
      %v2442 = vunpack.c.l.b16 %v2419
      %v2443 = vpack.c.b16 %v2436, %v2435
      %v2444 = vpack.c.b16 %v2438, %v2437
      %v2445 = vpack.c.b16 %v2440, %v2439
      %v2446 = vpack.c.b16 %v2442, %v2441
      %v2452 = vsel %vm1418, %v2410, 0
      %v2455 = vsel %vm1418, %v2411, 0
      %2457 = vmatprep.subr.bf16.mxu0 0
      %2458 = vmatpush1.bf16.msra.mxu0 %v2443
      %2459 = vmatprep.subr.bf16.mxu0 0
      %2460 = vmatpush1.bf16.msra.mxu0 %v2444
      %2461 = vmatprep.subr.bf16.mxu0 0
      %2462 = vmatpush1.bf16.msra.mxu0 %v2445
      %2463 = vmatprep.subr.bf16.mxu0 0
      %2464 = vmatpush1.bf16.msra.mxu0 %v2446
      %2465 = vmatprep.subr.bf16.mxu0 0
      %2466 = vmatpush1.bf16.msra.mxu0 0
      %2467 = vmatprep.subr.bf16.mxu0 0
      %2468 = vmatpush1.bf16.msra.mxu0 0
      %2469 = vmatprep.subr.bf16.mxu0 0
      %2470 = vmatpush1.bf16.msra.mxu0 0
      %2471 = vmatprep.subr.bf16.mxu0 0
      %2472 = vmatpush1.bf16.msra.mxu0 0
      %2473 = vmatprep.subr.bf16.mxu0 0
      %2474 = vmatpush1.bf16.msra.mxu0 0
      %2475 = vmatprep.subr.bf16.mxu0 0
      %2476 = vmatpush1.bf16.msra.mxu0 0
      %2477 = vmatprep.subr.bf16.mxu0 0
      %2478 = vmatpush1.bf16.msra.mxu0 0
      %2479 = vmatprep.subr.bf16.mxu0 0
      %2480 = vmatpush1.bf16.msra.mxu0 0
      %2481 = vmatprep.subr.bf16.mxu0 0
      %2482 = vmatpush1.bf16.msra.mxu0 0
      %2483 = vmatprep.subr.bf16.mxu0 0
      %2484 = vmatpush1.bf16.msra.mxu0 0
      %2485 = vmatprep.subr.bf16.mxu0 0
      %2486 = vmatpush1.bf16.msra.mxu0 0
      %2487 = vmatprep.subr.bf16.mxu0 0
      %2488 = vmatpush1.bf16.msra.mxu0 0
      %2489 = vmatprep.mubr.bf16.mxu0 0
      %2490 = vmatmul.mubr.bf16.gmra.mrb[0].mxu0 %v2452
      %v2491 = vpop.f32.mrb[0].mxu0
      %v2492 = vadd.f32 %v2425, %v2491
      %v2493 = vpop.f32.mrb[0].mxu0
      %v2494 = vpop.f32.mrb[0].mxu0
      %v2495 = vadd.f32 %v2425, %v2494
      %v2496 = vpop.f32.mrb[0].mxu0
      %2497 = vmatprep.mubr.bf16.mxu0 0
      %2498 = vmatmul.mubr.bf16.gmra.mrb[0].mxu0 %v2455
      %v2499 = vpop.f32.mrb[0].mxu0
      %v2500 = vadd.f32 %v2425, %v2499
      %v2501 = vpop.f32.mrb[0].mxu0
      %v2502 = vpop.f32.mrb[0].mxu0
      %v2503 = vpop.f32.mrb[0].mxu0
      %2504 = vdwg.mxu0
      %v2505 = vadd.f32 %v1400, %v2492
      %v2506 = vadd.f32 %v1403, %v2495
      %v2507 = vadd.f32 %v1408, %v2500
      %v2508 = vld [vmem:[%s15] sm:$0x1]
      %v2509 = vld [vmem:[%s16] sm:$0x1]
      %v2510 = vsel %vm1418, %v2505, 0.0
      %2511 = vadd.xlane.f32.xlu0 %v2510
      %v2512 = vpop.xlane.xlu0 %2511
      %v2513 = vsel %vm1418, %v2506, 0.0
      %2514 = vadd.xlane.f32.xlu0 %v2513
      %v2515 = vpop.xlane.xlu0 %2514
      %v2516 = vsel %vm1425, %v2507, 0.0
      %2517 = vadd.xlane.f32.xlu0 %v2516
      %v2518 = vpop.xlane.xlu0 %2517
      %v2519 = vmul.f32 %v2512, %v1429
      %v2520 = vmul.f32 %v2515, %v1429
      %v2521 = vmul.f32 %v2518, %v1429
      %v2522 = vsub.f32 %v2505, %v2519
      %v2523 = vsub.f32 %v2506, %v2520
      %v2524 = vsub.f32 %v2507, %v2521
      %v2525 = vmul.f32 %v2522, %v2522
      %v2526 = vmul.f32 %v2523, %v2523
      %v2527 = vmul.f32 %v2524, %v2524
      %v2528 = vsel %vm1418, %v2525, 0.0
      %2529 = vadd.xlane.f32.xlu0 %v2528
      %v2530 = vpop.xlane.xlu0 %2529
      %v2531 = vsel %vm1418, %v2526, 0.0
      %2532 = vadd.xlane.f32.xlu0 %v2531
      %v2533 = vpop.xlane.xlu0 %2532
      %v2534 = vsel %vm1425, %v2527, 0.0
      %2535 = vadd.xlane.f32.xlu0 %v2534
      %v2536 = vpop.xlane.xlu0 %2535
      %v2537 = vmul.f32 %v2530, %v1429
      %v2538 = vmul.f32 %v2533, %v1429
      %v2539 = vmul.f32 %v2536, %v1429
      %v2540 = vadd.f32 %v2537, 1e-06
      %v2541 = vadd.f32 %v2538, 1e-06
      %v2542 = vadd.f32 %v2539, 1e-06
      %v2543 = vrsqrt.pop %v2540
      %v2544 = vrsqrt.pop %v2541
      %v2545 = vrsqrt.pop %v2542
      %v2546 = vmul.f32 %v2522, %v2543
      %v2547 = vmul.f32 %v2523, %v2544
      %v2548 = vmul.f32 %v2524, %v2545
      %v2550 = vlaneseq
      %v2551 = vshrl.u32 %v2550, 7
      %v2552 = vsub.s32 0, %v2551
      %v2553 = vrot.slane %v2508, %v2552
      %v2555 = vmul.f32 %v2546, %v2553
      %v2556 = vmul.f32 %v2547, %v2553
      %v2557 = vmul.f32 %v2548, %v2553
      %v2559 = vlaneseq
      %v2560 = vshrl.u32 %v2559, 7
      %v2561 = vsub.s32 0, %v2560
      %v2562 = vrot.slane %v2509, %v2561
      %v2564 = vadd.f32 %v2555, %v2562
      %v2565 = vadd.f32 %v2556, %v2562
      %v2566 = vadd.f32 %v2557, %v2562
      %v2567 = vpack.c.bf16 %v2565, %v2564
      %v2568 = vpack.c.bf16 %v2566, %v2566
      %v2569 = vld [vmem:[%s17] sm:$0xff]
      %v2570 = vld [vmem:[%s17 + $0x8] sm:$0xff]
      %v2571 = vld [vmem:[%s17 + $0x10] sm:$0xff]
      %v2572 = vld [vmem:[%s17 + $0x18] sm:$0xff]
      %v2573 = vld [vmem:[%s17 + $0x20] sm:$0xff]
      %v2574 = vld [vmem:[%s17 + $0x28] sm:$0xff]
      %v2575 = vld [vmem:[%s17 + $0x30] sm:$0xff]
      %v2576 = vld [vmem:[%s17 + $0x38] sm:$0xff]
      %v2577 = vld [vmem:[%s18] sm:$0x3]
      %v2579 = vlaneseq
      %v2580 = vshrl.u32 %v2579, 7
      %v2581 = vsub.s32 0, %v2580
      %v2582 = vrot.slane %v2577, %v2581
      %v2583 = vlaneseq
      %v2584 = vshrl.u32 %v2583, 7
      %v2585 = vsub.s32 1, %v2584
      %v2586 = vrot.slane %v2577, %v2585
      %v2597 = vunpack.c.l.b16 %v2569
      %v2598 = vunpack.c.h.b16 %v2569
      %v2599 = vunpack.c.l.b16 %v2570
      %v2600 = vunpack.c.h.b16 %v2570
      %v2601 = vunpack.c.l.b16 %v2571
      %v2602 = vunpack.c.h.b16 %v2571
      %v2603 = vunpack.c.l.b16 %v2572
      %v2604 = vunpack.c.h.b16 %v2572
      %v2605 = vunpack.c.l.b16 %v2573
      %v2606 = vunpack.c.h.b16 %v2573
      %v2607 = vunpack.c.l.b16 %v2574
      %v2608 = vunpack.c.h.b16 %v2574
      %v2609 = vunpack.c.l.b16 %v2575
      %v2610 = vunpack.c.h.b16 %v2575
      %v2611 = vunpack.c.l.b16 %v2576
      %v2612 = vunpack.c.h.b16 %v2576
      %v2613 = vpack.c.b16 %v2599, %v2597
      %v2614 = vpack.c.b16 %v2600, %v2598
      %v2615 = vpack.c.b16 %v2603, %v2601
      %v2616 = vpack.c.b16 %v2604, %v2602
      %v2617 = vpack.c.b16 %v2607, %v2605
      %v2618 = vpack.c.b16 %v2608, %v2606
      %v2619 = vpack.c.b16 %v2611, %v2609
      %v2620 = vpack.c.b16 %v2612, %v2610
      %v2630 = vsel %vm1418, %v2567, 0
      %v2633 = vsel %vm1418, %v2568, 0
      %2635 = vmatprep.subr.bf16.mxu0 %v2614
      %2636 = vmatpush1.bf16.msra.mxu0 %v2613
      %2637 = vmatprep.subr.bf16.mxu0 %v2616
      %2638 = vmatpush1.bf16.msra.mxu0 %v2615
      %2639 = vmatprep.subr.bf16.mxu0 %v2618
      %2640 = vmatpush1.bf16.msra.mxu0 %v2617
      %2641 = vmatprep.subr.bf16.mxu0 %v2620
      %2642 = vmatpush1.bf16.msra.mxu0 %v2619
      %2643 = vmatprep.subr.bf16.mxu0 0
      %2644 = vmatpush1.bf16.msra.mxu0 0
      %2645 = vmatprep.subr.bf16.mxu0 0
      %2646 = vmatpush1.bf16.msra.mxu0 0
      %2647 = vmatprep.subr.bf16.mxu0 0
      %2648 = vmatpush1.bf16.msra.mxu0 0
      %2649 = vmatprep.subr.bf16.mxu0 0
      %2650 = vmatpush1.bf16.msra.mxu0 0
      %2651 = vmatprep.subr.bf16.mxu0 0
      %2652 = vmatpush1.bf16.msra.mxu0 0
      %2653 = vmatprep.subr.bf16.mxu0 0
      %2654 = vmatpush1.bf16.msra.mxu0 0
      %2655 = vmatprep.subr.bf16.mxu0 0
      %2656 = vmatpush1.bf16.msra.mxu0 0
      %2657 = vmatprep.subr.bf16.mxu0 0
      %2658 = vmatpush1.bf16.msra.mxu0 0
      %2659 = vmatprep.subr.bf16.mxu0 0
      %2660 = vmatpush1.bf16.msra.mxu0 0
      %2661 = vmatprep.subr.bf16.mxu0 0
      %2662 = vmatpush1.bf16.msra.mxu0 0
      %2663 = vmatprep.subr.bf16.mxu0 0
      %2664 = vmatpush1.bf16.msra.mxu0 0
      %2665 = vmatprep.subr.bf16.mxu0 0
      %2666 = vmatpush1.bf16.msra.mxu0 0
      %2667 = vmatprep.mubr.bf16.mxu0 0
      %2668 = vmatmul.mubr.bf16.gmra.mrb[0].mxu0 %v2630
      %v2669 = vpop.f32.mrb[0].mxu0
      %v2670 = vadd.f32 %v2582, %v2669
      %v2671 = vpop.f32.mrb[0].mxu0
      %v2672 = vadd.f32 %v2586, %v2671
      %v2673 = vpop.f32.mrb[0].mxu0
      %v2674 = vadd.f32 %v2582, %v2673
      %v2675 = vpop.f32.mrb[0].mxu0
      %v2676 = vadd.f32 %v2586, %v2675
      %2677 = vmatprep.mubr.bf16.mxu0 0
      %2678 = vmatmul.mubr.bf16.gmra.mrb[0].mxu0 %v2633
      %v2679 = vpop.f32.mrb[0].mxu0
      %v2680 = vadd.f32 %v2582, %v2679
      %v2681 = vpop.f32.mrb[0].mxu0
      %v2682 = vadd.f32 %v2586, %v2681
      %v2683 = vpop.f32.mrb[0].mxu0
      %v2684 = vpop.f32.mrb[0].mxu0
      %2685 = vdwg.mxu0
      %v2686 = vmul.f32 %v2670, 0.5
      %v2687 = vmul.f32 %v2672, 0.5
      %v2688 = vmul.f32 %v2674, 0.5
      %v2689 = vmul.f32 %v2676, 0.5
      %v2690 = vmul.f32 %v2680, 0.5
      %v2691 = vmul.f32 %v2682, 0.5
      %v2692 = vmul.f32 %v2670, 0.70710677
      %v2693 = vmul.f32 %v2672, 0.70710677
      %v2694 = vmul.f32 %v2674, 0.70710677
      %v2695 = vmul.f32 %v2676, 0.70710677
      %v2696 = vmul.f32 %v2680, 0.70710677
      %v2697 = vmul.f32 %v2682, 0.70710677
      %v2698 = verf.f32.pop %v2692
      %v2699 = verf.f32.pop %v2693
      %v2700 = verf.f32.pop %v2694
      %v2701 = verf.f32.pop %v2695
      %v2702 = verf.f32.pop %v2696
      %v2703 = verf.f32.pop %v2697
      %v2704 = vadd.f32 %v2698, 1.0
      %v2705 = vadd.f32 %v2699, 1.0
      %v2706 = vadd.f32 %v2700, 1.0
      %v2707 = vadd.f32 %v2701, 1.0
      %v2708 = vadd.f32 %v2702, 1.0
      %v2709 = vadd.f32 %v2703, 1.0
      %v2710 = vmul.f32 %v2686, %v2704
      %v2711 = vmul.f32 %v2687, %v2705
      %v2712 = vmul.f32 %v2688, %v2706
      %v2713 = vmul.f32 %v2689, %v2707
      %v2714 = vmul.f32 %v2690, %v2708
      %v2715 = vmul.f32 %v2691, %v2709
      %v2716 = vpack.c.bf16 %v2712, %v2710
      %v2717 = vpack.c.bf16 %v2713, %v2711
      %v2718 = vpack.c.bf16 %v2714, %v2714
      %v2719 = vpack.c.bf16 %v2715, %v2715
      %v2720 = vld [vmem:[%s19] sm:$0xf]
      %v2721 = vld [vmem:[%s19 + $0x4] sm:$0xf]
      %v2722 = vld [vmem:[%s19 + $0x8] sm:$0xf]
      %v2723 = vld [vmem:[%s19 + $0xc] sm:$0xf]
      %v2724 = vld [vmem:[%s19 + $0x10] sm:$0xf]
      %v2725 = vld [vmem:[%s19 + $0x14] sm:$0xf]
      %v2726 = vld [vmem:[%s19 + $0x18] sm:$0xf]
      %v2727 = vld [vmem:[%s19 + $0x1c] sm:$0xf]
      %v2728 = vld [vmem:[%s19 + $0x20] sm:$0xf]
      %v2729 = vld [vmem:[%s19 + $0x24] sm:$0xf]
      %v2730 = vld [vmem:[%s19 + $0x28] sm:$0xf]
      %v2731 = vld [vmem:[%s19 + $0x2c] sm:$0xf]
      %v2732 = vld [vmem:[%s19 + $0x30] sm:$0xf]
      %v2733 = vld [vmem:[%s19 + $0x34] sm:$0xf]
      %v2734 = vld [vmem:[%s19 + $0x38] sm:$0xf]
      %v2735 = vld [vmem:[%s19 + $0x3c] sm:$0xf]
      %v2736 = vld [vmem:[%s19 + $0x40] sm:$0xf]
      %v2737 = vld [vmem:[%s19 + $0x44] sm:$0xf]
      %v2738 = vld [vmem:[%s19 + $0x48] sm:$0xf]
      %v2739 = vld [vmem:[%s19 + $0x4c] sm:$0xf]
      %v2740 = vld [vmem:[%s19 + $0x50] sm:$0xf]
      %v2741 = vld [vmem:[%s19 + $0x54] sm:$0xf]
      %v2742 = vld [vmem:[%s19 + $0x58] sm:$0xf]
      %v2743 = vld [vmem:[%s19 + $0x5c] sm:$0xf]
      %v2744 = vld [vmem:[%s19 + $0x60] sm:$0xf]
      %v2745 = vld [vmem:[%s19 + $0x64] sm:$0xf]
      %v2746 = vld [vmem:[%s19 + $0x68] sm:$0xf]
      %v2747 = vld [vmem:[%s19 + $0x6c] sm:$0xf]
      %v2748 = vld [vmem:[%s19 + $0x70] sm:$0xf]
      %v2749 = vld [vmem:[%s19 + $0x74] sm:$0xf]
      %v2750 = vld [vmem:[%s19 + $0x78] sm:$0xf]
      %v2751 = vld [vmem:[%s19 + $0x7c] sm:$0xf]
      %v2752 = vld [vmem:[%s20] sm:$0x1]
      %v2754 = vlaneseq
      %v2755 = vshrl.u32 %v2754, 7
      %v2756 = vsub.s32 0, %v2755
      %v2757 = vrot.slane %v2752, %v2756
      %v2791 = vunpack.c.l.b16 %v2720
      %v2792 = vunpack.c.l.b16 %v2721
      %v2793 = vunpack.c.l.b16 %v2722
      %v2794 = vunpack.c.l.b16 %v2723
      %v2795 = vunpack.c.l.b16 %v2724
      %v2796 = vunpack.c.l.b16 %v2725
      %v2797 = vunpack.c.l.b16 %v2726
      %v2798 = vunpack.c.l.b16 %v2727
      %v2799 = vunpack.c.l.b16 %v2728
      %v2800 = vunpack.c.l.b16 %v2729
      %v2801 = vunpack.c.l.b16 %v2730
      %v2802 = vunpack.c.l.b16 %v2731
      %v2803 = vunpack.c.l.b16 %v2732
      %v2804 = vunpack.c.l.b16 %v2733
      %v2805 = vunpack.c.l.b16 %v2734
      %v2806 = vunpack.c.l.b16 %v2735
      %v2807 = vunpack.c.l.b16 %v2736
      %v2808 = vunpack.c.l.b16 %v2737
      %v2809 = vunpack.c.l.b16 %v2738
      %v2810 = vunpack.c.l.b16 %v2739
      %v2811 = vunpack.c.l.b16 %v2740
      %v2812 = vunpack.c.l.b16 %v2741
      %v2813 = vunpack.c.l.b16 %v2742
      %v2814 = vunpack.c.l.b16 %v2743
      %v2815 = vunpack.c.l.b16 %v2744
      %v2816 = vunpack.c.l.b16 %v2745
      %v2817 = vunpack.c.l.b16 %v2746
      %v2818 = vunpack.c.l.b16 %v2747
      %v2819 = vunpack.c.l.b16 %v2748
      %v2820 = vunpack.c.l.b16 %v2749
      %v2821 = vunpack.c.l.b16 %v2750
      %v2822 = vunpack.c.l.b16 %v2751
      %v2823 = vpack.c.b16 %v2792, %v2791
      %v2824 = vpack.c.b16 %v2794, %v2793
      %v2825 = vpack.c.b16 %v2796, %v2795
      %v2826 = vpack.c.b16 %v2798, %v2797
      %v2827 = vpack.c.b16 %v2800, %v2799
      %v2828 = vpack.c.b16 %v2802, %v2801
      %v2829 = vpack.c.b16 %v2804, %v2803
      %v2830 = vpack.c.b16 %v2806, %v2805
      %v2831 = vpack.c.b16 %v2808, %v2807
      %v2832 = vpack.c.b16 %v2810, %v2809
      %v2833 = vpack.c.b16 %v2812, %v2811
      %v2834 = vpack.c.b16 %v2814, %v2813
      %v2835 = vpack.c.b16 %v2816, %v2815
      %v2836 = vpack.c.b16 %v2818, %v2817
      %v2837 = vpack.c.b16 %v2820, %v2819
      %v2838 = vpack.c.b16 %v2822, %v2821
      %2855 = vmatprep.subr.bf16.mxu0 0
      %2856 = vmatpush1.bf16.msra.mxu0 %v2823
      %2857 = vmatprep.subr.bf16.mxu0 0
      %2858 = vmatpush1.bf16.msra.mxu0 %v2824
      %2859 = vmatprep.subr.bf16.mxu0 0
      %2860 = vmatpush1.bf16.msra.mxu0 %v2825
      %2861 = vmatprep.subr.bf16.mxu0 0
      %2862 = vmatpush1.bf16.msra.mxu0 %v2826
      %2863 = vmatprep.subr.bf16.mxu0 0
      %2864 = vmatpush1.bf16.msra.mxu0 %v2827
      %2865 = vmatprep.subr.bf16.mxu0 0
      %2866 = vmatpush1.bf16.msra.mxu0 %v2828
      %2867 = vmatprep.subr.bf16.mxu0 0
      %2868 = vmatpush1.bf16.msra.mxu0 %v2829
      %2869 = vmatprep.subr.bf16.mxu0 0
      %2870 = vmatpush1.bf16.msra.mxu0 %v2830
      %2871 = vmatprep.subr.bf16.mxu0 0
      %2872 = vmatpush1.bf16.msra.mxu0 %v2831
      %2873 = vmatprep.subr.bf16.mxu0 0
      %2874 = vmatpush1.bf16.msra.mxu0 %v2832
      %2875 = vmatprep.subr.bf16.mxu0 0
      %2876 = vmatpush1.bf16.msra.mxu0 %v2833
      %2877 = vmatprep.subr.bf16.mxu0 0
      %2878 = vmatpush1.bf16.msra.mxu0 %v2834
      %2879 = vmatprep.subr.bf16.mxu0 0
      %2880 = vmatpush1.bf16.msra.mxu0 %v2835
      %2881 = vmatprep.subr.bf16.mxu0 0
      %2882 = vmatpush1.bf16.msra.mxu0 %v2836
      %2883 = vmatprep.subr.bf16.mxu0 0
      %2884 = vmatpush1.bf16.msra.mxu0 %v2837
      %2885 = vmatprep.subr.bf16.mxu0 0
      %2886 = vmatpush1.bf16.msra.mxu0 %v2838
      %2887 = vmatprep.mubr.bf16.mxu0 %v2717
      %2888 = vmatmul.mubr.bf16.gmra.mrb[0].mxu0 %v2716
      %v2889 = vpop.f32.mrb[0].mxu0
      %v2890 = vadd.f32 %v2757, %v2889
      %v2891 = vpop.f32.mrb[0].mxu0
      %v2892 = vpop.f32.mrb[0].mxu0
      %v2893 = vadd.f32 %v2757, %v2892
      %v2894 = vpop.f32.mrb[0].mxu0
      %2895 = vmatprep.mubr.bf16.mxu0 %v2719
      %2896 = vmatmul.mubr.bf16.gmra.mrb[0].mxu0 %v2718
      %v2897 = vpop.f32.mrb[0].mxu0
      %v2898 = vadd.f32 %v2757, %v2897
      %v2899 = vpop.f32.mrb[0].mxu0
      %v2900 = vpop.f32.mrb[0].mxu0
      %v2901 = vpop.f32.mrb[0].mxu0
      %2902 = vdwg.mxu0
      %v2903 = vadd.f32 %v2505, %v2890
      %v2904 = vadd.f32 %v2506, %v2893
      %v2905 = vadd.f32 %v2507, %v2898
      %s2906 = scalar_lea.vmem %s5, 1
      %v2907 = vld [vmem:[%s2906] sm:$0x1]
      %s2908 = scalar_lea.vmem %s6, 1
      %v2909 = vld [vmem:[%s2908] sm:$0x1]
      %v2910 = vsel %vm1418, %v2903, 0.0
      %2911 = vadd.xlane.f32.xlu0 %v2910
      %v2912 = vpop.xlane.xlu0 %2911
      %v2913 = vsel %vm1418, %v2904, 0.0
      %2914 = vadd.xlane.f32.xlu0 %v2913
      %v2915 = vpop.xlane.xlu0 %2914
      %v2916 = vsel %vm1425, %v2905, 0.0
      %2917 = vadd.xlane.f32.xlu0 %v2916
      %v2918 = vpop.xlane.xlu0 %2917
      %v2919 = vmul.f32 %v2912, %v1429
      %v2920 = vmul.f32 %v2915, %v1429
      %v2921 = vmul.f32 %v2918, %v1429
      %v2922 = vsub.f32 %v2903, %v2919
      %v2923 = vsub.f32 %v2904, %v2920
      %v2924 = vsub.f32 %v2905, %v2921
      %v2925 = vmul.f32 %v2922, %v2922
      %v2926 = vmul.f32 %v2923, %v2923
      %v2927 = vmul.f32 %v2924, %v2924
      %v2928 = vsel %vm1418, %v2925, 0.0
      %2929 = vadd.xlane.f32.xlu0 %v2928
      %v2930 = vpop.xlane.xlu0 %2929
      %v2931 = vsel %vm1418, %v2926, 0.0
      %2932 = vadd.xlane.f32.xlu0 %v2931
      %v2933 = vpop.xlane.xlu0 %2932
      %v2934 = vsel %vm1425, %v2927, 0.0
      %2935 = vadd.xlane.f32.xlu0 %v2934
      %v2936 = vpop.xlane.xlu0 %2935
      %v2937 = vmul.f32 %v2930, %v1429
      %v2938 = vmul.f32 %v2933, %v1429
      %v2939 = vmul.f32 %v2936, %v1429
      %v2940 = vadd.f32 %v2937, 1e-06
      %v2941 = vadd.f32 %v2938, 1e-06
      %v2942 = vadd.f32 %v2939, 1e-06
      %v2943 = vrsqrt.pop %v2940
      %v2944 = vrsqrt.pop %v2941
      %v2945 = vrsqrt.pop %v2942
      %v2946 = vmul.f32 %v2922, %v2943
      %v2947 = vmul.f32 %v2923, %v2944
      %v2948 = vmul.f32 %v2924, %v2945
      %v2950 = vlaneseq
      %v2951 = vshrl.u32 %v2950, 7
      %v2952 = vsub.s32 0, %v2951
      %v2953 = vrot.slane %v2907, %v2952
      %v2955 = vmul.f32 %v2946, %v2953
      %v2956 = vmul.f32 %v2947, %v2953
      %v2957 = vmul.f32 %v2948, %v2953
      %v2959 = vlaneseq
      %v2960 = vshrl.u32 %v2959, 7
      %v2961 = vsub.s32 0, %v2960
      %v2962 = vrot.slane %v2909, %v2961
      %v2964 = vadd.f32 %v2955, %v2962
      %v2965 = vadd.f32 %v2956, %v2962
      %v2966 = vadd.f32 %v2957, %v2962
      %v2967 = vpack.c.bf16 %v2965, %v2964
      %v2968 = vpack.c.bf16 %v2966, %v2966
      %s2969 = scalar_lea.vmem %s7, 32
      %v2970 = vld [vmem:[%s2969] sm:$0xf]
      %v2971 = vld [vmem:[%s2969 + $0x4] sm:$0xf]
      %v2972 = vld [vmem:[%s2969 + $0x8] sm:$0xf]
      %v2973 = vld [vmem:[%s2969 + $0xc] sm:$0xf]
      %v2974 = vld [vmem:[%s2969 + $0x10] sm:$0xf]
      %v2975 = vld [vmem:[%s2969 + $0x14] sm:$0xf]
      %v2976 = vld [vmem:[%s2969 + $0x18] sm:$0xf]
      %v2977 = vld [vmem:[%s2969 + $0x1c] sm:$0xf]
      %s2978 = scalar_lea.vmem %s10, 1
      %v2979 = vld [vmem:[%s2978] sm:$0x1]
      %v2981 = vlaneseq
      %v2982 = vshrl.u32 %v2981, 7
      %v2983 = vsub.s32 0, %v2982
      %v2984 = vrot.slane %v2979, %v2983
      %v2994 = vunpack.c.l.b16 %v2970
      %v2995 = vunpack.c.l.b16 %v2971
      %v2996 = vunpack.c.l.b16 %v2972
      %v2997 = vunpack.c.l.b16 %v2973
      %v2998 = vunpack.c.l.b16 %v2974
      %v2999 = vunpack.c.l.b16 %v2975
      %v3000 = vunpack.c.l.b16 %v2976
      %v3001 = vunpack.c.l.b16 %v2977
      %v3002 = vpack.c.b16 %v2995, %v2994
      %v3003 = vpack.c.b16 %v2997, %v2996
      %v3004 = vpack.c.b16 %v2999, %v2998
      %v3005 = vpack.c.b16 %v3001, %v3000
      %v3011 = vsel %vm1418, %v2967, 0
      %v3014 = vsel %vm1418, %v2968, 0
      %3016 = vmatprep.subr.bf16.mxu0 0
      %3017 = vmatpush1.bf16.msra.mxu0 %v3002
      %3018 = vmatprep.subr.bf16.mxu0 0
      %3019 = vmatpush1.bf16.msra.mxu0 %v3003
      %3020 = vmatprep.subr.bf16.mxu0 0
      %3021 = vmatpush1.bf16.msra.mxu0 %v3004
      %3022 = vmatprep.subr.bf16.mxu0 0
      %3023 = vmatpush1.bf16.msra.mxu0 %v3005
      %3024 = vmatprep.subr.bf16.mxu0 0
      %3025 = vmatpush1.bf16.msra.mxu0 0
      %3026 = vmatprep.subr.bf16.mxu0 0
      %3027 = vmatpush1.bf16.msra.mxu0 0
      %3028 = vmatprep.subr.bf16.mxu0 0
      %3029 = vmatpush1.bf16.msra.mxu0 0
      %3030 = vmatprep.subr.bf16.mxu0 0
      %3031 = vmatpush1.bf16.msra.mxu0 0
      %3032 = vmatprep.subr.bf16.mxu0 0
      %3033 = vmatpush1.bf16.msra.mxu0 0
      %3034 = vmatprep.subr.bf16.mxu0 0
      %3035 = vmatpush1.bf16.msra.mxu0 0
      %3036 = vmatprep.subr.bf16.mxu0 0
      %3037 = vmatpush1.bf16.msra.mxu0 0
      %3038 = vmatprep.subr.bf16.mxu0 0
      %3039 = vmatpush1.bf16.msra.mxu0 0
      %3040 = vmatprep.subr.bf16.mxu0 0
      %3041 = vmatpush1.bf16.msra.mxu0 0
      %3042 = vmatprep.subr.bf16.mxu0 0
      %3043 = vmatpush1.bf16.msra.mxu0 0
      %3044 = vmatprep.subr.bf16.mxu0 0
      %3045 = vmatpush1.bf16.msra.mxu0 0
      %3046 = vmatprep.subr.bf16.mxu0 0
      %3047 = vmatpush1.bf16.msra.mxu0 0
      %3048 = vmatprep.mubr.bf16.mxu0 0
      %3049 = vmatmul.mubr.bf16.gmra.mrb[0].mxu0 %v3011
      %v3050 = vpop.f32.mrb[0].mxu0
      %v3051 = vadd.f32 %v2984, %v3050
      %v3052 = vpop.f32.mrb[0].mxu0
      %v3053 = vpop.f32.mrb[0].mxu0
      %v3054 = vadd.f32 %v2984, %v3053
      %v3055 = vpop.f32.mrb[0].mxu0
      %3056 = vmatprep.mubr.bf16.mxu0 0
      %3057 = vmatmul.mubr.bf16.gmra.mrb[0].mxu0 %v3014
      %v3058 = vpop.f32.mrb[0].mxu0
      %v3059 = vadd.f32 %v2984, %v3058
      %v3060 = vpop.f32.mrb[0].mxu0
      %v3061 = vpop.f32.mrb[0].mxu0
      %v3062 = vpop.f32.mrb[0].mxu0
      %3063 = vdwg.mxu0
      %v3064 = vmul.f32 %v3051, 0.25
      %v3065 = vmul.f32 %v3054, 0.25
      %v3066 = vmul.f32 %v3059, 0.25
      %s3067 = scalar_lea.vmem %s8, 32
      %v3068 = vld [vmem:[%s3067] sm:$0xf]
      %v3069 = vld [vmem:[%s3067 + $0x4] sm:$0xf]
      %v3070 = vld [vmem:[%s3067 + $0x8] sm:$0xf]
      %v3071 = vld [vmem:[%s3067 + $0xc] sm:$0xf]
      %v3072 = vld [vmem:[%s3067 + $0x10] sm:$0xf]
      %v3073 = vld [vmem:[%s3067 + $0x14] sm:$0xf]
      %v3074 = vld [vmem:[%s3067 + $0x18] sm:$0xf]
      %v3075 = vld [vmem:[%s3067 + $0x1c] sm:$0xf]
      %s3076 = scalar_lea.vmem %s11, 1
      %v3077 = vld [vmem:[%s3076] sm:$0x1]
      %v3079 = vlaneseq
      %v3080 = vshrl.u32 %v3079, 7
      %v3081 = vsub.s32 0, %v3080
      %v3082 = vrot.slane %v3077, %v3081
      %v3092 = vunpack.c.l.b16 %v3068
      %v3093 = vunpack.c.l.b16 %v3069
      %v3094 = vunpack.c.l.b16 %v3070
      %v3095 = vunpack.c.l.b16 %v3071
      %v3096 = vunpack.c.l.b16 %v3072
      %v3097 = vunpack.c.l.b16 %v3073
      %v3098 = vunpack.c.l.b16 %v3074
      %v3099 = vunpack.c.l.b16 %v3075
      %v3100 = vpack.c.b16 %v3093, %v3092
      %v3101 = vpack.c.b16 %v3095, %v3094
      %v3102 = vpack.c.b16 %v3097, %v3096
      %v3103 = vpack.c.b16 %v3099, %v3098
      %3108 = vmatprep.subr.bf16.mxu0 0
      %3109 = vmatpush1.bf16.msra.mxu0 %v3100
      %3110 = vmatprep.subr.bf16.mxu0 0
      %3111 = vmatpush1.bf16.msra.mxu0 %v3101
      %3112 = vmatprep.subr.bf16.mxu0 0
      %3113 = vmatpush1.bf16.msra.mxu0 %v3102
      %3114 = vmatprep.subr.bf16.mxu0 0
      %3115 = vmatpush1.bf16.msra.mxu0 %v3103
      %3116 = vmatprep.subr.bf16.mxu0 0
      %3117 = vmatpush1.bf16.msra.mxu0 0
      %3118 = vmatprep.subr.bf16.mxu0 0
      %3119 = vmatpush1.bf16.msra.mxu0 0
      %3120 = vmatprep.subr.bf16.mxu0 0
      %3121 = vmatpush1.bf16.msra.mxu0 0
      %3122 = vmatprep.subr.bf16.mxu0 0
      %3123 = vmatpush1.bf16.msra.mxu0 0
      %3124 = vmatprep.subr.bf16.mxu0 0
      %3125 = vmatpush1.bf16.msra.mxu0 0
      %3126 = vmatprep.subr.bf16.mxu0 0
      %3127 = vmatpush1.bf16.msra.mxu0 0
      %3128 = vmatprep.subr.bf16.mxu0 0
      %3129 = vmatpush1.bf16.msra.mxu0 0
      %3130 = vmatprep.subr.bf16.mxu0 0
      %3131 = vmatpush1.bf16.msra.mxu0 0
      %3132 = vmatprep.subr.bf16.mxu0 0
      %3133 = vmatpush1.bf16.msra.mxu0 0
      %3134 = vmatprep.subr.bf16.mxu0 0
      %3135 = vmatpush1.bf16.msra.mxu0 0
      %3136 = vmatprep.subr.bf16.mxu0 0
      %3137 = vmatpush1.bf16.msra.mxu0 0
      %3138 = vmatprep.subr.bf16.mxu0 0
      %3139 = vmatpush1.bf16.msra.mxu0 0
      %3140 = vmatprep.mubr.bf16.mxu0 0
      %3141 = vmatmul.mubr.bf16.gmra.mrb[0].mxu0 %v3011
      %v3142 = vpop.f32.mrb[0].mxu0
      %v3143 = vadd.f32 %v3082, %v3142
      %v3144 = vpop.f32.mrb[0].mxu0
      %v3145 = vpop.f32.mrb[0].mxu0
      %v3146 = vadd.f32 %v3082, %v3145
      %v3147 = vpop.f32.mrb[0].mxu0
      %3148 = vmatprep.mubr.bf16.mxu0 0
      %3149 = vmatmul.mubr.bf16.gmra.mrb[0].mxu0 %v3014
      %v3150 = vpop.f32.mrb[0].mxu0
      %v3151 = vadd.f32 %v3082, %v3150
      %v3152 = vpop.f32.mrb[0].mxu0
      %v3153 = vpop.f32.mrb[0].mxu0
      %v3154 = vpop.f32.mrb[0].mxu0
      %3155 = vdwg.mxu0
      %s3156 = scalar_lea.vmem %s9, 32
      %v3157 = vld [vmem:[%s3156] sm:$0xf]
      %v3158 = vld [vmem:[%s3156 + $0x4] sm:$0xf]
      %v3159 = vld [vmem:[%s3156 + $0x8] sm:$0xf]
      %v3160 = vld [vmem:[%s3156 + $0xc] sm:$0xf]
      %v3161 = vld [vmem:[%s3156 + $0x10] sm:$0xf]
      %v3162 = vld [vmem:[%s3156 + $0x14] sm:$0xf]
      %v3163 = vld [vmem:[%s3156 + $0x18] sm:$0xf]
      %v3164 = vld [vmem:[%s3156 + $0x1c] sm:$0xf]
      %s3165 = scalar_lea.vmem %s12, 1
      %v3166 = vld [vmem:[%s3165] sm:$0x1]
      %v3168 = vlaneseq
      %v3169 = vshrl.u32 %v3168, 7
      %v3170 = vsub.s32 0, %v3169
      %v3171 = vrot.slane %v3166, %v3170
      %v3181 = vunpack.c.l.b16 %v3157
      %v3182 = vunpack.c.l.b16 %v3158
      %v3183 = vunpack.c.l.b16 %v3159
      %v3184 = vunpack.c.l.b16 %v3160
      %v3185 = vunpack.c.l.b16 %v3161
      %v3186 = vunpack.c.l.b16 %v3162
      %v3187 = vunpack.c.l.b16 %v3163
      %v3188 = vunpack.c.l.b16 %v3164
      %v3189 = vpack.c.b16 %v3182, %v3181
      %v3190 = vpack.c.b16 %v3184, %v3183
      %v3191 = vpack.c.b16 %v3186, %v3185
      %v3192 = vpack.c.b16 %v3188, %v3187
      %3197 = vmatprep.subr.bf16.mxu0 0
      %3198 = vmatpush1.bf16.msra.mxu0 %v3189
      %3199 = vmatprep.subr.bf16.mxu0 0
      %3200 = vmatpush1.bf16.msra.mxu0 %v3190
      %3201 = vmatprep.subr.bf16.mxu0 0
      %3202 = vmatpush1.bf16.msra.mxu0 %v3191
      %3203 = vmatprep.subr.bf16.mxu0 0
      %3204 = vmatpush1.bf16.msra.mxu0 %v3192
      %3205 = vmatprep.subr.bf16.mxu0 0
      %3206 = vmatpush1.bf16.msra.mxu0 0
      %3207 = vmatprep.subr.bf16.mxu0 0
      %3208 = vmatpush1.bf16.msra.mxu0 0
      %3209 = vmatprep.subr.bf16.mxu0 0
      %3210 = vmatpush1.bf16.msra.mxu0 0
      %3211 = vmatprep.subr.bf16.mxu0 0
      %3212 = vmatpush1.bf16.msra.mxu0 0
      %3213 = vmatprep.subr.bf16.mxu0 0
      %3214 = vmatpush1.bf16.msra.mxu0 0
      %3215 = vmatprep.subr.bf16.mxu0 0
      %3216 = vmatpush1.bf16.msra.mxu0 0
      %3217 = vmatprep.subr.bf16.mxu0 0
      %3218 = vmatpush1.bf16.msra.mxu0 0
      %3219 = vmatprep.subr.bf16.mxu0 0
      %3220 = vmatpush1.bf16.msra.mxu0 0
      %3221 = vmatprep.subr.bf16.mxu0 0
      %3222 = vmatpush1.bf16.msra.mxu0 0
      %3223 = vmatprep.subr.bf16.mxu0 0
      %3224 = vmatpush1.bf16.msra.mxu0 0
      %3225 = vmatprep.subr.bf16.mxu0 0
      %3226 = vmatpush1.bf16.msra.mxu0 0
      %3227 = vmatprep.subr.bf16.mxu0 0
      %3228 = vmatpush1.bf16.msra.mxu0 0
      %3229 = vmatprep.mubr.bf16.mxu0 0
      %3230 = vmatmul.mubr.bf16.gmra.mrb[0].mxu0 %v3011
      %v3231 = vpop.f32.mrb[0].mxu0
      %v3232 = vadd.f32 %v3171, %v3231
      %v3233 = vpop.f32.mrb[0].mxu0
      %v3234 = vpop.f32.mrb[0].mxu0
      %v3235 = vadd.f32 %v3171, %v3234
      %v3236 = vpop.f32.mrb[0].mxu0
      %3237 = vmatprep.mubr.bf16.mxu0 0
      %3238 = vmatmul.mubr.bf16.gmra.mrb[0].mxu0 %v3014
      %v3239 = vpop.f32.mrb[0].mxu0
      %v3240 = vadd.f32 %v3171, %v3239
      %v3241 = vpop.f32.mrb[0].mxu0
      %v3242 = vpop.f32.mrb[0].mxu0
      %v3243 = vpop.f32.mrb[0].mxu0
      %3244 = vdwg.mxu0
      %v3245 = vpack.c.bf16 %v3065, %v3064
      %v3246 = vpack.c.bf16 %v3066, %v3066
      %v3247 = vpack.c.bf16 %v3235, %v3232
      %v3248 = vpack.c.bf16 %v3240, %v3240
      %v3249 = vld [vmem:[%s3] sm:$0x1]
      %v3251 = vlaneseq
      %v3252 = vshrl.u32 %v3251, 7
      %v3253 = vsub.s32 0, %v3252
      %v3254 = vrot.slane %v3249, %v3253
      %v3256 = vmul.f32 %v3143, %v3254
      %v3257 = vmul.f32 %v3146, %v3254
      %v3258 = vmul.f32 %v3151, %v3254
      %v3259 = vpack.c.bf16 %v3257, %v3256
      %v3260 = vpack.c.bf16 %v3258, %v3258
      %v3262 = vsel %vm1418, %v3245, 0
      %v3265 = vsel %vm1418, %v3246, 0
      %v3268 = vsel %vm1418, %v3259, 0
      %v3271 = vsel %vm1418, %v3260, 0
      %3273 = vmatprep.subr.bf16.mxu0 0
      %3274 = vmatpush1.bf16.xpose.msra.mxu0 %v3268
      %3275 = vmatprep.subr.bf16.mxu0 0
      %3276 = vmatpush1.bf16.xpose.msra.mxu0 %v3271
      %3277 = vmatprep.subr.bf16.mxu0 0
      %3278 = vmatpush1.bf16.xpose.msra.mxu0 0
      %3279 = vmatprep.subr.bf16.mxu0 0
      %3280 = vmatpush1.bf16.xpose.msra.mxu0 0
      %3281 = vmatprep.subr.bf16.mxu0 0
      %3282 = vmatpush1.bf16.xpose.msra.mxu0 0
      %3283 = vmatprep.subr.bf16.mxu0 0
      %3284 = vmatpush1.bf16.xpose.msra.mxu0 0
      %3285 = vmatprep.subr.bf16.mxu0 0
      %3286 = vmatpush1.bf16.xpose.msra.mxu0 0
      %3287 = vmatprep.subr.bf16.mxu0 0
      %3288 = vmatpush1.bf16.xpose.msra.mxu0 0
      %3289 = vmatprep.subr.bf16.mxu0 0
      %3290 = vmatpush1.bf16.xpose.msra.mxu0 0
      %3291 = vmatprep.subr.bf16.mxu0 0
      %3292 = vmatpush1.bf16.xpose.msra.mxu0 0
      %3293 = vmatprep.subr.bf16.mxu0 0
      %3294 = vmatpush1.bf16.xpose.msra.mxu0 0
      %3295 = vmatprep.subr.bf16.mxu0 0
      %3296 = vmatpush1.bf16.xpose.msra.mxu0 0
      %3297 = vmatprep.subr.bf16.mxu0 0
      %3298 = vmatpush1.bf16.xpose.msra.mxu0 0
      %3299 = vmatprep.subr.bf16.mxu0 0
      %3300 = vmatpush1.bf16.xpose.msra.mxu0 0
      %3301 = vmatprep.subr.bf16.mxu0 0
      %3302 = vmatpush1.bf16.xpose.msra.mxu0 0
      %3303 = vmatprep.subr.bf16.mxu0 0
      %3304 = vmatpush1.bf16.xpose.msra.mxu0 0
      %3305 = vmatprep.mubr.bf16.mxu0 0
      %3306 = vmatmul.mubr.bf16.gmra.mrb[0].mxu0 %v3262
      %v3307 = vpop.f32.mrb[0].mxu0
      %v3308 = vadd.f32 %v1413, %v3307
      %v3309 = vpop.f32.mrb[0].mxu0
      %v3310 = vpop.f32.mrb[0].mxu0
      %v3311 = vadd.f32 %v1414, %v3310
      %v3312 = vpop.f32.mrb[0].mxu0
      %3313 = vmatprep.mubr.bf16.mxu0 0
      %3314 = vmatmul.mubr.bf16.gmra.mrb[0].mxu0 %v3265
      %v3315 = vpop.f32.mrb[0].mxu0
      %v3316 = vadd.f32 %v1415, %v3315
      %v3317 = vpop.f32.mrb[0].mxu0
      %v3318 = vpop.f32.mrb[0].mxu0
      %v3319 = vpop.f32.mrb[0].mxu0
      %3320 = vdwg.mxu0
      %v3321 = vsel %vm1826, %v3308, -inf
      %3322 = vmax.xlane.f32.xlu0 %v3321
      %v3323 = vpop.xlane.xlu0 %3322
      %v3324 = vsel %vm1826, %v3311, -inf
      %3325 = vmax.xlane.f32.xlu0 %v3324
      %v3326 = vpop.xlane.xlu0 %3325
      %v3327 = vsel %vm1833, %v3316, -inf
      %3328 = vmax.xlane.f32.xlu0 %v3327
      %v3329 = vpop.xlane.xlu0 %3328
      %v3330 = vsub.f32 %v3308, %v3323
      %v3331 = vsub.f32 %v3311, %v3326
      %v3332 = vsub.f32 %v3316, %v3329
      %v3333 = vmul.f32 %v3330, 1.442695
      %v3334 = vpow.pop %v3333
      %v3335 = vmul.f32 %v3331, 1.442695
      %v3336 = vpow.pop %v3335
      %v3337 = vmul.f32 %v3332, 1.442695
      %v3338 = vpow.pop %v3337
      %v3339 = vsel %vm1826, %v3334, 0.0
      %3340 = vadd.xlane.f32.xlu0 %v3339
      %v3341 = vpop.xlane.xlu0 %3340
      %v3342 = vsel %vm1826, %v3336, 0.0
      %3343 = vadd.xlane.f32.xlu0 %v3342
      %v3344 = vpop.xlane.xlu0 %3343
      %v3345 = vsel %vm1833, %v3338, 0.0
      %3346 = vadd.xlane.f32.xlu0 %v3345
      %v3347 = vpop.xlane.xlu0 %3346
      %v3348 = vrcp.pop %v3341
      %v3349 = vrcp.pop %v3344
      %v3350 = vrcp.pop %v3347
      %v3351 = vmul.f32 %v3334, %v3348
      %v3352 = vmul.f32 %v3336, %v3349
      %v3353 = vmul.f32 %v3338, %v3350
      %v3354 = vpack.c.bf16 %v3352, %v3351
      %v3355 = vpack.c.bf16 %v3353, %v3353
      %v3357 = vsel %vm1826, %v3354, 0
      %v3360 = vsel %vm1826, %v3355, 0
      %v3363 = vsel %vm1869, %v3248, 0
      %3365 = vmatprep.subr.bf16.mxu0 0
      %3366 = vmatpush1.bf16.msra.mxu0 %v3247
      %3367 = vmatprep.subr.bf16.mxu0 0
      %3368 = vmatpush1.bf16.msra.mxu0 %v3363
      %3369 = vmatprep.subr.bf16.mxu0 0
      %3370 = vmatpush1.bf16.msra.mxu0 0
      %3371 = vmatprep.subr.bf16.mxu0 0
      %3372 = vmatpush1.bf16.msra.mxu0 0
      %3373 = vmatprep.subr.bf16.mxu0 0
      %3374 = vmatpush1.bf16.msra.mxu0 0
      %3375 = vmatprep.subr.bf16.mxu0 0
      %3376 = vmatpush1.bf16.msra.mxu0 0
      %3377 = vmatprep.subr.bf16.mxu0 0
      %3378 = vmatpush1.bf16.msra.mxu0 0
      %3379 = vmatprep.subr.bf16.mxu0 0
      %3380 = vmatpush1.bf16.msra.mxu0 0
      %3381 = vmatprep.subr.bf16.mxu0 0
      %3382 = vmatpush1.bf16.msra.mxu0 0
      %3383 = vmatprep.subr.bf16.mxu0 0
      %3384 = vmatpush1.bf16.msra.mxu0 0
      %3385 = vmatprep.subr.bf16.mxu0 0
      %3386 = vmatpush1.bf16.msra.mxu0 0
      %3387 = vmatprep.subr.bf16.mxu0 0
      %3388 = vmatpush1.bf16.msra.mxu0 0
      %3389 = vmatprep.subr.bf16.mxu0 0
      %3390 = vmatpush1.bf16.msra.mxu0 0
      %3391 = vmatprep.subr.bf16.mxu0 0
      %3392 = vmatpush1.bf16.msra.mxu0 0
      %3393 = vmatprep.subr.bf16.mxu0 0
      %3394 = vmatpush1.bf16.msra.mxu0 0
      %3395 = vmatprep.subr.bf16.mxu0 0
      %3396 = vmatpush1.bf16.msra.mxu0 0
      %3397 = vmatprep.mubr.bf16.mxu0 0
      %3398 = vmatmul.mubr.bf16.gmra.mrb[0].mxu0 %v3357
      %v3399 = vpop.f32.mrb[0].mxu0
      %v3400 = vadd.f32 0.0, %v3399
      %v3401 = vpop.f32.mrb[0].mxu0
      %v3402 = vpop.f32.mrb[0].mxu0
      %v3403 = vadd.f32 0.0, %v3402
      %v3404 = vpop.f32.mrb[0].mxu0
      %3405 = vmatprep.mubr.bf16.mxu0 0
      %3406 = vmatmul.mubr.bf16.gmra.mrb[0].mxu0 %v3360
      %v3407 = vpop.f32.mrb[0].mxu0
      %v3408 = vadd.f32 0.0, %v3407
      %v3409 = vpop.f32.mrb[0].mxu0
      %v3410 = vpop.f32.mrb[0].mxu0
      %v3411 = vpop.f32.mrb[0].mxu0
      %3412 = vdwg.mxu0
      %v3413 = vmul.f32 %v3400, %v3254
      %v3414 = vmul.f32 %v3403, %v3254
      %v3415 = vmul.f32 %v3408, %v3254
      %v3416 = vld [vmem:[%s1924] sm:$0x1]
      %v3418 = vlaneseq
      %v3419 = vshrl.u32 %v3418, 7
      %v3420 = vsub.s32 0, %v3419
      %v3421 = vrot.slane %v3416, %v3420
      %v3423 = vmul.f32 %v3143, %v3421
      %v3424 = vmul.f32 %v3146, %v3421
      %v3425 = vmul.f32 %v3151, %v3421
      %v3426 = vpack.c.bf16 %v3424, %v3423
      %v3427 = vpack.c.bf16 %v3425, %v3425
      %v3429 = vsel %vm1418, %v3426, 0
      %v3432 = vsel %vm1418, %v3427, 0
      %3434 = vmatprep.subr.bf16.mxu0 0
      %3435 = vmatpush1.bf16.xpose.msra.mxu0 %v3429
      %3436 = vmatprep.subr.bf16.mxu0 0
      %3437 = vmatpush1.bf16.xpose.msra.mxu0 %v3432
      %3438 = vmatprep.subr.bf16.mxu0 0
      %3439 = vmatpush1.bf16.xpose.msra.mxu0 0
      %3440 = vmatprep.subr.bf16.mxu0 0
      %3441 = vmatpush1.bf16.xpose.msra.mxu0 0
      %3442 = vmatprep.subr.bf16.mxu0 0
      %3443 = vmatpush1.bf16.xpose.msra.mxu0 0
      %3444 = vmatprep.subr.bf16.mxu0 0
      %3445 = vmatpush1.bf16.xpose.msra.mxu0 0
      %3446 = vmatprep.subr.bf16.mxu0 0
      %3447 = vmatpush1.bf16.xpose.msra.mxu0 0
      %3448 = vmatprep.subr.bf16.mxu0 0
      %3449 = vmatpush1.bf16.xpose.msra.mxu0 0
      %3450 = vmatprep.subr.bf16.mxu0 0
      %3451 = vmatpush1.bf16.xpose.msra.mxu0 0
      %3452 = vmatprep.subr.bf16.mxu0 0
      %3453 = vmatpush1.bf16.xpose.msra.mxu0 0
      %3454 = vmatprep.subr.bf16.mxu0 0
      %3455 = vmatpush1.bf16.xpose.msra.mxu0 0
      %3456 = vmatprep.subr.bf16.mxu0 0
      %3457 = vmatpush1.bf16.xpose.msra.mxu0 0
      %3458 = vmatprep.subr.bf16.mxu0 0
      %3459 = vmatpush1.bf16.xpose.msra.mxu0 0
      %3460 = vmatprep.subr.bf16.mxu0 0
      %3461 = vmatpush1.bf16.xpose.msra.mxu0 0
      %3462 = vmatprep.subr.bf16.mxu0 0
      %3463 = vmatpush1.bf16.xpose.msra.mxu0 0
      %3464 = vmatprep.subr.bf16.mxu0 0
      %3465 = vmatpush1.bf16.xpose.msra.mxu0 0
      %3466 = vmatprep.mubr.bf16.mxu0 0
      %3467 = vmatmul.mubr.bf16.gmra.mrb[0].mxu0 %v3262
      %v3468 = vpop.f32.mrb[0].mxu0
      %v3469 = vadd.f32 %v1413, %v3468
      %v3470 = vpop.f32.mrb[0].mxu0
      %v3471 = vpop.f32.mrb[0].mxu0
      %v3472 = vadd.f32 %v1414, %v3471
      %v3473 = vpop.f32.mrb[0].mxu0
      %3474 = vmatprep.mubr.bf16.mxu0 0
      %3475 = vmatmul.mubr.bf16.gmra.mrb[0].mxu0 %v3265
      %v3476 = vpop.f32.mrb[0].mxu0
      %v3477 = vadd.f32 %v1415, %v3476
      %v3478 = vpop.f32.mrb[0].mxu0
      %v3479 = vpop.f32.mrb[0].mxu0
      %v3480 = vpop.f32.mrb[0].mxu0
      %3481 = vdwg.mxu0
      %v3482 = vsel %vm1826, %v3469, -inf
      %3483 = vmax.xlane.f32.xlu0 %v3482
      %v3484 = vpop.xlane.xlu0 %3483
      %v3485 = vsel %vm1826, %v3472, -inf
      %3486 = vmax.xlane.f32.xlu0 %v3485
      %v3487 = vpop.xlane.xlu0 %3486
      %v3488 = vsel %vm1833, %v3477, -inf
      %3489 = vmax.xlane.f32.xlu0 %v3488
      %v3490 = vpop.xlane.xlu0 %3489
      %v3491 = vsub.f32 %v3469, %v3484
      %v3492 = vsub.f32 %v3472, %v3487
      %v3493 = vsub.f32 %v3477, %v3490
      %v3494 = vmul.f32 %v3491, 1.442695
      %v3495 = vpow.pop %v3494
      %v3496 = vmul.f32 %v3492, 1.442695
      %v3497 = vpow.pop %v3496
      %v3498 = vmul.f32 %v3493, 1.442695
      %v3499 = vpow.pop %v3498
      %v3500 = vsel %vm1826, %v3495, 0.0
      %3501 = vadd.xlane.f32.xlu0 %v3500
      %v3502 = vpop.xlane.xlu0 %3501
      %v3503 = vsel %vm1826, %v3497, 0.0
      %3504 = vadd.xlane.f32.xlu0 %v3503
      %v3505 = vpop.xlane.xlu0 %3504
      %v3506 = vsel %vm1833, %v3499, 0.0
      %3507 = vadd.xlane.f32.xlu0 %v3506
      %v3508 = vpop.xlane.xlu0 %3507
      %v3509 = vrcp.pop %v3502
      %v3510 = vrcp.pop %v3505
      %v3511 = vrcp.pop %v3508
      %v3512 = vmul.f32 %v3495, %v3509
      %v3513 = vmul.f32 %v3497, %v3510
      %v3514 = vmul.f32 %v3499, %v3511
      %v3515 = vpack.c.bf16 %v3513, %v3512
      %v3516 = vpack.c.bf16 %v3514, %v3514
      %v3518 = vsel %vm1826, %v3515, 0
      %v3521 = vsel %vm1826, %v3516, 0
      %3523 = vmatprep.subr.bf16.mxu0 0
      %3524 = vmatpush1.bf16.msra.mxu0 %v3247
      %3525 = vmatprep.subr.bf16.mxu0 0
      %3526 = vmatpush1.bf16.msra.mxu0 %v3363
      %3527 = vmatprep.subr.bf16.mxu0 0
      %3528 = vmatpush1.bf16.msra.mxu0 0
      %3529 = vmatprep.subr.bf16.mxu0 0
      %3530 = vmatpush1.bf16.msra.mxu0 0
      %3531 = vmatprep.subr.bf16.mxu0 0
      %3532 = vmatpush1.bf16.msra.mxu0 0
      %3533 = vmatprep.subr.bf16.mxu0 0
      %3534 = vmatpush1.bf16.msra.mxu0 0
      %3535 = vmatprep.subr.bf16.mxu0 0
      %3536 = vmatpush1.bf16.msra.mxu0 0
      %3537 = vmatprep.subr.bf16.mxu0 0
      %3538 = vmatpush1.bf16.msra.mxu0 0
      %3539 = vmatprep.subr.bf16.mxu0 0
      %3540 = vmatpush1.bf16.msra.mxu0 0
      %3541 = vmatprep.subr.bf16.mxu0 0
      %3542 = vmatpush1.bf16.msra.mxu0 0
      %3543 = vmatprep.subr.bf16.mxu0 0
      %3544 = vmatpush1.bf16.msra.mxu0 0
      %3545 = vmatprep.subr.bf16.mxu0 0
      %3546 = vmatpush1.bf16.msra.mxu0 0
      %3547 = vmatprep.subr.bf16.mxu0 0
      %3548 = vmatpush1.bf16.msra.mxu0 0
      %3549 = vmatprep.subr.bf16.mxu0 0
      %3550 = vmatpush1.bf16.msra.mxu0 0
      %3551 = vmatprep.subr.bf16.mxu0 0
      %3552 = vmatpush1.bf16.msra.mxu0 0
      %3553 = vmatprep.subr.bf16.mxu0 0
      %3554 = vmatpush1.bf16.msra.mxu0 0
      %3555 = vmatprep.mubr.bf16.mxu0 0
      %3556 = vmatmul.mubr.bf16.gmra.mrb[0].mxu0 %v3518
      %v3557 = vpop.f32.mrb[0].mxu0
      %v3558 = vadd.f32 0.0, %v3557
      %v3559 = vpop.f32.mrb[0].mxu0
      %v3560 = vpop.f32.mrb[0].mxu0
      %v3561 = vadd.f32 0.0, %v3560
      %v3562 = vpop.f32.mrb[0].mxu0
      %3563 = vmatprep.mubr.bf16.mxu0 0
      %3564 = vmatmul.mubr.bf16.gmra.mrb[0].mxu0 %v3521
      %v3565 = vpop.f32.mrb[0].mxu0
      %v3566 = vadd.f32 0.0, %v3565
      %v3567 = vpop.f32.mrb[0].mxu0
      %v3568 = vpop.f32.mrb[0].mxu0
      %v3569 = vpop.f32.mrb[0].mxu0
      %3570 = vdwg.mxu0
      %v3571 = vmul.f32 %v3558, %v3421
      %v3572 = vmul.f32 %v3561, %v3421
      %v3573 = vmul.f32 %v3566, %v3421
      %v3574 = vadd.f32 %v3413, %v3571
      %v3575 = vadd.f32 %v3414, %v3572
      %v3576 = vadd.f32 %v3415, %v3573
      %v3577 = vld [vmem:[%s2086] sm:$0x1]
      %v3579 = vlaneseq
      %v3580 = vshrl.u32 %v3579, 7
      %v3581 = vsub.s32 0, %v3580
      %v3582 = vrot.slane %v3577, %v3581
      %v3584 = vmul.f32 %v3143, %v3582
      %v3585 = vmul.f32 %v3146, %v3582
      %v3586 = vmul.f32 %v3151, %v3582
      %v3587 = vpack.c.bf16 %v3585, %v3584
      %v3588 = vpack.c.bf16 %v3586, %v3586
      %v3590 = vsel %vm1418, %v3587, 0
      %v3593 = vsel %vm1418, %v3588, 0
      %3595 = vmatprep.subr.bf16.mxu0 0
      %3596 = vmatpush1.bf16.xpose.msra.mxu0 %v3590
      %3597 = vmatprep.subr.bf16.mxu0 0
      %3598 = vmatpush1.bf16.xpose.msra.mxu0 %v3593
      %3599 = vmatprep.subr.bf16.mxu0 0
      %3600 = vmatpush1.bf16.xpose.msra.mxu0 0
      %3601 = vmatprep.subr.bf16.mxu0 0
      %3602 = vmatpush1.bf16.xpose.msra.mxu0 0
      %3603 = vmatprep.subr.bf16.mxu0 0
      %3604 = vmatpush1.bf16.xpose.msra.mxu0 0
      %3605 = vmatprep.subr.bf16.mxu0 0
      %3606 = vmatpush1.bf16.xpose.msra.mxu0 0
      %3607 = vmatprep.subr.bf16.mxu0 0
      %3608 = vmatpush1.bf16.xpose.msra.mxu0 0
      %3609 = vmatprep.subr.bf16.mxu0 0
      %3610 = vmatpush1.bf16.xpose.msra.mxu0 0
      %3611 = vmatprep.subr.bf16.mxu0 0
      %3612 = vmatpush1.bf16.xpose.msra.mxu0 0
      %3613 = vmatprep.subr.bf16.mxu0 0
      %3614 = vmatpush1.bf16.xpose.msra.mxu0 0
      %3615 = vmatprep.subr.bf16.mxu0 0
      %3616 = vmatpush1.bf16.xpose.msra.mxu0 0
      %3617 = vmatprep.subr.bf16.mxu0 0
      %3618 = vmatpush1.bf16.xpose.msra.mxu0 0
      %3619 = vmatprep.subr.bf16.mxu0 0
      %3620 = vmatpush1.bf16.xpose.msra.mxu0 0
      %3621 = vmatprep.subr.bf16.mxu0 0
      %3622 = vmatpush1.bf16.xpose.msra.mxu0 0
      %3623 = vmatprep.subr.bf16.mxu0 0
      %3624 = vmatpush1.bf16.xpose.msra.mxu0 0
      %3625 = vmatprep.subr.bf16.mxu0 0
      %3626 = vmatpush1.bf16.xpose.msra.mxu0 0
      %3627 = vmatprep.mubr.bf16.mxu0 0
      %3628 = vmatmul.mubr.bf16.gmra.mrb[0].mxu0 %v3262
      %v3629 = vpop.f32.mrb[0].mxu0
      %v3630 = vadd.f32 %v1413, %v3629
      %v3631 = vpop.f32.mrb[0].mxu0
      %v3632 = vpop.f32.mrb[0].mxu0
      %v3633 = vadd.f32 %v1414, %v3632
      %v3634 = vpop.f32.mrb[0].mxu0
      %3635 = vmatprep.mubr.bf16.mxu0 0
      %3636 = vmatmul.mubr.bf16.gmra.mrb[0].mxu0 %v3265
      %v3637 = vpop.f32.mrb[0].mxu0
      %v3638 = vadd.f32 %v1415, %v3637
      %v3639 = vpop.f32.mrb[0].mxu0
      %v3640 = vpop.f32.mrb[0].mxu0
      %v3641 = vpop.f32.mrb[0].mxu0
      %3642 = vdwg.mxu0
      %v3643 = vsel %vm1826, %v3630, -inf
      %3644 = vmax.xlane.f32.xlu0 %v3643
      %v3645 = vpop.xlane.xlu0 %3644
      %v3646 = vsel %vm1826, %v3633, -inf
      %3647 = vmax.xlane.f32.xlu0 %v3646
      %v3648 = vpop.xlane.xlu0 %3647
      %v3649 = vsel %vm1833, %v3638, -inf
      %3650 = vmax.xlane.f32.xlu0 %v3649
      %v3651 = vpop.xlane.xlu0 %3650
      %v3652 = vsub.f32 %v3630, %v3645
      %v3653 = vsub.f32 %v3633, %v3648
      %v3654 = vsub.f32 %v3638, %v3651
      %v3655 = vmul.f32 %v3652, 1.442695
      %v3656 = vpow.pop %v3655
      %v3657 = vmul.f32 %v3653, 1.442695
      %v3658 = vpow.pop %v3657
      %v3659 = vmul.f32 %v3654, 1.442695
      %v3660 = vpow.pop %v3659
      %v3661 = vsel %vm1826, %v3656, 0.0
      %3662 = vadd.xlane.f32.xlu0 %v3661
      %v3663 = vpop.xlane.xlu0 %3662
      %v3664 = vsel %vm1826, %v3658, 0.0
      %3665 = vadd.xlane.f32.xlu0 %v3664
      %v3666 = vpop.xlane.xlu0 %3665
      %v3667 = vsel %vm1833, %v3660, 0.0
      %3668 = vadd.xlane.f32.xlu0 %v3667
      %v3669 = vpop.xlane.xlu0 %3668
      %v3670 = vrcp.pop %v3663
      %v3671 = vrcp.pop %v3666
      %v3672 = vrcp.pop %v3669
      %v3673 = vmul.f32 %v3656, %v3670
      %v3674 = vmul.f32 %v3658, %v3671
      %v3675 = vmul.f32 %v3660, %v3672
      %v3676 = vpack.c.bf16 %v3674, %v3673
      %v3677 = vpack.c.bf16 %v3675, %v3675
      %v3679 = vsel %vm1826, %v3676, 0
      %v3682 = vsel %vm1826, %v3677, 0
      %3684 = vmatprep.subr.bf16.mxu0 0
      %3685 = vmatpush1.bf16.msra.mxu0 %v3247
      %3686 = vmatprep.subr.bf16.mxu0 0
      %3687 = vmatpush1.bf16.msra.mxu0 %v3363
      %3688 = vmatprep.subr.bf16.mxu0 0
      %3689 = vmatpush1.bf16.msra.mxu0 0
      %3690 = vmatprep.subr.bf16.mxu0 0
      %3691 = vmatpush1.bf16.msra.mxu0 0
      %3692 = vmatprep.subr.bf16.mxu0 0
      %3693 = vmatpush1.bf16.msra.mxu0 0
      %3694 = vmatprep.subr.bf16.mxu0 0
      %3695 = vmatpush1.bf16.msra.mxu0 0
      %3696 = vmatprep.subr.bf16.mxu0 0
      %3697 = vmatpush1.bf16.msra.mxu0 0
      %3698 = vmatprep.subr.bf16.mxu0 0
      %3699 = vmatpush1.bf16.msra.mxu0 0
      %3700 = vmatprep.subr.bf16.mxu0 0
      %3701 = vmatpush1.bf16.msra.mxu0 0
      %3702 = vmatprep.subr.bf16.mxu0 0
      %3703 = vmatpush1.bf16.msra.mxu0 0
      %3704 = vmatprep.subr.bf16.mxu0 0
      %3705 = vmatpush1.bf16.msra.mxu0 0
      %3706 = vmatprep.subr.bf16.mxu0 0
      %3707 = vmatpush1.bf16.msra.mxu0 0
      %3708 = vmatprep.subr.bf16.mxu0 0
      %3709 = vmatpush1.bf16.msra.mxu0 0
      %3710 = vmatprep.subr.bf16.mxu0 0
      %3711 = vmatpush1.bf16.msra.mxu0 0
      %3712 = vmatprep.subr.bf16.mxu0 0
      %3713 = vmatpush1.bf16.msra.mxu0 0
      %3714 = vmatprep.subr.bf16.mxu0 0
      %3715 = vmatpush1.bf16.msra.mxu0 0
      %3716 = vmatprep.mubr.bf16.mxu0 0
      %3717 = vmatmul.mubr.bf16.gmra.mrb[0].mxu0 %v3679
      %v3718 = vpop.f32.mrb[0].mxu0
      %v3719 = vadd.f32 0.0, %v3718
      %v3720 = vpop.f32.mrb[0].mxu0
      %v3721 = vpop.f32.mrb[0].mxu0
      %v3722 = vadd.f32 0.0, %v3721
      %v3723 = vpop.f32.mrb[0].mxu0
      %3724 = vmatprep.mubr.bf16.mxu0 0
      %3725 = vmatmul.mubr.bf16.gmra.mrb[0].mxu0 %v3682
      %v3726 = vpop.f32.mrb[0].mxu0
      %v3727 = vadd.f32 0.0, %v3726
      %v3728 = vpop.f32.mrb[0].mxu0
      %v3729 = vpop.f32.mrb[0].mxu0
      %v3730 = vpop.f32.mrb[0].mxu0
      %3731 = vdwg.mxu0
      %v3732 = vmul.f32 %v3719, %v3582
      %v3733 = vmul.f32 %v3722, %v3582
      %v3734 = vmul.f32 %v3727, %v3582
      %v3735 = vadd.f32 %v3574, %v3732
      %v3736 = vadd.f32 %v3575, %v3733
      %v3737 = vadd.f32 %v3576, %v3734
      %v3738 = vld [vmem:[%s2248] sm:$0x1]
      %v3740 = vlaneseq
      %v3741 = vshrl.u32 %v3740, 7
      %v3742 = vsub.s32 0, %v3741
      %v3743 = vrot.slane %v3738, %v3742
      %v3745 = vmul.f32 %v3143, %v3743
      %v3746 = vmul.f32 %v3146, %v3743
      %v3747 = vmul.f32 %v3151, %v3743
      %v3748 = vpack.c.bf16 %v3746, %v3745
      %v3749 = vpack.c.bf16 %v3747, %v3747
      %v3751 = vsel %vm1418, %v3748, 0
      %v3754 = vsel %vm1418, %v3749, 0
      %3756 = vmatprep.subr.bf16.mxu0 0
      %3757 = vmatpush1.bf16.xpose.msra.mxu0 %v3751
      %3758 = vmatprep.subr.bf16.mxu0 0
      %3759 = vmatpush1.bf16.xpose.msra.mxu0 %v3754
      %3760 = vmatprep.subr.bf16.mxu0 0
      %3761 = vmatpush1.bf16.xpose.msra.mxu0 0
      %3762 = vmatprep.subr.bf16.mxu0 0
      %3763 = vmatpush1.bf16.xpose.msra.mxu0 0
      %3764 = vmatprep.subr.bf16.mxu0 0
      %3765 = vmatpush1.bf16.xpose.msra.mxu0 0
      %3766 = vmatprep.subr.bf16.mxu0 0
      %3767 = vmatpush1.bf16.xpose.msra.mxu0 0
      %3768 = vmatprep.subr.bf16.mxu0 0
      %3769 = vmatpush1.bf16.xpose.msra.mxu0 0
      %3770 = vmatprep.subr.bf16.mxu0 0
      %3771 = vmatpush1.bf16.xpose.msra.mxu0 0
      %3772 = vmatprep.subr.bf16.mxu0 0
      %3773 = vmatpush1.bf16.xpose.msra.mxu0 0
      %3774 = vmatprep.subr.bf16.mxu0 0
      %3775 = vmatpush1.bf16.xpose.msra.mxu0 0
      %3776 = vmatprep.subr.bf16.mxu0 0
      %3777 = vmatpush1.bf16.xpose.msra.mxu0 0
      %3778 = vmatprep.subr.bf16.mxu0 0
      %3779 = vmatpush1.bf16.xpose.msra.mxu0 0
      %3780 = vmatprep.subr.bf16.mxu0 0
      %3781 = vmatpush1.bf16.xpose.msra.mxu0 0
      %3782 = vmatprep.subr.bf16.mxu0 0
      %3783 = vmatpush1.bf16.xpose.msra.mxu0 0
      %3784 = vmatprep.subr.bf16.mxu0 0
      %3785 = vmatpush1.bf16.xpose.msra.mxu0 0
      %3786 = vmatprep.subr.bf16.mxu0 0
      %3787 = vmatpush1.bf16.xpose.msra.mxu0 0
      %3788 = vmatprep.mubr.bf16.mxu0 0
      %3789 = vmatmul.mubr.bf16.gmra.mrb[0].mxu0 %v3262
      %v3790 = vpop.f32.mrb[0].mxu0
      %v3791 = vadd.f32 %v1413, %v3790
      %v3792 = vpop.f32.mrb[0].mxu0
      %v3793 = vpop.f32.mrb[0].mxu0
      %v3794 = vadd.f32 %v1414, %v3793
      %v3795 = vpop.f32.mrb[0].mxu0
      %3796 = vmatprep.mubr.bf16.mxu0 0
      %3797 = vmatmul.mubr.bf16.gmra.mrb[0].mxu0 %v3265
      %v3798 = vpop.f32.mrb[0].mxu0
      %v3799 = vadd.f32 %v1415, %v3798
      %v3800 = vpop.f32.mrb[0].mxu0
      %v3801 = vpop.f32.mrb[0].mxu0
      %v3802 = vpop.f32.mrb[0].mxu0
      %3803 = vdwg.mxu0
      %v3804 = vsel %vm1826, %v3791, -inf
      %3805 = vmax.xlane.f32.xlu0 %v3804
      %v3806 = vpop.xlane.xlu0 %3805
      %v3807 = vsel %vm1826, %v3794, -inf
      %3808 = vmax.xlane.f32.xlu0 %v3807
      %v3809 = vpop.xlane.xlu0 %3808
      %v3810 = vsel %vm1833, %v3799, -inf
      %3811 = vmax.xlane.f32.xlu0 %v3810
      %v3812 = vpop.xlane.xlu0 %3811
      %v3813 = vsub.f32 %v3791, %v3806
      %v3814 = vsub.f32 %v3794, %v3809
      %v3815 = vsub.f32 %v3799, %v3812
      %v3816 = vmul.f32 %v3813, 1.442695
      %v3817 = vpow.pop %v3816
      %v3818 = vmul.f32 %v3814, 1.442695
      %v3819 = vpow.pop %v3818
      %v3820 = vmul.f32 %v3815, 1.442695
      %v3821 = vpow.pop %v3820
      %v3822 = vsel %vm1826, %v3817, 0.0
      %3823 = vadd.xlane.f32.xlu0 %v3822
      %v3824 = vpop.xlane.xlu0 %3823
      %v3825 = vsel %vm1826, %v3819, 0.0
      %3826 = vadd.xlane.f32.xlu0 %v3825
      %v3827 = vpop.xlane.xlu0 %3826
      %v3828 = vsel %vm1833, %v3821, 0.0
      %3829 = vadd.xlane.f32.xlu0 %v3828
      %v3830 = vpop.xlane.xlu0 %3829
      %v3831 = vrcp.pop %v3824
      %v3832 = vrcp.pop %v3827
      %v3833 = vrcp.pop %v3830
      %v3834 = vmul.f32 %v3817, %v3831
      %v3835 = vmul.f32 %v3819, %v3832
      %v3836 = vmul.f32 %v3821, %v3833
      %v3837 = vpack.c.bf16 %v3835, %v3834
      %v3838 = vpack.c.bf16 %v3836, %v3836
      %v3840 = vsel %vm1826, %v3837, 0
      %v3843 = vsel %vm1826, %v3838, 0
      %3845 = vmatprep.subr.bf16.mxu0 0
      %3846 = vmatpush1.bf16.msra.mxu0 %v3247
      %3847 = vmatprep.subr.bf16.mxu0 0
      %3848 = vmatpush1.bf16.msra.mxu0 %v3363
      %3849 = vmatprep.subr.bf16.mxu0 0
      %3850 = vmatpush1.bf16.msra.mxu0 0
      %3851 = vmatprep.subr.bf16.mxu0 0
      %3852 = vmatpush1.bf16.msra.mxu0 0
      %3853 = vmatprep.subr.bf16.mxu0 0
      %3854 = vmatpush1.bf16.msra.mxu0 0
      %3855 = vmatprep.subr.bf16.mxu0 0
      %3856 = vmatpush1.bf16.msra.mxu0 0
      %3857 = vmatprep.subr.bf16.mxu0 0
      %3858 = vmatpush1.bf16.msra.mxu0 0
      %3859 = vmatprep.subr.bf16.mxu0 0
      %3860 = vmatpush1.bf16.msra.mxu0 0
      %3861 = vmatprep.subr.bf16.mxu0 0
      %3862 = vmatpush1.bf16.msra.mxu0 0
      %3863 = vmatprep.subr.bf16.mxu0 0
      %3864 = vmatpush1.bf16.msra.mxu0 0
      %3865 = vmatprep.subr.bf16.mxu0 0
      %3866 = vmatpush1.bf16.msra.mxu0 0
      %3867 = vmatprep.subr.bf16.mxu0 0
      %3868 = vmatpush1.bf16.msra.mxu0 0
      %3869 = vmatprep.subr.bf16.mxu0 0
      %3870 = vmatpush1.bf16.msra.mxu0 0
      %3871 = vmatprep.subr.bf16.mxu0 0
      %3872 = vmatpush1.bf16.msra.mxu0 0
      %3873 = vmatprep.subr.bf16.mxu0 0
      %3874 = vmatpush1.bf16.msra.mxu0 0
      %3875 = vmatprep.subr.bf16.mxu0 0
      %3876 = vmatpush1.bf16.msra.mxu0 0
      %3877 = vmatprep.mubr.bf16.mxu0 0
      %3878 = vmatmul.mubr.bf16.gmra.mrb[0].mxu0 %v3840
      %v3879 = vpop.f32.mrb[0].mxu0
      %v3880 = vadd.f32 0.0, %v3879
      %v3881 = vpop.f32.mrb[0].mxu0
      %v3882 = vpop.f32.mrb[0].mxu0
      %v3883 = vadd.f32 0.0, %v3882
      %v3884 = vpop.f32.mrb[0].mxu0
      %3885 = vmatprep.mubr.bf16.mxu0 0
      %3886 = vmatmul.mubr.bf16.gmra.mrb[0].mxu0 %v3843
      %v3887 = vpop.f32.mrb[0].mxu0
      %v3888 = vadd.f32 0.0, %v3887
      %v3889 = vpop.f32.mrb[0].mxu0
      %v3890 = vpop.f32.mrb[0].mxu0
      %v3891 = vpop.f32.mrb[0].mxu0
      %3892 = vdwg.mxu0
      %v3893 = vmul.f32 %v3880, %v3743
      %v3894 = vmul.f32 %v3883, %v3743
      %v3895 = vmul.f32 %v3888, %v3743
      %v3896 = vadd.f32 %v3735, %v3893
      %v3897 = vadd.f32 %v3736, %v3894
      %v3898 = vadd.f32 %v3737, %v3895
      %v3899 = vpack.c.bf16 %v3897, %v3896
      %v3900 = vpack.c.bf16 %v3898, %v3898
      %s3901 = scalar_lea.vmem %s13, 32
      %v3902 = vld [vmem:[%s3901] sm:$0xf]
      %v3903 = vld [vmem:[%s3901 + $0x4] sm:$0xf]
      %v3904 = vld [vmem:[%s3901 + $0x8] sm:$0xf]
      %v3905 = vld [vmem:[%s3901 + $0xc] sm:$0xf]
      %v3906 = vld [vmem:[%s3901 + $0x10] sm:$0xf]
      %v3907 = vld [vmem:[%s3901 + $0x14] sm:$0xf]
      %v3908 = vld [vmem:[%s3901 + $0x18] sm:$0xf]
      %v3909 = vld [vmem:[%s3901 + $0x1c] sm:$0xf]
      %s3910 = scalar_lea.vmem %s14, 1
      %v3911 = vld [vmem:[%s3910] sm:$0x1]
      %v3913 = vlaneseq
      %v3914 = vshrl.u32 %v3913, 7
      %v3915 = vsub.s32 0, %v3914
      %v3916 = vrot.slane %v3911, %v3915
      %v3926 = vunpack.c.l.b16 %v3902
      %v3927 = vunpack.c.l.b16 %v3903
      %v3928 = vunpack.c.l.b16 %v3904
      %v3929 = vunpack.c.l.b16 %v3905
      %v3930 = vunpack.c.l.b16 %v3906
      %v3931 = vunpack.c.l.b16 %v3907
      %v3932 = vunpack.c.l.b16 %v3908
      %v3933 = vunpack.c.l.b16 %v3909
      %v3934 = vpack.c.b16 %v3927, %v3926
      %v3935 = vpack.c.b16 %v3929, %v3928
      %v3936 = vpack.c.b16 %v3931, %v3930
      %v3937 = vpack.c.b16 %v3933, %v3932
      %v3943 = vsel %vm1418, %v3899, 0
      %v3946 = vsel %vm1418, %v3900, 0
      %3948 = vmatprep.subr.bf16.mxu0 0
      %3949 = vmatpush1.bf16.msra.mxu0 %v3934
      %3950 = vmatprep.subr.bf16.mxu0 0
      %3951 = vmatpush1.bf16.msra.mxu0 %v3935
      %3952 = vmatprep.subr.bf16.mxu0 0
      %3953 = vmatpush1.bf16.msra.mxu0 %v3936
      %3954 = vmatprep.subr.bf16.mxu0 0
      %3955 = vmatpush1.bf16.msra.mxu0 %v3937
      %3956 = vmatprep.subr.bf16.mxu0 0
      %3957 = vmatpush1.bf16.msra.mxu0 0
      %3958 = vmatprep.subr.bf16.mxu0 0
      %3959 = vmatpush1.bf16.msra.mxu0 0
      %3960 = vmatprep.subr.bf16.mxu0 0
      %3961 = vmatpush1.bf16.msra.mxu0 0
      %3962 = vmatprep.subr.bf16.mxu0 0
      %3963 = vmatpush1.bf16.msra.mxu0 0
      %3964 = vmatprep.subr.bf16.mxu0 0
      %3965 = vmatpush1.bf16.msra.mxu0 0
      %3966 = vmatprep.subr.bf16.mxu0 0
      %3967 = vmatpush1.bf16.msra.mxu0 0
      %3968 = vmatprep.subr.bf16.mxu0 0
      %3969 = vmatpush1.bf16.msra.mxu0 0
      %3970 = vmatprep.subr.bf16.mxu0 0
      %3971 = vmatpush1.bf16.msra.mxu0 0
      %3972 = vmatprep.subr.bf16.mxu0 0
      %3973 = vmatpush1.bf16.msra.mxu0 0
      %3974 = vmatprep.subr.bf16.mxu0 0
      %3975 = vmatpush1.bf16.msra.mxu0 0
      %3976 = vmatprep.subr.bf16.mxu0 0
      %3977 = vmatpush1.bf16.msra.mxu0 0
      %3978 = vmatprep.subr.bf16.mxu0 0
      %3979 = vmatpush1.bf16.msra.mxu0 0
      %3980 = vmatprep.mubr.bf16.mxu0 0
      %3981 = vmatmul.mubr.bf16.gmra.mrb[0].mxu0 %v3943
      %v3982 = vpop.f32.mrb[0].mxu0
      %v3983 = vadd.f32 %v3916, %v3982
      %v3984 = vpop.f32.mrb[0].mxu0
      %v3985 = vpop.f32.mrb[0].mxu0
      %v3986 = vadd.f32 %v3916, %v3985
      %v3987 = vpop.f32.mrb[0].mxu0
      %3988 = vmatprep.mubr.bf16.mxu0 0
      %3989 = vmatmul.mubr.bf16.gmra.mrb[0].mxu0 %v3946
      %v3990 = vpop.f32.mrb[0].mxu0
      %v3991 = vadd.f32 %v3916, %v3990
      %v3992 = vpop.f32.mrb[0].mxu0
      %v3993 = vpop.f32.mrb[0].mxu0
      %v3994 = vpop.f32.mrb[0].mxu0
      %3995 = vdwg.mxu0
      %v3996 = vadd.f32 %v2903, %v3983
      %v3997 = vadd.f32 %v2904, %v3986
      %v3998 = vadd.f32 %v2905, %v3991
      %s3999 = scalar_lea.vmem %s15, 1
      %v4000 = vld [vmem:[%s3999] sm:$0x1]
      %s4001 = scalar_lea.vmem %s16, 1
      %v4002 = vld [vmem:[%s4001] sm:$0x1]
      %v4003 = vsel %vm1418, %v3996, 0.0
      %4004 = vadd.xlane.f32.xlu0 %v4003
      %v4005 = vpop.xlane.xlu0 %4004
      %v4006 = vsel %vm1418, %v3997, 0.0
      %4007 = vadd.xlane.f32.xlu0 %v4006
      %v4008 = vpop.xlane.xlu0 %4007
      %v4009 = vsel %vm1425, %v3998, 0.0
      %4010 = vadd.xlane.f32.xlu0 %v4009
      %v4011 = vpop.xlane.xlu0 %4010
      %v4012 = vmul.f32 %v4005, %v1429
      %v4013 = vmul.f32 %v4008, %v1429
      %v4014 = vmul.f32 %v4011, %v1429
      %v4015 = vsub.f32 %v3996, %v4012
      %v4016 = vsub.f32 %v3997, %v4013
      %v4017 = vsub.f32 %v3998, %v4014
      %v4018 = vmul.f32 %v4015, %v4015
      %v4019 = vmul.f32 %v4016, %v4016
      %v4020 = vmul.f32 %v4017, %v4017
      %v4021 = vsel %vm1418, %v4018, 0.0
      %4022 = vadd.xlane.f32.xlu0 %v4021
      %v4023 = vpop.xlane.xlu0 %4022
      %v4024 = vsel %vm1418, %v4019, 0.0
      %4025 = vadd.xlane.f32.xlu0 %v4024
      %v4026 = vpop.xlane.xlu0 %4025
      %v4027 = vsel %vm1425, %v4020, 0.0
      %4028 = vadd.xlane.f32.xlu0 %v4027
      %v4029 = vpop.xlane.xlu0 %4028
      %v4030 = vmul.f32 %v4023, %v1429
      %v4031 = vmul.f32 %v4026, %v1429
      %v4032 = vmul.f32 %v4029, %v1429
      %v4033 = vadd.f32 %v4030, 1e-06
      %v4034 = vadd.f32 %v4031, 1e-06
      %v4035 = vadd.f32 %v4032, 1e-06
      %v4036 = vrsqrt.pop %v4033
      %v4037 = vrsqrt.pop %v4034
      %v4038 = vrsqrt.pop %v4035
      %v4039 = vmul.f32 %v4015, %v4036
      %v4040 = vmul.f32 %v4016, %v4037
      %v4041 = vmul.f32 %v4017, %v4038
      %v4043 = vlaneseq
      %v4044 = vshrl.u32 %v4043, 7
      %v4045 = vsub.s32 0, %v4044
      %v4046 = vrot.slane %v4000, %v4045
      %v4048 = vmul.f32 %v4039, %v4046
      %v4049 = vmul.f32 %v4040, %v4046
      %v4050 = vmul.f32 %v4041, %v4046
      %v4052 = vlaneseq
      %v4053 = vshrl.u32 %v4052, 7
      %v4054 = vsub.s32 0, %v4053
      %v4055 = vrot.slane %v4002, %v4054
      %v4057 = vadd.f32 %v4048, %v4055
      %v4058 = vadd.f32 %v4049, %v4055
      %v4059 = vadd.f32 %v4050, %v4055
      %v4060 = vpack.c.bf16 %v4058, %v4057
      %v4061 = vpack.c.bf16 %v4059, %v4059
      %s4062 = scalar_lea.vmem %s17, 64
      %v4063 = vld [vmem:[%s4062] sm:$0xff]
      %v4064 = vld [vmem:[%s4062 + $0x8] sm:$0xff]
      %v4065 = vld [vmem:[%s4062 + $0x10] sm:$0xff]
      %v4066 = vld [vmem:[%s4062 + $0x18] sm:$0xff]
      %v4067 = vld [vmem:[%s4062 + $0x20] sm:$0xff]
      %v4068 = vld [vmem:[%s4062 + $0x28] sm:$0xff]
      %v4069 = vld [vmem:[%s4062 + $0x30] sm:$0xff]
      %v4070 = vld [vmem:[%s4062 + $0x38] sm:$0xff]
      %s4071 = scalar_lea.vmem %s18, 2
      %v4072 = vld [vmem:[%s4071] sm:$0x3]
      %v4074 = vlaneseq
      %v4075 = vshrl.u32 %v4074, 7
      %v4076 = vsub.s32 0, %v4075
      %v4077 = vrot.slane %v4072, %v4076
      %v4078 = vlaneseq
      %v4079 = vshrl.u32 %v4078, 7
      %v4080 = vsub.s32 1, %v4079
      %v4081 = vrot.slane %v4072, %v4080
      %v4092 = vunpack.c.l.b16 %v4063
      %v4093 = vunpack.c.h.b16 %v4063
      %v4094 = vunpack.c.l.b16 %v4064
      %v4095 = vunpack.c.h.b16 %v4064
      %v4096 = vunpack.c.l.b16 %v4065
      %v4097 = vunpack.c.h.b16 %v4065
      %v4098 = vunpack.c.l.b16 %v4066
      %v4099 = vunpack.c.h.b16 %v4066
      %v4100 = vunpack.c.l.b16 %v4067
      %v4101 = vunpack.c.h.b16 %v4067
      %v4102 = vunpack.c.l.b16 %v4068
      %v4103 = vunpack.c.h.b16 %v4068
      %v4104 = vunpack.c.l.b16 %v4069
      %v4105 = vunpack.c.h.b16 %v4069
      %v4106 = vunpack.c.l.b16 %v4070
      %v4107 = vunpack.c.h.b16 %v4070
      %v4108 = vpack.c.b16 %v4094, %v4092
      %v4109 = vpack.c.b16 %v4095, %v4093
      %v4110 = vpack.c.b16 %v4098, %v4096
      %v4111 = vpack.c.b16 %v4099, %v4097
      %v4112 = vpack.c.b16 %v4102, %v4100
      %v4113 = vpack.c.b16 %v4103, %v4101
      %v4114 = vpack.c.b16 %v4106, %v4104
      %v4115 = vpack.c.b16 %v4107, %v4105
      %v4125 = vsel %vm1418, %v4060, 0
      %v4128 = vsel %vm1418, %v4061, 0
      %4130 = vmatprep.subr.bf16.mxu0 %v4109
      %4131 = vmatpush1.bf16.msra.mxu0 %v4108
      %4132 = vmatprep.subr.bf16.mxu0 %v4111
      %4133 = vmatpush1.bf16.msra.mxu0 %v4110
      %4134 = vmatprep.subr.bf16.mxu0 %v4113
      %4135 = vmatpush1.bf16.msra.mxu0 %v4112
      %4136 = vmatprep.subr.bf16.mxu0 %v4115
      %4137 = vmatpush1.bf16.msra.mxu0 %v4114
      %4138 = vmatprep.subr.bf16.mxu0 0
      %4139 = vmatpush1.bf16.msra.mxu0 0
      %4140 = vmatprep.subr.bf16.mxu0 0
      %4141 = vmatpush1.bf16.msra.mxu0 0
      %4142 = vmatprep.subr.bf16.mxu0 0
      %4143 = vmatpush1.bf16.msra.mxu0 0
      %4144 = vmatprep.subr.bf16.mxu0 0
      %4145 = vmatpush1.bf16.msra.mxu0 0
      %4146 = vmatprep.subr.bf16.mxu0 0
      %4147 = vmatpush1.bf16.msra.mxu0 0
      %4148 = vmatprep.subr.bf16.mxu0 0
      %4149 = vmatpush1.bf16.msra.mxu0 0
      %4150 = vmatprep.subr.bf16.mxu0 0
      %4151 = vmatpush1.bf16.msra.mxu0 0
      %4152 = vmatprep.subr.bf16.mxu0 0
      %4153 = vmatpush1.bf16.msra.mxu0 0
      %4154 = vmatprep.subr.bf16.mxu0 0
      %4155 = vmatpush1.bf16.msra.mxu0 0
      %4156 = vmatprep.subr.bf16.mxu0 0
      %4157 = vmatpush1.bf16.msra.mxu0 0
      %4158 = vmatprep.subr.bf16.mxu0 0
      %4159 = vmatpush1.bf16.msra.mxu0 0
      %4160 = vmatprep.subr.bf16.mxu0 0
      %4161 = vmatpush1.bf16.msra.mxu0 0
      %4162 = vmatprep.mubr.bf16.mxu0 0
      %4163 = vmatmul.mubr.bf16.gmra.mrb[0].mxu0 %v4125
      %v4164 = vpop.f32.mrb[0].mxu0
      %v4165 = vadd.f32 %v4077, %v4164
      %v4166 = vpop.f32.mrb[0].mxu0
      %v4167 = vadd.f32 %v4081, %v4166
      %v4168 = vpop.f32.mrb[0].mxu0
      %v4169 = vadd.f32 %v4077, %v4168
      %v4170 = vpop.f32.mrb[0].mxu0
      %v4171 = vadd.f32 %v4081, %v4170
      %4172 = vmatprep.mubr.bf16.mxu0 0
      %4173 = vmatmul.mubr.bf16.gmra.mrb[0].mxu0 %v4128
      %v4174 = vpop.f32.mrb[0].mxu0
      %v4175 = vadd.f32 %v4077, %v4174
      %v4176 = vpop.f32.mrb[0].mxu0
      %v4177 = vadd.f32 %v4081, %v4176
      %v4178 = vpop.f32.mrb[0].mxu0
      %v4179 = vpop.f32.mrb[0].mxu0
      %4180 = vdwg.mxu0
      %v4181 = vmul.f32 %v4165, 0.5
      %v4182 = vmul.f32 %v4167, 0.5
      %v4183 = vmul.f32 %v4169, 0.5
      %v4184 = vmul.f32 %v4171, 0.5
      %v4185 = vmul.f32 %v4175, 0.5
      %v4186 = vmul.f32 %v4177, 0.5
      %v4187 = vmul.f32 %v4165, 0.70710677
      %v4188 = vmul.f32 %v4167, 0.70710677
      %v4189 = vmul.f32 %v4169, 0.70710677
      %v4190 = vmul.f32 %v4171, 0.70710677
      %v4191 = vmul.f32 %v4175, 0.70710677
      %v4192 = vmul.f32 %v4177, 0.70710677
      %v4193 = verf.f32.pop %v4187
      %v4194 = verf.f32.pop %v4188
      %v4195 = verf.f32.pop %v4189
      %v4196 = verf.f32.pop %v4190
      %v4197 = verf.f32.pop %v4191
      %v4198 = verf.f32.pop %v4192
      %v4199 = vadd.f32 %v4193, 1.0
      %v4200 = vadd.f32 %v4194, 1.0
      %v4201 = vadd.f32 %v4195, 1.0
      %v4202 = vadd.f32 %v4196, 1.0
      %v4203 = vadd.f32 %v4197, 1.0
      %v4204 = vadd.f32 %v4198, 1.0
      %v4205 = vmul.f32 %v4181, %v4199
      %v4206 = vmul.f32 %v4182, %v4200
      %v4207 = vmul.f32 %v4183, %v4201
      %v4208 = vmul.f32 %v4184, %v4202
      %v4209 = vmul.f32 %v4185, %v4203
      %v4210 = vmul.f32 %v4186, %v4204
      %v4211 = vpack.c.bf16 %v4207, %v4205
      %v4212 = vpack.c.bf16 %v4208, %v4206
      %v4213 = vpack.c.bf16 %v4209, %v4209
      %v4214 = vpack.c.bf16 %v4210, %v4210
      %s4215 = scalar_lea.vmem %s19, 128
      %v4216 = vld [vmem:[%s4215] sm:$0xf]
      %v4217 = vld [vmem:[%s4215 + $0x4] sm:$0xf]
      %v4218 = vld [vmem:[%s4215 + $0x8] sm:$0xf]
      %v4219 = vld [vmem:[%s4215 + $0xc] sm:$0xf]
      %v4220 = vld [vmem:[%s4215 + $0x10] sm:$0xf]
      %v4221 = vld [vmem:[%s4215 + $0x14] sm:$0xf]
      %v4222 = vld [vmem:[%s4215 + $0x18] sm:$0xf]
      %v4223 = vld [vmem:[%s4215 + $0x1c] sm:$0xf]
      %v4224 = vld [vmem:[%s4215 + $0x20] sm:$0xf]
      %v4225 = vld [vmem:[%s4215 + $0x24] sm:$0xf]
      %v4226 = vld [vmem:[%s4215 + $0x28] sm:$0xf]
      %v4227 = vld [vmem:[%s4215 + $0x2c] sm:$0xf]
      %v4228 = vld [vmem:[%s4215 + $0x30] sm:$0xf]
      %v4229 = vld [vmem:[%s4215 + $0x34] sm:$0xf]
      %v4230 = vld [vmem:[%s4215 + $0x38] sm:$0xf]
      %v4231 = vld [vmem:[%s4215 + $0x3c] sm:$0xf]
      %v4232 = vld [vmem:[%s4215 + $0x40] sm:$0xf]
      %v4233 = vld [vmem:[%s4215 + $0x44] sm:$0xf]
      %v4234 = vld [vmem:[%s4215 + $0x48] sm:$0xf]
      %v4235 = vld [vmem:[%s4215 + $0x4c] sm:$0xf]
      %v4236 = vld [vmem:[%s4215 + $0x50] sm:$0xf]
      %v4237 = vld [vmem:[%s4215 + $0x54] sm:$0xf]
      %v4238 = vld [vmem:[%s4215 + $0x58] sm:$0xf]
      %v4239 = vld [vmem:[%s4215 + $0x5c] sm:$0xf]
      %v4240 = vld [vmem:[%s4215 + $0x60] sm:$0xf]
      %v4241 = vld [vmem:[%s4215 + $0x64] sm:$0xf]
      %v4242 = vld [vmem:[%s4215 + $0x68] sm:$0xf]
      %v4243 = vld [vmem:[%s4215 + $0x6c] sm:$0xf]
      %v4244 = vld [vmem:[%s4215 + $0x70] sm:$0xf]
      %v4245 = vld [vmem:[%s4215 + $0x74] sm:$0xf]
      %v4246 = vld [vmem:[%s4215 + $0x78] sm:$0xf]
      %v4247 = vld [vmem:[%s4215 + $0x7c] sm:$0xf]
      %s4248 = scalar_lea.vmem %s20, 1
      %v4249 = vld [vmem:[%s4248] sm:$0x1]
      %v4251 = vlaneseq
      %v4252 = vshrl.u32 %v4251, 7
      %v4253 = vsub.s32 0, %v4252
      %v4254 = vrot.slane %v4249, %v4253
      %v4288 = vunpack.c.l.b16 %v4216
      %v4289 = vunpack.c.l.b16 %v4217
      %v4290 = vunpack.c.l.b16 %v4218
      %v4291 = vunpack.c.l.b16 %v4219
      %v4292 = vunpack.c.l.b16 %v4220
      %v4293 = vunpack.c.l.b16 %v4221
      %v4294 = vunpack.c.l.b16 %v4222
      %v4295 = vunpack.c.l.b16 %v4223
      %v4296 = vunpack.c.l.b16 %v4224
      %v4297 = vunpack.c.l.b16 %v4225
      %v4298 = vunpack.c.l.b16 %v4226
      %v4299 = vunpack.c.l.b16 %v4227
      %v4300 = vunpack.c.l.b16 %v4228
      %v4301 = vunpack.c.l.b16 %v4229
      %v4302 = vunpack.c.l.b16 %v4230
      %v4303 = vunpack.c.l.b16 %v4231
      %v4304 = vunpack.c.l.b16 %v4232
      %v4305 = vunpack.c.l.b16 %v4233
      %v4306 = vunpack.c.l.b16 %v4234
      %v4307 = vunpack.c.l.b16 %v4235
      %v4308 = vunpack.c.l.b16 %v4236
      %v4309 = vunpack.c.l.b16 %v4237
      %v4310 = vunpack.c.l.b16 %v4238
      %v4311 = vunpack.c.l.b16 %v4239
      %v4312 = vunpack.c.l.b16 %v4240
      %v4313 = vunpack.c.l.b16 %v4241
      %v4314 = vunpack.c.l.b16 %v4242
      %v4315 = vunpack.c.l.b16 %v4243
      %v4316 = vunpack.c.l.b16 %v4244
      %v4317 = vunpack.c.l.b16 %v4245
      %v4318 = vunpack.c.l.b16 %v4246
      %v4319 = vunpack.c.l.b16 %v4247
      %v4320 = vpack.c.b16 %v4289, %v4288
      %v4321 = vpack.c.b16 %v4291, %v4290
      %v4322 = vpack.c.b16 %v4293, %v4292
      %v4323 = vpack.c.b16 %v4295, %v4294
      %v4324 = vpack.c.b16 %v4297, %v4296
      %v4325 = vpack.c.b16 %v4299, %v4298
      %v4326 = vpack.c.b16 %v4301, %v4300
      %v4327 = vpack.c.b16 %v4303, %v4302
      %v4328 = vpack.c.b16 %v4305, %v4304
      %v4329 = vpack.c.b16 %v4307, %v4306
      %v4330 = vpack.c.b16 %v4309, %v4308
      %v4331 = vpack.c.b16 %v4311, %v4310
      %v4332 = vpack.c.b16 %v4313, %v4312
      %v4333 = vpack.c.b16 %v4315, %v4314
      %v4334 = vpack.c.b16 %v4317, %v4316
      %v4335 = vpack.c.b16 %v4319, %v4318
      %4352 = vmatprep.subr.bf16.mxu0 0
      %4353 = vmatpush1.bf16.msra.mxu0 %v4320
      %4354 = vmatprep.subr.bf16.mxu0 0
      %4355 = vmatpush1.bf16.msra.mxu0 %v4321
      %4356 = vmatprep.subr.bf16.mxu0 0
      %4357 = vmatpush1.bf16.msra.mxu0 %v4322
      %4358 = vmatprep.subr.bf16.mxu0 0
      %4359 = vmatpush1.bf16.msra.mxu0 %v4323
      %4360 = vmatprep.subr.bf16.mxu0 0
      %4361 = vmatpush1.bf16.msra.mxu0 %v4324
      %4362 = vmatprep.subr.bf16.mxu0 0
      %4363 = vmatpush1.bf16.msra.mxu0 %v4325
      %4364 = vmatprep.subr.bf16.mxu0 0
      %4365 = vmatpush1.bf16.msra.mxu0 %v4326
      %4366 = vmatprep.subr.bf16.mxu0 0
      %4367 = vmatpush1.bf16.msra.mxu0 %v4327
      %4368 = vmatprep.subr.bf16.mxu0 0
      %4369 = vmatpush1.bf16.msra.mxu0 %v4328
      %4370 = vmatprep.subr.bf16.mxu0 0
      %4371 = vmatpush1.bf16.msra.mxu0 %v4329
      %4372 = vmatprep.subr.bf16.mxu0 0
      %4373 = vmatpush1.bf16.msra.mxu0 %v4330
      %4374 = vmatprep.subr.bf16.mxu0 0
      %4375 = vmatpush1.bf16.msra.mxu0 %v4331
      %4376 = vmatprep.subr.bf16.mxu0 0
      %4377 = vmatpush1.bf16.msra.mxu0 %v4332
      %4378 = vmatprep.subr.bf16.mxu0 0
      %4379 = vmatpush1.bf16.msra.mxu0 %v4333
      %4380 = vmatprep.subr.bf16.mxu0 0
      %4381 = vmatpush1.bf16.msra.mxu0 %v4334
      %4382 = vmatprep.subr.bf16.mxu0 0
      %4383 = vmatpush1.bf16.msra.mxu0 %v4335
      %4384 = vmatprep.mubr.bf16.mxu0 %v4212
      %4385 = vmatmul.mubr.bf16.gmra.mrb[0].mxu0 %v4211
      %v4386 = vpop.f32.mrb[0].mxu0
      %v4387 = vadd.f32 %v4254, %v4386
      %v4388 = vpop.f32.mrb[0].mxu0
      %v4389 = vpop.f32.mrb[0].mxu0
      %v4390 = vadd.f32 %v4254, %v4389
      %v4391 = vpop.f32.mrb[0].mxu0
      %4392 = vmatprep.mubr.bf16.mxu0 %v4214
      %4393 = vmatmul.mubr.bf16.gmra.mrb[0].mxu0 %v4213
      %v4394 = vpop.f32.mrb[0].mxu0
      %v4395 = vadd.f32 %v4254, %v4394
      %v4396 = vpop.f32.mrb[0].mxu0
      %v4397 = vpop.f32.mrb[0].mxu0
      %v4398 = vpop.f32.mrb[0].mxu0
      %4399 = vdwg.mxu0
      %v4400 = vadd.f32 %v3996, %v4387
      %v4401 = vadd.f32 %v3997, %v4390
      %v4402 = vadd.f32 %v3998, %v4395
      %v4403 = vld [vmem:[%s21] sm:$0x1]
      %v4404 = vld [vmem:[%s22] sm:$0x1]
      %v4405 = vsel %vm1418, %v4400, 0.0
      %4406 = vadd.xlane.f32.xlu0 %v4405
      %v4407 = vpop.xlane.xlu0 %4406
      %v4408 = vsel %vm1418, %v4401, 0.0
      %4409 = vadd.xlane.f32.xlu0 %v4408
      %v4410 = vpop.xlane.xlu0 %4409
      %v4411 = vsel %vm1425, %v4402, 0.0
      %4412 = vadd.xlane.f32.xlu0 %v4411
      %v4413 = vpop.xlane.xlu0 %4412
      %v4414 = vmul.f32 %v4407, %v1429
      %v4415 = vmul.f32 %v4410, %v1429
      %v4416 = vmul.f32 %v4413, %v1429
      %v4417 = vsub.f32 %v4400, %v4414
      %v4418 = vsub.f32 %v4401, %v4415
      %v4419 = vsub.f32 %v4402, %v4416
      %v4420 = vmul.f32 %v4417, %v4417
      %v4421 = vmul.f32 %v4418, %v4418
      %v4422 = vmul.f32 %v4419, %v4419
      %v4423 = vsel %vm1418, %v4420, 0.0
      %4424 = vadd.xlane.f32.xlu0 %v4423
      %v4425 = vpop.xlane.xlu0 %4424
      %v4426 = vsel %vm1418, %v4421, 0.0
      %4427 = vadd.xlane.f32.xlu0 %v4426
      %v4428 = vpop.xlane.xlu0 %4427
      %v4429 = vsel %vm1425, %v4422, 0.0
      %4430 = vadd.xlane.f32.xlu0 %v4429
      %v4431 = vpop.xlane.xlu0 %4430
      %v4432 = vmul.f32 %v4425, %v1429
      %v4433 = vmul.f32 %v4428, %v1429
      %v4434 = vmul.f32 %v4431, %v1429
      %v4435 = vadd.f32 %v4432, 1e-06
      %v4436 = vadd.f32 %v4433, 1e-06
      %v4437 = vadd.f32 %v4434, 1e-06
      %v4438 = vrsqrt.pop %v4435
      %v4439 = vrsqrt.pop %v4436
      %v4440 = vrsqrt.pop %v4437
      %v4441 = vmul.f32 %v4417, %v4438
      %v4442 = vmul.f32 %v4418, %v4439
      %v4443 = vmul.f32 %v4419, %v4440
      %v4445 = vlaneseq
      %v4446 = vshrl.u32 %v4445, 7
      %v4447 = vsub.s32 0, %v4446
      %v4448 = vrot.slane %v4403, %v4447
      %v4450 = vmul.f32 %v4441, %v4448
      %v4451 = vmul.f32 %v4442, %v4448
      %v4452 = vmul.f32 %v4443, %v4448
      %v4454 = vlaneseq
      %v4455 = vshrl.u32 %v4454, 7
      %v4456 = vsub.s32 0, %v4455
      %v4457 = vrot.slane %v4404, %v4456
      %v4459 = vadd.f32 %v4450, %v4457
      %v4460 = vadd.f32 %v4451, %v4457
      %v4461 = vadd.f32 %v4452, %v4457
      %v4462 = vld [vmem:[%s23] sm:$0x1]
      %v4463 = vld [vmem:[%s24] sm:$0x1]
      %v4464 = vsel %vm1418, %v4459, 0.0
      %4465 = vadd.xlane.f32.xlu0 %v4464
      %v4466 = vpop.xlane.xlu0 %4465
      %v4467 = vsel %vm1418, %v4460, 0.0
      %4468 = vadd.xlane.f32.xlu0 %v4467
      %v4469 = vpop.xlane.xlu0 %4468
      %v4470 = vsel %vm1425, %v4461, 0.0
      %4471 = vadd.xlane.f32.xlu0 %v4470
      %v4472 = vpop.xlane.xlu0 %4471
      %v4473 = vmul.f32 %v4466, %v1429
      %v4474 = vmul.f32 %v4469, %v1429
      %v4475 = vmul.f32 %v4472, %v1429
      %v4476 = vsub.f32 %v4459, %v4473
      %v4477 = vsub.f32 %v4460, %v4474
      %v4478 = vsub.f32 %v4461, %v4475
      %v4479 = vmul.f32 %v4476, %v4476
      %v4480 = vmul.f32 %v4477, %v4477
      %v4481 = vmul.f32 %v4478, %v4478
      %v4482 = vsel %vm1418, %v4479, 0.0
      %4483 = vadd.xlane.f32.xlu0 %v4482
      %v4484 = vpop.xlane.xlu0 %4483
      %v4485 = vsel %vm1418, %v4480, 0.0
      %4486 = vadd.xlane.f32.xlu0 %v4485
      %v4487 = vpop.xlane.xlu0 %4486
      %v4488 = vsel %vm1425, %v4481, 0.0
      %4489 = vadd.xlane.f32.xlu0 %v4488
      %v4490 = vpop.xlane.xlu0 %4489
      %v4491 = vmul.f32 %v4484, %v1429
      %v4492 = vmul.f32 %v4487, %v1429
      %v4493 = vmul.f32 %v4490, %v1429
      %v4494 = vadd.f32 %v4491, 1e-05
      %v4495 = vadd.f32 %v4492, 1e-05
      %v4496 = vadd.f32 %v4493, 1e-05
      %v4497 = vrsqrt.pop %v4494
      %v4498 = vrsqrt.pop %v4495
      %v4499 = vrsqrt.pop %v4496
      %v4500 = vmul.f32 %v4476, %v4497
      %v4501 = vmul.f32 %v4477, %v4498
      %v4502 = vmul.f32 %v4478, %v4499
      %v4504 = vlaneseq
      %v4505 = vshrl.u32 %v4504, 7
      %v4506 = vsub.s32 0, %v4505
      %v4507 = vrot.slane %v4462, %v4506
      %v4509 = vmul.f32 %v4500, %v4507
      %v4510 = vmul.f32 %v4501, %v4507
      %v4511 = vmul.f32 %v4502, %v4507
      %v4513 = vlaneseq
      %v4514 = vshrl.u32 %v4513, 7
      %v4515 = vsub.s32 0, %v4514
      %v4516 = vrot.slane %v4463, %v4515
      %v4518 = vadd.f32 %v4509, %v4516
      %v4519 = vadd.f32 %v4510, %v4516
      %v4520 = vadd.f32 %v4511, %v4516
      %v4521 = vld [vmem:[%s25] sm:$0x1]
      %v4523 = vlaneseq
      %v4524 = vshrl.u32 %v4523, 7
      %v4525 = vsub.s32 0, %v4524
      %v4526 = vrot.slane %v4521, %v4525
      %v4528 = vmul.f32 %v4518, %v4526
      %v4529 = vmul.f32 %v4519, %v4526
      %v4530 = vmul.f32 %v4520, %v4526
      %v4531 = vsel %vm1418, %v4528, 0.0
      %4532 = vadd.xlane.f32.xlu0 %v4531
      %v4533 = vpop.xlane.xlu0 %4532
      %v4534 = vsel %vm1418, %v4529, 0.0
      %4535 = vadd.xlane.f32.xlu0 %v4534
      %v4536 = vpop.xlane.xlu0 %4535
      %v4537 = vsel %vm1425, %v4530, 0.0
      %4538 = vadd.xlane.f32.xlu0 %v4537
      %v4539 = vpop.xlane.xlu0 %4538
      %v4540 = vld [vmem:[#allocation2] sm:$0x1]
      %v4542 = vlaneseq
      %v4543 = vshrl.u32 %v4542, 7
      %v4544 = vsub.s32 0, %v4543
      %v4545 = vrot.slane %v4540, %v4544
      %v4547 = vadd.f32 %v4533, %v4545
      %v4548 = vadd.f32 %v4536, %v4545
      %v4549 = vadd.f32 %v4539, %v4545
      %vm4550 = vcmask 7168
      %4551 = vst.msk [vmem:[%s820] sm:$0xff] %vm4550, %v4547
      %4552 = vst.msk [vmem:[%s820 + $0x8] sm:$0xff] %vm4550, %v4548
      %vm4553 = vcmask 3072
      %4554 = vst.msk [vmem:[%s820 + $0x10] sm:$0xf] %vm4553, %v4549
      %p4555 = scmp.lt.s32.totalorder %s40, 1
      %s4556 = scalar_select %p4555, %s40, 1
      %s4557 = smul.addr %s4556, 3
      %s4558 = smul.addr %s4557, 8
      %s4559 = scalar_lea.vmem %s27, %s4558
      // Predicated region
      $region129: #{vit_classifier_forward.1} parent=127 // pred_check
        %p4560 = pneg %p630
      $region130: #{vit_classifier_forward.1} parent=127 // pred_check_branch
        %4562 = sbr.rel (%p4560) target = $region132
      $region131: #{vit_classifier_forward.1} parent=127 // pred_region
        _
      $region132: #{vit_classifier_forward.1} parent=127 // pred_fallthru
        _
    $region128: #{vit_classifier_forward.1} parent=5 // pred_fallthru
      _
    %p4563 = scmp.le.s32.totalorder 2, %s35
    // Predicated region
    $region133: #{vit_classifier_forward.1} parent=5 // pred_check
      %p4564 = pneg %p4563
    $region134: #{vit_classifier_forward.1} parent=5 // pred_check_branch
      %4566 = sbr.rel (%p4564) target = $region136
    $region135: #{vit_classifier_forward.1} parent=5 // pred_region
      %s4567 = ssub.s32 %s35, 2
      // Predicated region
      $region137: #{vit_classifier_forward.1} parent=135 // pred_check
        %p4568 = pneg %p636
      $region138: #{vit_classifier_forward.1} parent=135 // pred_check_branch
        %4570 = sbr.rel (%p4568) target = $region140
      $region139: #{vit_classifier_forward.1} parent=135 // pred_region
        %p4571 = scmp.lt.s32.totalorder %s41, 1
        %s4572 = scalar_select %p4571, %s41, 1
        %s4573 = smul.addr %s4572, 3
        %s4574 = smul.addr %s4573, 8
        %s4575 = scalar_lea.vmem %s27, %s4574
      $region140: #{vit_classifier_forward.1} parent=135 // pred_fallthru
        _
    $region136: #{vit_classifier_forward.1} parent=5 // pred_fallthru
      _
  $region6: #{vit_classifier_forward.1} parent=0 // loop_footer
    %s39 = sadd.s32 1, %s35
  $region7: #{vit_classifier_forward.1} parent=0 // loop_footer_branch
    %34 = sbr.rel target = $region3
  $region8: #{vit_classifier_forward.1} parent=0 // loop_exit
    _

</llo_original>
